<compile_context>
chip_gen: v7x
topology: tpu7x:2x2x1
jax: 0.10.0
libtpu: 0.0.40
codegen_flags: <defaults>
</compile_context>

<pallas_src>
import numpy as np
import jax
import jax.numpy as jnp
from jax import lax
from jax.experimental import pallas as pl
from jax.experimental.pallas import tpu as pltpu


def _bilinear_matrix_1d(out_size, in_size):
    """1-D bilinear interpolation matrix, align_corners=True, shape (out, in)."""
    i = np.arange(out_size, dtype=np.float64)
    if out_size > 1:
        src = i * (in_size - 1) / (out_size - 1)
    else:
        src = np.zeros_like(i)
    i0 = np.clip(np.floor(src).astype(np.int64), 0, in_size - 1)
    i1 = np.minimum(i0 + 1, in_size - 1)
    frac = src - i0
    m = np.zeros((out_size, in_size), dtype=np.float64)
    np.add.at(m, (np.arange(out_size), i0), 1.0 - frac)
    np.add.at(m, (np.arange(out_size), i1), frac)
    return m


def _bilinear_matrix_2d(h_out, w_out, h_in, w_in):
    mh = _bilinear_matrix_1d(h_out, h_in)
    mw = _bilinear_matrix_1d(w_out, w_in)
    m = np.einsum("Hh,Ww->HWhw", mh, mw).reshape(h_out * w_out, h_in * w_in)
    return np.asarray(m, dtype=np.float32)


def _conv_tap_weights(weight):
    """Depthwise (C,1,3,3) conv weight -> per-tap per-channel factors (9, C, 1)."""
    C = weight.shape[0]
    return np.asarray(weight, np.float32).reshape(C, 9).T.reshape(9, C, 1)


def _edge_mask_and_shifts(H, W):
    """Shared 3x3 edge-validity mask (9, 1, H*W) + static lane-roll shift per tap."""
    P = H * W
    yy, xx = np.meshgrid(np.arange(H), np.arange(W), indexing="ij")
    mask = np.zeros((9, 1, P), dtype=np.float32)
    shifts = []
    for ky in range(3):
        for kx in range(3):
            t = ky * 3 + kx
            dy, dx = ky - 1, kx - 1
            valid = ((yy + dy >= 0) & (yy + dy < H) &
                     (xx + dx >= 0) & (xx + dx < W)).reshape(P)
            mask[t, 0] = valid.astype(np.float32)
            shifts.append(int((-(dy * W + dx)) % P))
    return mask, tuple(shifts)


def attention_global_only(hr_feat, lr_feat, params):
    """Pallas TPU implementation of MyAttentionGlobalOnly.forward.

    hr_feat: (N, C, H, W), lr_feat: (N, C, h, w). Returns (N, C, H, W).
    params: 'wq_conv'/'bq_conv' (lr_query_conv), 'wk_conv'/'bk_conv' (hr_key_conv),
            'w_in' (3C,C) / 'b_in' (3C,) (MHA in_proj), 'w_out' (C,C) / 'b_out' (C,).
    """
    N, C, H, W = hr_feat.shape
    _, _, h, w = lr_feat.shape
    assert H >= 16 and W >= 16, "module requires H//16, W//16 >= 1"
    Sh, Sw = H // 16, W // 16
    S = Sh * Sw
    P = H * W
    p_lr = h * w
    scale = 1.0 / np.sqrt(C)

    # ---- batch-invariant operands (host-side parameter prep) ----
    m_up_np = _bilinear_matrix_2d(H, W, h, w)              # (P, h*w)
    m_dn_np = _bilinear_matrix_2d(Sh, Sw, H, W)            # (S, P)
    # Row-sums == 1 is what makes folding bk_conv through the key downsample
    # exact (perf-review correctness note).
    assert np.allclose(m_dn_np.sum(axis=1), 1.0, atol=1e-5)
    m_up_t = jnp.asarray(m_up_np.T, dtype=jnp.bfloat16)    # (h*w, P)  bf16
    m_dn_t = jnp.asarray(m_dn_np.T, dtype=jnp.bfloat16)    # (P, S)    bf16

    wq_taps = jnp.asarray(_conv_tap_weights(params["wq_conv"]))   # (9, C, 1)
    wk_taps = jnp.asarray(_conv_tap_weights(params["wk_conv"]))   # (9, C, 1)
    mask_np, shifts = _edge_mask_and_shifts(H, W)
    edge_mask = jnp.asarray(mask_np)                               # (9, 1, P)

    # Fold (a) 1/sqrt(C) into the q projection and (b) both depthwise-conv
    # biases into the projection biases (exact algebraic identities).
    w_in_np = np.asarray(params["w_in"], np.float32).reshape(3, C, C)
    b_in_np = np.asarray(params["b_in"], np.float32).reshape(3, C)
    bq_conv = np.asarray(params["bq_conv"], np.float32)
    bk_conv = np.asarray(params["bk_conv"], np.float32)
    w_q = w_in_np[0] * scale
    w_k = w_in_np[1]
    w_v = w_in_np[2]
    b_q = w_q @ bq_conv + scale * b_in_np[0]
    b_k = w_k @ bk_conv + b_in_np[1]
    b_v = b_in_np[2]
    w_in = jnp.asarray(np.stack([w_q, w_k, w_v]))                      # (3, C, C)
    b_in = jnp.asarray(np.stack([b_q, b_k, b_v]).reshape(3, C, 1))     # (3, C, 1)
    w_out = jnp.asarray(np.asarray(params["w_out"], np.float32))       # (C, C)
    b_out = jnp.asarray(np.asarray(params["b_out"], np.float32).reshape(C, 1))

    # Channel-first, spatial flattened into the lane dimension.
    hr_cp = hr_feat.reshape(N, C, P).astype(jnp.float32)
    lr_cp = lr_feat.reshape(N, C, p_lr).astype(jnp.float32)

    def kernel(hr_ref, lr_ref, mup_ref, mdn_ref, wq_ref, wk_ref, mask_ref,
               win_ref, bin_ref, wout_ref, bout_ref, o_ref):
        x_hr = hr_ref[0]                                   # (C, P)   f32
        x_lr = lr_ref[0]                                   # (C, h*w) f32

        # 1) bilinear upsample (align_corners): one MXU matmul, bf16 operands,
        #    f32 accumulation.
        up = jnp.dot(x_lr.astype(jnp.bfloat16), mup_ref[...],
                     preferred_element_type=jnp.float32)   # (C, P) f32

        # 2) depthwise 3x3 convs: 9 static lane-rolls (XLU) + rank-1
        #    (edge-mask x per-channel-weight) VPU FMAs, f32.  Conv biases are
        #    pre-folded into b_in, so none are added here.
        acc_q = jnp.zeros((C, P), jnp.float32)
        acc_k = jnp.zeros((C, P), jnp.float32)
        for t, s in enumerate(shifts):
            m = mask_ref[t]                                # (1, P) 0/1 mask
            up_s = pltpu.roll(up, shift=s, axis=1) if s else up
            hr_s = pltpu.roll(x_hr, shift=s, axis=1) if s else x_hr
            acc_q = acc_q + (up_s * m) * wq_ref[t]         # (C,P)*(1,P)*(C,1)
            acc_k = acc_k + (hr_s * m) * wk_ref[t]

        # 3) bilinear downsample of key / value to (H//16, W//16): K = P
        #    matmuls with bf16 operands, f32 accumulation.
        k_ds = jnp.dot(acc_k.astype(jnp.bfloat16), mdn_ref[...],
                       preferred_element_type=jnp.float32)     # (C, S)
        v_ds = jnp.dot(x_hr.astype(jnp.bfloat16), mdn_ref[...],
                       preferred_element_type=jnp.float32)     # (C, S)

        # 4) single-head attention, channel-in-sublane / token-in-lane.
        #    (1/sqrt(C) and the conv biases are already folded into w_in/b_in.)
        qp = jnp.dot(win_ref[0], acc_q,
                     preferred_element_type=jnp.float32) + bin_ref[0]   # (C, P)
        kp = jnp.dot(win_ref[1], k_ds,
                     preferred_element_type=jnp.float32) + bin_ref[1]   # (C, S)
        vp = jnp.dot(win_ref[2], v_ds,
                     preferred_element_type=jnp.float32) + bin_ref[2]   # (C, S)

        # scores[s, p] = sum_c kp[c, s] * qp[c, p]   (lane-dense in P)
        scores = lax.dot_general(kp, qp, (((0,), (0,)), ((), ())),
                                 preferred_element_type=jnp.float32)    # (S, P)
        smax = jnp.max(scores, axis=0, keepdims=True)
        e = jnp.exp(scores - smax)
        denom = jnp.sum(e, axis=0, keepdims=True)                       # (1, P)
        # Unnormalized attention + one EUP reciprocal and a (C, P) multiply
        # instead of an (S, P) divide (probs never materialized).
        attn = jnp.dot(vp, e, preferred_element_type=jnp.float32)       # (C, P)
        attn = attn * pl.reciprocal(denom, approx=True)
        out = jnp.dot(wout_ref[...], attn,
                      preferred_element_type=jnp.float32) + bout_ref[...]
        o_ref[0] = out.astype(o_ref.dtype)

    out_cp = pl.pallas_call(
        kernel,
        out_shape=jax.ShapeDtypeStruct((N, C, P), jnp.float32),
        grid_spec=pltpu.PrefetchScalarGridSpec(
            num_scalar_prefetch=0,
            grid=(N,),
            in_specs=[
                pl.BlockSpec((1, C, P), lambda n: (n, 0, 0)),      # hr_feat (C-first)
                pl.BlockSpec((1, C, p_lr), lambda n: (n, 0, 0)),   # lr_feat (C-first)
                pl.BlockSpec((p_lr, P), lambda n: (0, 0)),         # upsample matrix^T (bf16)
                pl.BlockSpec((P, S), lambda n: (0, 0)),            # downsample matrix^T (bf16)
                pl.BlockSpec((9, C, 1), lambda n: (0, 0, 0)),      # q-conv tap weights
                pl.BlockSpec((9, C, 1), lambda n: (0, 0, 0)),      # k-conv tap weights
                pl.BlockSpec((9, 1, P), lambda n: (0, 0, 0)),      # shared edge mask
                pl.BlockSpec((3, C, C), lambda n: (0, 0, 0)),      # q/k/v proj weights
                pl.BlockSpec((3, C, 1), lambda n: (0, 0, 0)),      # q/k/v proj biases (folded)
                pl.BlockSpec((C, C), lambda n: (0, 0)),            # out-proj weight
                pl.BlockSpec((C, 1), lambda n: (0, 0)),            # out-proj bias
            ],
            out_specs=pl.BlockSpec((1, C, P), lambda n: (n, 0, 0)),
        ),
        compiler_params=pltpu.CompilerParams(
            dimension_semantics=("parallel",)),
    )(hr_cp, lr_cp, m_up_t, m_dn_t, wq_taps, wk_taps, edge_mask,
      w_in, b_in, w_out, b_out)

    return out_cp.reshape(N, C, H, W)


def attention_global_only_reference(hr_feat, lr_feat, params):
    """Plain-JAX f32 reference (standard grouped conv / einsums, no Pallas)."""
    N, C, H, W = hr_feat.shape
    _, _, h, w = lr_feat.shape
    Sh, Sw = H // 16, W // 16
    m_up = jnp.asarray(_bilinear_matrix_2d(H, W, h, w))            # (H*W, h*w)
    m_dn = jnp.asarray(_bilinear_matrix_2d(Sh, Sw, H, W))          # (S, H*W)

    lr_up = jnp.einsum("Pq,ncq->ncP", m_up,
                       lr_feat.reshape(N, C, h * w)).reshape(N, C, H, W)

    def dwconv(x, wgt, b):
        y = lax.conv_general_dilated(
            x, wgt, window_strides=(1, 1), padding=((1, 1), (1, 1)),
            dimension_numbers=("NCHW", "OIHW", "NCHW"), feature_group_count=C)
        return y + b.reshape(1, -1, 1, 1)

    lr_query = dwconv(lr_up, params["wq_conv"], params["bq_conv"])
    hr_key = dwconv(hr_feat, params["wk_conv"], params["bk_conv"])

    q = lr_query.reshape(N, C, H * W)
    k = jnp.einsum("sP,ncP->ncs", m_dn, hr_key.reshape(N, C, H * W))
    v = jnp.einsum("sP,ncP->ncs", m_dn, hr_feat.reshape(N, C, H * W))

    w_in, b_in = params["w_in"], params["b_in"]
    wq, wk_, wv = w_in[:C], w_in[C:2 * C], w_in[2 * C:]
    bq, bk_, bv = b_in[:C], b_in[C:2 * C], b_in[2 * C:]
    qp = jnp.einsum("dc,ncP->ndP", wq, q) + bq[None, :, None]
    kp = jnp.einsum("dc,ncs->nds", wk_, k) + bk_[None, :, None]
    vp = jnp.einsum("dc,ncs->nds", wv, v) + bv[None, :, None]

    scores = jnp.einsum("ndP,nds->nPs", qp, kp) / jnp.sqrt(jnp.float32(C))
    probs = jax.nn.softmax(scores, axis=-1)
    attn = jnp.einsum("nPs,nds->ndP", probs, vp)
    out = jnp.einsum("od,ndP->noP", params["w_out"], attn) \
        + params["b_out"][None, :, None]
    return out.reshape(N, C, H, W)


if __name__ == "__main__":
    feat_dim = 4
    N, H, W = 2, 32, 32      # H, W must be >= 16 so the H//16 x W//16 kv grid exists
    h, w = 16, 16
    C = feat_dim

    key = jax.random.PRNGKey(0)
    ks = jax.random.split(key, 8)
    hr_feat = jax.random.normal(ks[0], (N, C, H, W), dtype=jnp.float32)
    lr_feat = jax.random.normal(ks[1], (N, C, h, w), dtype=jnp.float32)

    # depthwise convs: kaiming_normal_(a=1) -> std = 1/sqrt(fan_in) = 1/3, bias = 0
    conv_std = 1.0 / np.sqrt(9.0)
    params = {
        "wq_conv": jax.random.normal(ks[2], (C, 1, 3, 3), jnp.float32) * conv_std,
        "bq_conv": jnp.zeros((C,), jnp.float32),
        "wk_conv": jax.random.normal(ks[3], (C, 1, 3, 3), jnp.float32) * conv_std,
        "bk_conv": jnp.zeros((C,), jnp.float32),
        # nn.MultiheadAttention(embed_dim=C, num_heads=1) parameters
        "w_in": jax.random.normal(ks[4], (3 * C, C), jnp.float32) / np.sqrt(C),
        "b_in": jax.random.normal(ks[5], (3 * C,), jnp.float32) * 0.1,
        "w_out": jax.random.normal(ks[6], (C, C), jnp.float32) / np.sqrt(C),
        "b_out": jax.random.normal(ks[7], (C,), jnp.float32) * 0.1,
    }

    out = attention_global_only(hr_feat, lr_feat, params)
    out = jax.block_until_ready(out)
    assert out.shape == (N, C, H, W)

    ref = attention_global_only_reference(hr_feat, lr_feat, params)
    out_np, ref_np = np.asarray(out), np.asarray(ref)
    # bf16 resample operands + approx-reciprocal softmax: compare at a
    # bf16-level tolerance relative to the output's dynamic range (the f32
    # reference is exact; structural identities are exact by construction).
    max_err = float(np.max(np.abs(out_np - ref_np)))
    ref_range = float(np.max(np.abs(ref_np)))
    assert max_err <= 5e-2 * ref_range + 1e-3, (max_err, ref_range)

    print("KERNEL_OK")
</pallas_src>

<mosaic_0001>
module attributes {stable_mosaic.version = 11 : i64} {
  func.func @kernel(%arg0: i32, %arg1: memref<1x4x1024xf32, #tpu.memory_space<vmem>>, %arg2: memref<1x4x256xf32, #tpu.memory_space<vmem>>, %arg3: memref<256x1024xbf16, #tpu.memory_space<vmem>>, %arg4: memref<1024x4xbf16, #tpu.memory_space<vmem>>, %arg5: memref<9x4x1xf32, #tpu.memory_space<vmem>>, %arg6: memref<9x4x1xf32, #tpu.memory_space<vmem>>, %arg7: memref<9x1x1024xf32, #tpu.memory_space<vmem>>, %arg8: memref<3x4x4xf32, #tpu.memory_space<vmem>>, %arg9: memref<3x4x1xf32, #tpu.memory_space<vmem>>, %arg10: memref<4x4xf32, #tpu.memory_space<vmem>>, %arg11: memref<4x1xf32, #tpu.memory_space<vmem>>, %arg12: memref<1x4x1024xf32, #tpu.memory_space<vmem>>) attributes {dimension_semantics = [#tpu.dimension_semantics<parallel>], iteration_bounds = array<i64: 2>, scalar_prefetch = 0 : i64, scratch_operands = 0 : i64, tpu.core_type = #tpu.core_type<tc>, window_params = [{transform_indices = @transform_0, window_bounds = array<i64: 1, 4, 1024>}, {transform_indices = @transform_1, window_bounds = array<i64: 1, 4, 256>}, {pipeline_mode = #tpu.pipeline_mode<synchronous>, transform_indices = @transform_2, window_bounds = array<i64: 256, 1024>}, {pipeline_mode = #tpu.pipeline_mode<synchronous>, transform_indices = @transform_3, window_bounds = array<i64: 1024, 4>}, {pipeline_mode = #tpu.pipeline_mode<synchronous>, transform_indices = @transform_4, window_bounds = array<i64: 9, 4, 1>}, {pipeline_mode = #tpu.pipeline_mode<synchronous>, transform_indices = @transform_5, window_bounds = array<i64: 9, 4, 1>}, {pipeline_mode = #tpu.pipeline_mode<synchronous>, transform_indices = @transform_6, window_bounds = array<i64: 9, 1, 1024>}, {pipeline_mode = #tpu.pipeline_mode<synchronous>, transform_indices = @transform_7, window_bounds = array<i64: 3, 4, 4>}, {pipeline_mode = #tpu.pipeline_mode<synchronous>, transform_indices = @transform_8, window_bounds = array<i64: 3, 4, 1>}, {pipeline_mode = #tpu.pipeline_mode<synchronous>, transform_indices = @transform_9, window_bounds = array<i64: 4, 4>}, {pipeline_mode = #tpu.pipeline_mode<synchronous>, transform_indices = @transform_10, window_bounds = array<i64: 4, 1>}, {transform_indices = @transform_11, window_bounds = array<i64: 1, 4, 1024>}]} {
    %c0 = arith.constant 0 : index
    %c0_0 = arith.constant 0 : index
    %c0_1 = arith.constant 0 : index
    %0 = vector.load %arg1[%c0, %c0_0, %c0_1] : memref<1x4x1024xf32, #tpu.memory_space<vmem>>, vector<1x4x1024xf32>
    %1 = vector.shape_cast %0 : vector<1x4x1024xf32> to vector<4x1024xf32>
    %c0_2 = arith.constant 0 : index
    %c0_3 = arith.constant 0 : index
    %c0_4 = arith.constant 0 : index
    %2 = vector.load %arg2[%c0_2, %c0_3, %c0_4] : memref<1x4x256xf32, #tpu.memory_space<vmem>>, vector<1x4x256xf32>
    %3 = vector.shape_cast %2 : vector<1x4x256xf32> to vector<4x256xf32>
    %4 = arith.truncf %3 : vector<4x256xf32> to vector<4x256xbf16>
    %c0_5 = arith.constant 0 : index
    %c0_6 = arith.constant 0 : index
    %5 = vector.load %arg3[%c0_5, %c0_6] : memref<256x1024xbf16, #tpu.memory_space<vmem>>, vector<256x1024xbf16>
    %cst = arith.constant dense<0.000000e+00> : vector<4x1024xf32>
    %6 = tpu.matmul %4, %5, %cst {dimension_numbers = #tpu.dot_dimension_numbers<[1], [0], [0], [1], [0, 0, 1, 1], [], []>} : vector<4x256xbf16>, vector<256x1024xbf16>, vector<4x1024xf32> -> vector<4x1024xf32>
    %cst_7 = arith.constant 0.000000e+00 : f32
    %7 = vector.broadcast %cst_7 : f32 to vector<4x1024xf32>
    %cst_8 = arith.constant 0.000000e+00 : f32
    %8 = vector.broadcast %cst_8 : f32 to vector<4x1024xf32>
    %c0_9 = arith.constant 0 : index
    %c0_10 = arith.constant 0 : index
    %c0_11 = arith.constant 0 : index
    %9 = vector.load %arg7[%c0_9, %c0_10, %c0_11] : memref<9x1x1024xf32, #tpu.memory_space<vmem>>, vector<1x1x1024xf32>
    %10 = vector.shape_cast %9 : vector<1x1x1024xf32> to vector<1x1024xf32>
    %c33_i32 = arith.constant 33 : i32
    %11 = tpu.dynamic_rotate %6 by %c33_i32 dim 1 : vector<4x1024xf32>, i32 -> vector<4x1024xf32>
    %c33_i32_12 = arith.constant 33 : i32
    %12 = tpu.dynamic_rotate %1 by %c33_i32_12 dim 1 : vector<4x1024xf32>, i32 -> vector<4x1024xf32>
    %13 = vector.broadcast %10 : vector<1x1024xf32> to vector<4x1024xf32>
    %14 = arith.mulf %11, %13 : vector<4x1024xf32>
    %c0_13 = arith.constant 0 : index
    %c0_14 = arith.constant 0 : index
    %c0_15 = arith.constant 0 : index
    %15 = vector.load %arg5[%c0_13, %c0_14, %c0_15] : memref<9x4x1xf32, #tpu.memory_space<vmem>>, vector<1x4x1xf32>
    %16 = vector.shape_cast %15 : vector<1x4x1xf32> to vector<4x1xf32>
    %17 = vector.broadcast %16 : vector<4x1xf32> to vector<4x1024xf32>
    %18 = arith.mulf %14, %17 : vector<4x1024xf32>
    %19 = arith.addf %7, %18 : vector<4x1024xf32>
    %20 = vector.broadcast %10 : vector<1x1024xf32> to vector<4x1024xf32>
    %21 = arith.mulf %12, %20 : vector<4x1024xf32>
    %c0_16 = arith.constant 0 : index
    %c0_17 = arith.constant 0 : index
    %c0_18 = arith.constant 0 : index
    %22 = vector.load %arg6[%c0_16, %c0_17, %c0_18] : memref<9x4x1xf32, #tpu.memory_space<vmem>>, vector<1x4x1xf32>
    %23 = vector.shape_cast %22 : vector<1x4x1xf32> to vector<4x1xf32>
    %24 = vector.broadcast %23 : vector<4x1xf32> to vector<4x1024xf32>
    %25 = arith.mulf %21, %24 : vector<4x1024xf32>
    %26 = arith.addf %8, %25 : vector<4x1024xf32>
    %c1 = arith.constant 1 : index
    %c0_19 = arith.constant 0 : index
    %c0_20 = arith.constant 0 : index
    %27 = vector.load %arg7[%c1, %c0_19, %c0_20] : memref<9x1x1024xf32, #tpu.memory_space<vmem>>, vector<1x1x1024xf32>
    %28 = vector.shape_cast %27 : vector<1x1x1024xf32> to vector<1x1024xf32>
    %c32_i32 = arith.constant 32 : i32
    %29 = tpu.dynamic_rotate %6 by %c32_i32 dim 1 : vector<4x1024xf32>, i32 -> vector<4x1024xf32>
    %c32_i32_21 = arith.constant 32 : i32
    %30 = tpu.dynamic_rotate %1 by %c32_i32_21 dim 1 : vector<4x1024xf32>, i32 -> vector<4x1024xf32>
    %31 = vector.broadcast %28 : vector<1x1024xf32> to vector<4x1024xf32>
    %32 = arith.mulf %29, %31 : vector<4x1024xf32>
    %c1_22 = arith.constant 1 : index
    %c0_23 = arith.constant 0 : index
    %c0_24 = arith.constant 0 : index
    %33 = vector.load %arg5[%c1_22, %c0_23, %c0_24] : memref<9x4x1xf32, #tpu.memory_space<vmem>>, vector<1x4x1xf32>
    %34 = vector.shape_cast %33 : vector<1x4x1xf32> to vector<4x1xf32>
    %35 = vector.broadcast %34 : vector<4x1xf32> to vector<4x1024xf32>
    %36 = arith.mulf %32, %35 : vector<4x1024xf32>
    %37 = arith.addf %19, %36 : vector<4x1024xf32>
    %38 = vector.broadcast %28 : vector<1x1024xf32> to vector<4x1024xf32>
    %39 = arith.mulf %30, %38 : vector<4x1024xf32>
    %c1_25 = arith.constant 1 : index
    %c0_26 = arith.constant 0 : index
    %c0_27 = arith.constant 0 : index
    %40 = vector.load %arg6[%c1_25, %c0_26, %c0_27] : memref<9x4x1xf32, #tpu.memory_space<vmem>>, vector<1x4x1xf32>
    %41 = vector.shape_cast %40 : vector<1x4x1xf32> to vector<4x1xf32>
    %42 = vector.broadcast %41 : vector<4x1xf32> to vector<4x1024xf32>
    %43 = arith.mulf %39, %42 : vector<4x1024xf32>
    %44 = arith.addf %26, %43 : vector<4x1024xf32>
    %c2 = arith.constant 2 : index
    %c0_28 = arith.constant 0 : index
    %c0_29 = arith.constant 0 : index
    %45 = vector.load %arg7[%c2, %c0_28, %c0_29] : memref<9x1x1024xf32, #tpu.memory_space<vmem>>, vector<1x1x1024xf32>
    %46 = vector.shape_cast %45 : vector<1x1x1024xf32> to vector<1x1024xf32>
    %c31_i32 = arith.constant 31 : i32
    %47 = tpu.dynamic_rotate %6 by %c31_i32 dim 1 : vector<4x1024xf32>, i32 -> vector<4x1024xf32>
    %c31_i32_30 = arith.constant 31 : i32
    %48 = tpu.dynamic_rotate %1 by %c31_i32_30 dim 1 : vector<4x1024xf32>, i32 -> vector<4x1024xf32>
    %49 = vector.broadcast %46 : vector<1x1024xf32> to vector<4x1024xf32>
    %50 = arith.mulf %47, %49 : vector<4x1024xf32>
    %c2_31 = arith.constant 2 : index
    %c0_32 = arith.constant 0 : index
    %c0_33 = arith.constant 0 : index
    %51 = vector.load %arg5[%c2_31, %c0_32, %c0_33] : memref<9x4x1xf32, #tpu.memory_space<vmem>>, vector<1x4x1xf32>
    %52 = vector.shape_cast %51 : vector<1x4x1xf32> to vector<4x1xf32>
    %53 = vector.broadcast %52 : vector<4x1xf32> to vector<4x1024xf32>
    %54 = arith.mulf %50, %53 : vector<4x1024xf32>
    %55 = arith.addf %37, %54 : vector<4x1024xf32>
    %56 = vector.broadcast %46 : vector<1x1024xf32> to vector<4x1024xf32>
    %57 = arith.mulf %48, %56 : vector<4x1024xf32>
    %c2_34 = arith.constant 2 : index
    %c0_35 = arith.constant 0 : index
    %c0_36 = arith.constant 0 : index
    %58 = vector.load %arg6[%c2_34, %c0_35, %c0_36] : memref<9x4x1xf32, #tpu.memory_space<vmem>>, vector<1x4x1xf32>
    %59 = vector.shape_cast %58 : vector<1x4x1xf32> to vector<4x1xf32>
    %60 = vector.broadcast %59 : vector<4x1xf32> to vector<4x1024xf32>
    %61 = arith.mulf %57, %60 : vector<4x1024xf32>
    %62 = arith.addf %44, %61 : vector<4x1024xf32>
    %c3 = arith.constant 3 : index
    %c0_37 = arith.constant 0 : index
    %c0_38 = arith.constant 0 : index
    %63 = vector.load %arg7[%c3, %c0_37, %c0_38] : memref<9x1x1024xf32, #tpu.memory_space<vmem>>, vector<1x1x1024xf32>
    %64 = vector.shape_cast %63 : vector<1x1x1024xf32> to vector<1x1024xf32>
    %c1_i32 = arith.constant 1 : i32
    %65 = tpu.dynamic_rotate %6 by %c1_i32 dim 1 : vector<4x1024xf32>, i32 -> vector<4x1024xf32>
    %c1_i32_39 = arith.constant 1 : i32
    %66 = tpu.dynamic_rotate %1 by %c1_i32_39 dim 1 : vector<4x1024xf32>, i32 -> vector<4x1024xf32>
    %67 = vector.broadcast %64 : vector<1x1024xf32> to vector<4x1024xf32>
    %68 = arith.mulf %65, %67 : vector<4x1024xf32>
    %c3_40 = arith.constant 3 : index
    %c0_41 = arith.constant 0 : index
    %c0_42 = arith.constant 0 : index
    %69 = vector.load %arg5[%c3_40, %c0_41, %c0_42] : memref<9x4x1xf32, #tpu.memory_space<vmem>>, vector<1x4x1xf32>
    %70 = vector.shape_cast %69 : vector<1x4x1xf32> to vector<4x1xf32>
    %71 = vector.broadcast %70 : vector<4x1xf32> to vector<4x1024xf32>
    %72 = arith.mulf %68, %71 : vector<4x1024xf32>
    %73 = arith.addf %55, %72 : vector<4x1024xf32>
    %74 = vector.broadcast %64 : vector<1x1024xf32> to vector<4x1024xf32>
    %75 = arith.mulf %66, %74 : vector<4x1024xf32>
    %c3_43 = arith.constant 3 : index
    %c0_44 = arith.constant 0 : index
    %c0_45 = arith.constant 0 : index
    %76 = vector.load %arg6[%c3_43, %c0_44, %c0_45] : memref<9x4x1xf32, #tpu.memory_space<vmem>>, vector<1x4x1xf32>
    %77 = vector.shape_cast %76 : vector<1x4x1xf32> to vector<4x1xf32>
    %78 = vector.broadcast %77 : vector<4x1xf32> to vector<4x1024xf32>
    %79 = arith.mulf %75, %78 : vector<4x1024xf32>
    %80 = arith.addf %62, %79 : vector<4x1024xf32>
    %c4 = arith.constant 4 : index
    %c0_46 = arith.constant 0 : index
    %c0_47 = arith.constant 0 : index
    %81 = vector.load %arg7[%c4, %c0_46, %c0_47] : memref<9x1x1024xf32, #tpu.memory_space<vmem>>, vector<1x1x1024xf32>
    %82 = vector.shape_cast %81 : vector<1x1x1024xf32> to vector<1x1024xf32>
    %83 = vector.broadcast %82 : vector<1x1024xf32> to vector<4x1024xf32>
    %84 = arith.mulf %6, %83 : vector<4x1024xf32>
    %c4_48 = arith.constant 4 : index
    %c0_49 = arith.constant 0 : index
    %c0_50 = arith.constant 0 : index
    %85 = vector.load %arg5[%c4_48, %c0_49, %c0_50] : memref<9x4x1xf32, #tpu.memory_space<vmem>>, vector<1x4x1xf32>
    %86 = vector.shape_cast %85 : vector<1x4x1xf32> to vector<4x1xf32>
    %87 = vector.broadcast %86 : vector<4x1xf32> to vector<4x1024xf32>
    %88 = arith.mulf %84, %87 : vector<4x1024xf32>
    %89 = arith.addf %73, %88 : vector<4x1024xf32>
    %90 = vector.broadcast %82 : vector<1x1024xf32> to vector<4x1024xf32>
    %91 = arith.mulf %1, %90 : vector<4x1024xf32>
    %c4_51 = arith.constant 4 : index
    %c0_52 = arith.constant 0 : index
    %c0_53 = arith.constant 0 : index
    %92 = vector.load %arg6[%c4_51, %c0_52, %c0_53] : memref<9x4x1xf32, #tpu.memory_space<vmem>>, vector<1x4x1xf32>
    %93 = vector.shape_cast %92 : vector<1x4x1xf32> to vector<4x1xf32>
    %94 = vector.broadcast %93 : vector<4x1xf32> to vector<4x1024xf32>
    %95 = arith.mulf %91, %94 : vector<4x1024xf32>
    %96 = arith.addf %80, %95 : vector<4x1024xf32>
    %c5 = arith.constant 5 : index
    %c0_54 = arith.constant 0 : index
    %c0_55 = arith.constant 0 : index
    %97 = vector.load %arg7[%c5, %c0_54, %c0_55] : memref<9x1x1024xf32, #tpu.memory_space<vmem>>, vector<1x1x1024xf32>
    %98 = vector.shape_cast %97 : vector<1x1x1024xf32> to vector<1x1024xf32>
    %c1023_i32 = arith.constant 1023 : i32
    %99 = tpu.dynamic_rotate %6 by %c1023_i32 dim 1 : vector<4x1024xf32>, i32 -> vector<4x1024xf32>
    %c1023_i32_56 = arith.constant 1023 : i32
    %100 = tpu.dynamic_rotate %1 by %c1023_i32_56 dim 1 : vector<4x1024xf32>, i32 -> vector<4x1024xf32>
    %101 = vector.broadcast %98 : vector<1x1024xf32> to vector<4x1024xf32>
    %102 = arith.mulf %99, %101 : vector<4x1024xf32>
    %c5_57 = arith.constant 5 : index
    %c0_58 = arith.constant 0 : index
    %c0_59 = arith.constant 0 : index
    %103 = vector.load %arg5[%c5_57, %c0_58, %c0_59] : memref<9x4x1xf32, #tpu.memory_space<vmem>>, vector<1x4x1xf32>
    %104 = vector.shape_cast %103 : vector<1x4x1xf32> to vector<4x1xf32>
    %105 = vector.broadcast %104 : vector<4x1xf32> to vector<4x1024xf32>
    %106 = arith.mulf %102, %105 : vector<4x1024xf32>
    %107 = arith.addf %89, %106 : vector<4x1024xf32>
    %108 = vector.broadcast %98 : vector<1x1024xf32> to vector<4x1024xf32>
    %109 = arith.mulf %100, %108 : vector<4x1024xf32>
    %c5_60 = arith.constant 5 : index
    %c0_61 = arith.constant 0 : index
    %c0_62 = arith.constant 0 : index
    %110 = vector.load %arg6[%c5_60, %c0_61, %c0_62] : memref<9x4x1xf32, #tpu.memory_space<vmem>>, vector<1x4x1xf32>
    %111 = vector.shape_cast %110 : vector<1x4x1xf32> to vector<4x1xf32>
    %112 = vector.broadcast %111 : vector<4x1xf32> to vector<4x1024xf32>
    %113 = arith.mulf %109, %112 : vector<4x1024xf32>
    %114 = arith.addf %96, %113 : vector<4x1024xf32>
    %c6 = arith.constant 6 : index
    %c0_63 = arith.constant 0 : index
    %c0_64 = arith.constant 0 : index
    %115 = vector.load %arg7[%c6, %c0_63, %c0_64] : memref<9x1x1024xf32, #tpu.memory_space<vmem>>, vector<1x1x1024xf32>
    %116 = vector.shape_cast %115 : vector<1x1x1024xf32> to vector<1x1024xf32>
    %c993_i32 = arith.constant 993 : i32
    %117 = tpu.dynamic_rotate %6 by %c993_i32 dim 1 : vector<4x1024xf32>, i32 -> vector<4x1024xf32>
    %c993_i32_65 = arith.constant 993 : i32
    %118 = tpu.dynamic_rotate %1 by %c993_i32_65 dim 1 : vector<4x1024xf32>, i32 -> vector<4x1024xf32>
    %119 = vector.broadcast %116 : vector<1x1024xf32> to vector<4x1024xf32>
    %120 = arith.mulf %117, %119 : vector<4x1024xf32>
    %c6_66 = arith.constant 6 : index
    %c0_67 = arith.constant 0 : index
    %c0_68 = arith.constant 0 : index
    %121 = vector.load %arg5[%c6_66, %c0_67, %c0_68] : memref<9x4x1xf32, #tpu.memory_space<vmem>>, vector<1x4x1xf32>
    %122 = vector.shape_cast %121 : vector<1x4x1xf32> to vector<4x1xf32>
    %123 = vector.broadcast %122 : vector<4x1xf32> to vector<4x1024xf32>
    %124 = arith.mulf %120, %123 : vector<4x1024xf32>
    %125 = arith.addf %107, %124 : vector<4x1024xf32>
    %126 = vector.broadcast %116 : vector<1x1024xf32> to vector<4x1024xf32>
    %127 = arith.mulf %118, %126 : vector<4x1024xf32>
    %c6_69 = arith.constant 6 : index
    %c0_70 = arith.constant 0 : index
    %c0_71 = arith.constant 0 : index
    %128 = vector.load %arg6[%c6_69, %c0_70, %c0_71] : memref<9x4x1xf32, #tpu.memory_space<vmem>>, vector<1x4x1xf32>
    %129 = vector.shape_cast %128 : vector<1x4x1xf32> to vector<4x1xf32>
    %130 = vector.broadcast %129 : vector<4x1xf32> to vector<4x1024xf32>
    %131 = arith.mulf %127, %130 : vector<4x1024xf32>
    %132 = arith.addf %114, %131 : vector<4x1024xf32>
    %c7 = arith.constant 7 : index
    %c0_72 = arith.constant 0 : index
    %c0_73 = arith.constant 0 : index
    %133 = vector.load %arg7[%c7, %c0_72, %c0_73] : memref<9x1x1024xf32, #tpu.memory_space<vmem>>, vector<1x1x1024xf32>
    %134 = vector.shape_cast %133 : vector<1x1x1024xf32> to vector<1x1024xf32>
    %c992_i32 = arith.constant 992 : i32
    %135 = tpu.dynamic_rotate %6 by %c992_i32 dim 1 : vector<4x1024xf32>, i32 -> vector<4x1024xf32>
    %c992_i32_74 = arith.constant 992 : i32
    %136 = tpu.dynamic_rotate %1 by %c992_i32_74 dim 1 : vector<4x1024xf32>, i32 -> vector<4x1024xf32>
    %137 = vector.broadcast %134 : vector<1x1024xf32> to vector<4x1024xf32>
    %138 = arith.mulf %135, %137 : vector<4x1024xf32>
    %c7_75 = arith.constant 7 : index
    %c0_76 = arith.constant 0 : index
    %c0_77 = arith.constant 0 : index
    %139 = vector.load %arg5[%c7_75, %c0_76, %c0_77] : memref<9x4x1xf32, #tpu.memory_space<vmem>>, vector<1x4x1xf32>
    %140 = vector.shape_cast %139 : vector<1x4x1xf32> to vector<4x1xf32>
    %141 = vector.broadcast %140 : vector<4x1xf32> to vector<4x1024xf32>
    %142 = arith.mulf %138, %141 : vector<4x1024xf32>
    %143 = arith.addf %125, %142 : vector<4x1024xf32>
    %144 = vector.broadcast %134 : vector<1x1024xf32> to vector<4x1024xf32>
    %145 = arith.mulf %136, %144 : vector<4x1024xf32>
    %c7_78 = arith.constant 7 : index
    %c0_79 = arith.constant 0 : index
    %c0_80 = arith.constant 0 : index
    %146 = vector.load %arg6[%c7_78, %c0_79, %c0_80] : memref<9x4x1xf32, #tpu.memory_space<vmem>>, vector<1x4x1xf32>
    %147 = vector.shape_cast %146 : vector<1x4x1xf32> to vector<4x1xf32>
    %148 = vector.broadcast %147 : vector<4x1xf32> to vector<4x1024xf32>
    %149 = arith.mulf %145, %148 : vector<4x1024xf32>
    %150 = arith.addf %132, %149 : vector<4x1024xf32>
    %c8 = arith.constant 8 : index
    %c0_81 = arith.constant 0 : index
    %c0_82 = arith.constant 0 : index
    %151 = vector.load %arg7[%c8, %c0_81, %c0_82] : memref<9x1x1024xf32, #tpu.memory_space<vmem>>, vector<1x1x1024xf32>
    %152 = vector.shape_cast %151 : vector<1x1x1024xf32> to vector<1x1024xf32>
    %c991_i32 = arith.constant 991 : i32
    %153 = tpu.dynamic_rotate %6 by %c991_i32 dim 1 : vector<4x1024xf32>, i32 -> vector<4x1024xf32>
    %c991_i32_83 = arith.constant 991 : i32
    %154 = tpu.dynamic_rotate %1 by %c991_i32_83 dim 1 : vector<4x1024xf32>, i32 -> vector<4x1024xf32>
    %155 = vector.broadcast %152 : vector<1x1024xf32> to vector<4x1024xf32>
    %156 = arith.mulf %153, %155 : vector<4x1024xf32>
    %c8_84 = arith.constant 8 : index
    %c0_85 = arith.constant 0 : index
    %c0_86 = arith.constant 0 : index
    %157 = vector.load %arg5[%c8_84, %c0_85, %c0_86] : memref<9x4x1xf32, #tpu.memory_space<vmem>>, vector<1x4x1xf32>
    %158 = vector.shape_cast %157 : vector<1x4x1xf32> to vector<4x1xf32>
    %159 = vector.broadcast %158 : vector<4x1xf32> to vector<4x1024xf32>
    %160 = arith.mulf %156, %159 : vector<4x1024xf32>
    %161 = arith.addf %143, %160 : vector<4x1024xf32>
    %162 = vector.broadcast %152 : vector<1x1024xf32> to vector<4x1024xf32>
    %163 = arith.mulf %154, %162 : vector<4x1024xf32>
    %c8_87 = arith.constant 8 : index
    %c0_88 = arith.constant 0 : index
    %c0_89 = arith.constant 0 : index
    %164 = vector.load %arg6[%c8_87, %c0_88, %c0_89] : memref<9x4x1xf32, #tpu.memory_space<vmem>>, vector<1x4x1xf32>
    %165 = vector.shape_cast %164 : vector<1x4x1xf32> to vector<4x1xf32>
    %166 = vector.broadcast %165 : vector<4x1xf32> to vector<4x1024xf32>
    %167 = arith.mulf %163, %166 : vector<4x1024xf32>
    %168 = arith.addf %150, %167 : vector<4x1024xf32>
    %169 = arith.truncf %168 : vector<4x1024xf32> to vector<4x1024xbf16>
    %c0_90 = arith.constant 0 : index
    %c0_91 = arith.constant 0 : index
    %170 = vector.load %arg4[%c0_90, %c0_91] : memref<1024x4xbf16, #tpu.memory_space<vmem>>, vector<1024x4xbf16>
    %cst_92 = arith.constant dense<0.000000e+00> : vector<4x4xf32>
    %171 = tpu.matmul %169, %170, %cst_92 {dimension_numbers = #tpu.dot_dimension_numbers<[1], [0], [0], [1], [0, 0, 1, 1], [], []>} : vector<4x1024xbf16>, vector<1024x4xbf16>, vector<4x4xf32> -> vector<4x4xf32>
    %172 = arith.truncf %1 : vector<4x1024xf32> to vector<4x1024xbf16>
    %c0_93 = arith.constant 0 : index
    %c0_94 = arith.constant 0 : index
    %173 = vector.load %arg4[%c0_93, %c0_94] : memref<1024x4xbf16, #tpu.memory_space<vmem>>, vector<1024x4xbf16>
    %cst_95 = arith.constant dense<0.000000e+00> : vector<4x4xf32>
    %174 = tpu.matmul %172, %173, %cst_95 {dimension_numbers = #tpu.dot_dimension_numbers<[1], [0], [0], [1], [0, 0, 1, 1], [], []>} : vector<4x1024xbf16>, vector<1024x4xbf16>, vector<4x4xf32> -> vector<4x4xf32>
    %c0_96 = arith.constant 0 : index
    %c0_97 = arith.constant 0 : index
    %c0_98 = arith.constant 0 : index
    %175 = vector.load %arg8[%c0_96, %c0_97, %c0_98] : memref<3x4x4xf32, #tpu.memory_space<vmem>>, vector<1x4x4xf32>
    %176 = vector.shape_cast %175 : vector<1x4x4xf32> to vector<4x4xf32>
    %cst_99 = arith.constant dense<0.000000e+00> : vector<4x1024xf32>
    %177 = tpu.matmul %176, %161, %cst_99 {dimension_numbers = #tpu.dot_dimension_numbers<[1], [0], [0], [1], [0, 0, 1, 1], [], []>} : vector<4x4xf32>, vector<4x1024xf32>, vector<4x1024xf32> -> vector<4x1024xf32>
    %c0_100 = arith.constant 0 : index
    %c0_101 = arith.constant 0 : index
    %c0_102 = arith.constant 0 : index
    %178 = vector.load %arg9[%c0_100, %c0_101, %c0_102] : memref<3x4x1xf32, #tpu.memory_space<vmem>>, vector<1x4x1xf32>
    %179 = vector.shape_cast %178 : vector<1x4x1xf32> to vector<4x1xf32>
    %180 = vector.broadcast %179 : vector<4x1xf32> to vector<4x1024xf32>
    %181 = arith.addf %177, %180 : vector<4x1024xf32>
    %c1_103 = arith.constant 1 : index
    %c0_104 = arith.constant 0 : index
    %c0_105 = arith.constant 0 : index
    %182 = vector.load %arg8[%c1_103, %c0_104, %c0_105] : memref<3x4x4xf32, #tpu.memory_space<vmem>>, vector<1x4x4xf32>
    %183 = vector.shape_cast %182 : vector<1x4x4xf32> to vector<4x4xf32>
    %cst_106 = arith.constant dense<0.000000e+00> : vector<4x4xf32>
    %184 = tpu.matmul %183, %171, %cst_106 {dimension_numbers = #tpu.dot_dimension_numbers<[1], [0], [0], [1], [0, 0, 1, 1], [], []>} : vector<4x4xf32>, vector<4x4xf32>, vector<4x4xf32> -> vector<4x4xf32>
    %c1_107 = arith.constant 1 : index
    %c0_108 = arith.constant 0 : index
    %c0_109 = arith.constant 0 : index
    %185 = vector.load %arg9[%c1_107, %c0_108, %c0_109] : memref<3x4x1xf32, #tpu.memory_space<vmem>>, vector<1x4x1xf32>
    %186 = vector.shape_cast %185 : vector<1x4x1xf32> to vector<4x1xf32>
    %187 = vector.broadcast %186 : vector<4x1xf32> to vector<4x4xf32>
    %188 = arith.addf %184, %187 : vector<4x4xf32>
    %c2_110 = arith.constant 2 : index
    %c0_111 = arith.constant 0 : index
    %c0_112 = arith.constant 0 : index
    %189 = vector.load %arg8[%c2_110, %c0_111, %c0_112] : memref<3x4x4xf32, #tpu.memory_space<vmem>>, vector<1x4x4xf32>
    %190 = vector.shape_cast %189 : vector<1x4x4xf32> to vector<4x4xf32>
    %cst_113 = arith.constant dense<0.000000e+00> : vector<4x4xf32>
    %191 = tpu.matmul %190, %174, %cst_113 {dimension_numbers = #tpu.dot_dimension_numbers<[1], [0], [0], [1], [0, 0, 1, 1], [], []>} : vector<4x4xf32>, vector<4x4xf32>, vector<4x4xf32> -> vector<4x4xf32>
    %c2_114 = arith.constant 2 : index
    %c0_115 = arith.constant 0 : index
    %c0_116 = arith.constant 0 : index
    %192 = vector.load %arg9[%c2_114, %c0_115, %c0_116] : memref<3x4x1xf32, #tpu.memory_space<vmem>>, vector<1x4x1xf32>
    %193 = vector.shape_cast %192 : vector<1x4x1xf32> to vector<4x1xf32>
    %194 = vector.broadcast %193 : vector<4x1xf32> to vector<4x4xf32>
    %195 = arith.addf %191, %194 : vector<4x4xf32>
    %cst_117 = arith.constant dense<0.000000e+00> : vector<4x1024xf32>
    %196 = tpu.matmul %188, %181, %cst_117 {dimension_numbers = #tpu.dot_dimension_numbers<[0], [0], [1], [1], [0, 1, 1, 1], [], []>} : vector<4x4xf32>, vector<4x1024xf32>, vector<4x1024xf32> -> vector<4x1024xf32>
    %cst_118 = arith.constant dense<0xFF800000> : vector<1024xf32>
    %197 = vector.multi_reduction <maximumf>, %196, %cst_118 [0] : vector<4x1024xf32> to vector<1024xf32>
    %198 = vector.shape_cast %197 : vector<1024xf32> to vector<1x1024xf32>
    %199 = vector.broadcast %198 : vector<1x1024xf32> to vector<4x1024xf32>
    %200 = arith.subf %196, %199 : vector<4x1024xf32>
    %201 = math.exp %200 : vector<4x1024xf32>
    %cst_119 = arith.constant dense<0.000000e+00> : vector<1024xf32>
    %202 = vector.multi_reduction <add>, %201, %cst_119 [0] : vector<4x1024xf32> to vector<1024xf32>
    %203 = vector.shape_cast %202 : vector<1024xf32> to vector<1x1024xf32>
    %cst_120 = arith.constant dense<0.000000e+00> : vector<4x1024xf32>
    %204 = tpu.matmul %195, %201, %cst_120 {dimension_numbers = #tpu.dot_dimension_numbers<[1], [0], [0], [1], [0, 0, 1, 1], [], []>} : vector<4x4xf32>, vector<4x1024xf32>, vector<4x1024xf32> -> vector<4x1024xf32>
    %205 = tpu.reciprocal %203 {approx = true} : vector<1x1024xf32> -> vector<1x1024xf32>
    %206 = vector.broadcast %205 : vector<1x1024xf32> to vector<4x1024xf32>
    %207 = arith.mulf %204, %206 : vector<4x1024xf32>
    %c0_121 = arith.constant 0 : index
    %c0_122 = arith.constant 0 : index
    %208 = vector.load %arg10[%c0_121, %c0_122] : memref<4x4xf32, #tpu.memory_space<vmem>>, vector<4x4xf32>
    %cst_123 = arith.constant dense<0.000000e+00> : vector<4x1024xf32>
    %209 = tpu.matmul %208, %207, %cst_123 {dimension_numbers = #tpu.dot_dimension_numbers<[1], [0], [0], [1], [0, 0, 1, 1], [], []>} : vector<4x4xf32>, vector<4x1024xf32>, vector<4x1024xf32> -> vector<4x1024xf32>
    %c0_124 = arith.constant 0 : index
    %c0_125 = arith.constant 0 : index
    %210 = vector.load %arg11[%c0_124, %c0_125] : memref<4x1xf32, #tpu.memory_space<vmem>>, vector<4x1xf32>
    %211 = vector.broadcast %210 : vector<4x1xf32> to vector<4x1024xf32>
    %212 = arith.addf %209, %211 : vector<4x1024xf32>
    %c0_126 = arith.constant 0 : index
    %c0_127 = arith.constant 0 : index
    %c0_128 = arith.constant 0 : index
    %213 = vector.load %arg12[%c0_126, %c0_127, %c0_128] : memref<1x4x1024xf32, #tpu.memory_space<vmem>>, vector<1x4x1024xf32>
    %214 = vector.shape_cast %213 : vector<1x4x1024xf32> to vector<4x1024xf32>
    %215 = vector.shape_cast %212 : vector<4x1024xf32> to vector<1x4x1024xf32>
    tpu.vector_store %arg12[%c0_126, %c0_127, %c0_128], %215 {strides = array<i32>} : memref<1x4x1024xf32, #tpu.memory_space<vmem>>, vector<1x4x1024xf32>,
    return
  }
  func.func @transform_0(%arg0: i32) -> (i32, i32, i32) {
    %c0_i32 = arith.constant 0 : i32
    %c0_i32_0 = arith.constant 0 : i32
    %c0_i32_1 = arith.constant 0 : i32
    return %arg0, %c0_i32, %c0_i32_0 : i32, i32, i32
  }
  func.func @transform_1(%arg0: i32) -> (i32, i32, i32) {
    %c0_i32 = arith.constant 0 : i32
    %c0_i32_0 = arith.constant 0 : i32
    %c0_i32_1 = arith.constant 0 : i32
    return %arg0, %c0_i32, %c0_i32_0 : i32, i32, i32
  }
  func.func @transform_2(%arg0: i32) -> (i32, i32) {
    %c0_i32 = arith.constant 0 : i32
    %c0_i32_0 = arith.constant 0 : i32
    %c0_i32_1 = arith.constant 0 : i32
    return %c0_i32, %c0_i32_0 : i32, i32
  }
  func.func @transform_3(%arg0: i32) -> (i32, i32) {
    %c0_i32 = arith.constant 0 : i32
    %c0_i32_0 = arith.constant 0 : i32
    %c0_i32_1 = arith.constant 0 : i32
    return %c0_i32, %c0_i32_0 : i32, i32
  }
  func.func @transform_4(%arg0: i32) -> (i32, i32, i32) {
    %c0_i32 = arith.constant 0 : i32
    %c0_i32_0 = arith.constant 0 : i32
    %c0_i32_1 = arith.constant 0 : i32
    %c0_i32_2 = arith.constant 0 : i32
    return %c0_i32, %c0_i32_0, %c0_i32_1 : i32, i32, i32
  }
  func.func @transform_5(%arg0: i32) -> (i32, i32, i32) {
    %c0_i32 = arith.constant 0 : i32
    %c0_i32_0 = arith.constant 0 : i32
    %c0_i32_1 = arith.constant 0 : i32
    %c0_i32_2 = arith.constant 0 : i32
    return %c0_i32, %c0_i32_0, %c0_i32_1 : i32, i32, i32
  }
  func.func @transform_6(%arg0: i32) -> (i32, i32, i32) {
    %c0_i32 = arith.constant 0 : i32
    %c0_i32_0 = arith.constant 0 : i32
    %c0_i32_1 = arith.constant 0 : i32
    %c0_i32_2 = arith.constant 0 : i32
    return %c0_i32, %c0_i32_0, %c0_i32_1 : i32, i32, i32
  }
  func.func @transform_7(%arg0: i32) -> (i32, i32, i32) {
    %c0_i32 = arith.constant 0 : i32
    %c0_i32_0 = arith.constant 0 : i32
    %c0_i32_1 = arith.constant 0 : i32
    %c0_i32_2 = arith.constant 0 : i32
    return %c0_i32, %c0_i32_0, %c0_i32_1 : i32, i32, i32
  }
  func.func @transform_8(%arg0: i32) -> (i32, i32, i32) {
    %c0_i32 = arith.constant 0 : i32
    %c0_i32_0 = arith.constant 0 : i32
    %c0_i32_1 = arith.constant 0 : i32
    %c0_i32_2 = arith.constant 0 : i32
    return %c0_i32, %c0_i32_0, %c0_i32_1 : i32, i32, i32
  }
  func.func @transform_9(%arg0: i32) -> (i32, i32) {
    %c0_i32 = arith.constant 0 : i32
    %c0_i32_0 = arith.constant 0 : i32
    %c0_i32_1 = arith.constant 0 : i32
    return %c0_i32, %c0_i32_0 : i32, i32
  }
  func.func @transform_10(%arg0: i32) -> (i32, i32) {
    %c0_i32 = arith.constant 0 : i32
    %c0_i32_0 = arith.constant 0 : i32
    %c0_i32_1 = arith.constant 0 : i32
    return %c0_i32, %c0_i32_0 : i32, i32
  }
  func.func @transform_11(%arg0: i32) -> (i32, i32, i32) {
    %c0_i32 = arith.constant 0 : i32
    %c0_i32_0 = arith.constant 0 : i32
    %c0_i32_1 = arith.constant 0 : i32
    return %arg0, %c0_i32, %c0_i32_0 : i32, i32, i32
  }
}

</mosaic_0001>

<llo_original>
// kernel: tpu_custom_call.1
$region0: #{tpu_custom_call.1}
  #allocation0 [shape = 'u32[]', space=smem, size = 0x4, offset = 0x4, fixed_abs, tag = 'smem constant byte address 0x4 - core index']
  #allocation1 [shape = 'u32[144,128]{1,0:T(1,128)}', space=vmem, size = 0x12000, scoped, tag = 'internal scratch']
  %s0 = inlined_call_operand.vmem [shape: f32[2,4,1024], index: 0, kind: input, shape index: {}]
  %s1 = inlined_call_operand.vmem [shape: f32[2,4,256], index: 1, kind: input, shape index: {}]
  %s2 = inlined_call_operand.hbm [shape: bf16[256,1024], index: 2, kind: input, shape index: {}]
  %s3 = inlined_call_operand.vmem [shape: bf16[1024,4], index: 3, kind: input, shape index: {}]
  %s4 = inlined_call_operand.vmem [shape: f32[9,4,1], index: 4, kind: input, shape index: {}]
  %s5 = inlined_call_operand.vmem [shape: f32[9,4,1], index: 5, kind: input, shape index: {}]
  %s6 = inlined_call_operand.vmem [shape: f32[9,1,1024], index: 6, kind: input, shape index: {}]
  %s7 = inlined_call_operand.vmem [shape: f32[3,4,4], index: 7, kind: input, shape index: {}]
  %s8 = inlined_call_operand.vmem [shape: f32[3,4,1], index: 8, kind: input, shape index: {}]
  %s9 = inlined_call_operand.vmem [shape: f32[4,4], index: 9, kind: input, shape index: {}]
  %s10 = inlined_call_operand.vmem [shape: f32[4,1], index: 10, kind: input, shape index: {}]
  %s11 = inlined_call_operand.hbm [shape: f32[2,4,1024], index: 11, kind: output, shape index: {}]
  %s12 = sld [smem:[#allocation0]]
  $region81: #{tpu_custom_call.1} parent=0
    _
  %s14 = ssub.s32 1, %s12
  %s15 = scalar_select 0, %s14, %s12
  $region1: #{tpu_custom_call.1} parent=0
    #allocation2 [shape = 'u8[524288]{0}', space=vmem, size = 0x80000, scoped, tag = 'input window, operand 2, single buffered']
    #allocation3 [shape = 's32[2]{0}', space=sflag, size = 0x8, scoped, tag = 'scoped memory for tpu_custom_call.1']
    #allocation4 [shape = 's32[2]{0}', space=sflag, size = 0x8, scoped, tag = 'scoped memory for tpu_custom_call.1']
    #allocation5 [shape = 'u8[32768]{0}', space=vmem, size = 0x8000, scoped, tag = 'output window, operand 0']
    %16 = vsyncpa [#allocation3], 0
    %17 = vsyncpa [#allocation4], 0
    %s18 = scalar_lea.sflag [#allocation4], 1
    %19 = vsyncpa %s18, 0
    loop: start=0, step=1, limit=4
    $region2: #{tpu_custom_call.1} parent=1 // loop_pre_header
      _
    $region3: #{tpu_custom_call.1} parent=1 // loop_header
      %s21 = sphi 0, %s25
      %p22 = scmp.ge.s32.totalorder %s21, 4
      %s31 = sphi 0, %s33
      %s34 = sphi 0, %s31
      %s35 = sphi 0, %s34
      %s51 = sphi 0, %s35
      %s57 = sphi 0, %s59
      %s60 = sphi 0, %s57
      %s61 = sphi 0, %s60
      %s77 = sphi 0, %s61
      %s81 = sphi 0, %s81
      %s83 = sphi 0, %s81
      %s84 = sphi 0, %s83
      %s98 = sphi 0, %s84
      %s102 = sphi 0, %s102
      %s104 = sphi 0, %s102
      %s105 = sphi 0, %s104
      %s119 = sphi 0, %s105
      %s123 = sphi 0, %s123
      %s125 = sphi 0, %s123
      %s126 = sphi 0, %s125
      %s140 = sphi 0, %s126
      %s144 = sphi 0, %s144
      %s146 = sphi 0, %s144
      %s147 = sphi 0, %s146
      %s161 = sphi 0, %s147
      %s165 = sphi 0, %s165
      %s167 = sphi 0, %s165
      %s168 = sphi 0, %s167
      %s182 = sphi 0, %s168
      %s186 = sphi 0, %s186
      %s188 = sphi 0, %s186
      %s189 = sphi 0, %s188
      %s203 = sphi 0, %s189
      %s207 = sphi 0, %s207
      %s209 = sphi 0, %s207
      %s210 = sphi 0, %s209
      %s224 = sphi 0, %s210
      %s228 = sphi 0, %s228
      %s230 = sphi 0, %s228
      %s231 = sphi 0, %s230
      %s245 = sphi 0, %s231
      %s249 = sphi 0, %s249
      %s251 = sphi 0, %s249
      %s252 = sphi 0, %s251
      %s266 = sphi 0, %s252
      %s272 = sphi 0, %s274
      %s275 = sphi 0, %s272
      %s276 = sphi 0, %s275
      %s292 = sphi 0, %s276
    $region4: #{tpu_custom_call.1} parent=1 // loop_header_branch
      %24 = sbr.rel (%p22) target = $region8
    $region5: #{tpu_custom_call.1} parent=1 // loop_body
      %s26 = ssub.s32 %s21, 1
      %s27 = ssub.s32 %s21, 2
      %s28 = sadd.s32 %s21, 1
      %s29 = ssub.s32 %s21, %s28
      %p30 = scmp.eq.s32.totalorder %s29, 0
      %s32 = sadd.s32 %s31, 1
      %s33 = scalar_select %p30, %s31, %s32
      %p36 = pneg %p30
      %p37 = scmp.eq.s32.totalorder %s21, 1
      %p38 = por %p36, %p37
      %p39 = scmp.ne.s32.totalorder %s31, %s34
      %p40 = scmp.eq.s32.totalorder %s21, 0
      %p41 = por %p39, %p40
      %p42 = scmp.ne.s32.totalorder %s31, %s34
      %p43 = scmp.eq.s32.totalorder %s26, 1
      %p44 = por %p42, %p43
      %p45 = scmp.ne.s32.totalorder %s34, %s35
      %p46 = scmp.eq.s32.totalorder %s26, 0
      %p47 = por %p45, %p46
      %p48 = scmp.ne.s32.totalorder %s34, %s35
      %p49 = scmp.eq.s32.totalorder %s27, 1
      %p50 = por %p48, %p49
      %p52 = scmp.ne.s32.totalorder %s35, %s51
      %p53 = scmp.eq.s32.totalorder %s27, 0
      %p54 = por %p52, %p53
      %s55 = ssub.s32 %s21, %s28
      %p56 = scmp.eq.s32.totalorder %s55, 0
      %s58 = sadd.s32 %s57, 1
      %s59 = scalar_select %p56, %s57, %s58
      %p62 = pneg %p56
      %p63 = scmp.eq.s32.totalorder %s21, 1
      %p64 = por %p62, %p63
      %p65 = scmp.ne.s32.totalorder %s57, %s60
      %p66 = scmp.eq.s32.totalorder %s21, 0
      %p67 = por %p65, %p66
      %p68 = scmp.ne.s32.totalorder %s57, %s60
      %p69 = scmp.eq.s32.totalorder %s26, 1
      %p70 = por %p68, %p69
      %p71 = scmp.ne.s32.totalorder %s60, %s61
      %p72 = scmp.eq.s32.totalorder %s26, 0
      %p73 = por %p71, %p72
      %p74 = scmp.ne.s32.totalorder %s60, %s61
      %p75 = scmp.eq.s32.totalorder %s27, 1
      %p76 = por %p74, %p75
      %p78 = scmp.ne.s32.totalorder %s61, %s77
      %p79 = scmp.eq.s32.totalorder %s27, 0
      %p80 = por %p78, %p79
      %s82 = sadd.s32 %s81, 1
      %p85 = scmp.eq.s32.totalorder %s21, 1
      %p86 = scmp.ne.s32.totalorder %s81, %s83
      %p87 = scmp.eq.s32.totalorder %s21, 0
      %p88 = por %p86, %p87
      %p89 = scmp.ne.s32.totalorder %s81, %s83
      %p90 = scmp.eq.s32.totalorder %s26, 1
      %p91 = por %p89, %p90
      %p92 = scmp.ne.s32.totalorder %s83, %s84
      %p93 = scmp.eq.s32.totalorder %s26, 0
      %p94 = por %p92, %p93
      %p95 = scmp.ne.s32.totalorder %s83, %s84
      %p96 = scmp.eq.s32.totalorder %s27, 1
      %p97 = por %p95, %p96
      %p99 = scmp.ne.s32.totalorder %s84, %s98
      %p100 = scmp.eq.s32.totalorder %s27, 0
      %p101 = por %p99, %p100
      %s103 = sadd.s32 %s102, 1
      %p106 = scmp.eq.s32.totalorder %s21, 1
      %p107 = scmp.ne.s32.totalorder %s102, %s104
      %p108 = scmp.eq.s32.totalorder %s21, 0
      %p109 = por %p107, %p108
      %p110 = scmp.ne.s32.totalorder %s102, %s104
      %p111 = scmp.eq.s32.totalorder %s26, 1
      %p112 = por %p110, %p111
      %p113 = scmp.ne.s32.totalorder %s104, %s105
      %p114 = scmp.eq.s32.totalorder %s26, 0
      %p115 = por %p113, %p114
      %p116 = scmp.ne.s32.totalorder %s104, %s105
      %p117 = scmp.eq.s32.totalorder %s27, 1
      %p118 = por %p116, %p117
      %p120 = scmp.ne.s32.totalorder %s105, %s119
      %p121 = scmp.eq.s32.totalorder %s27, 0
      %p122 = por %p120, %p121
      %s124 = sadd.s32 %s123, 1
      %p127 = scmp.eq.s32.totalorder %s21, 1
      %p128 = scmp.ne.s32.totalorder %s123, %s125
      %p129 = scmp.eq.s32.totalorder %s21, 0
      %p130 = por %p128, %p129
      %p131 = scmp.ne.s32.totalorder %s123, %s125
      %p132 = scmp.eq.s32.totalorder %s26, 1
      %p133 = por %p131, %p132
      %p134 = scmp.ne.s32.totalorder %s125, %s126
      %p135 = scmp.eq.s32.totalorder %s26, 0
      %p136 = por %p134, %p135
      %p137 = scmp.ne.s32.totalorder %s125, %s126
      %p138 = scmp.eq.s32.totalorder %s27, 1
      %p139 = por %p137, %p138
      %p141 = scmp.ne.s32.totalorder %s126, %s140
      %p142 = scmp.eq.s32.totalorder %s27, 0
      %p143 = por %p141, %p142
      %s145 = sadd.s32 %s144, 1
      %p148 = scmp.eq.s32.totalorder %s21, 1
      %p149 = scmp.ne.s32.totalorder %s144, %s146
      %p150 = scmp.eq.s32.totalorder %s21, 0
      %p151 = por %p149, %p150
      %p152 = scmp.ne.s32.totalorder %s144, %s146
      %p153 = scmp.eq.s32.totalorder %s26, 1
      %p154 = por %p152, %p153
      %p155 = scmp.ne.s32.totalorder %s146, %s147
      %p156 = scmp.eq.s32.totalorder %s26, 0
      %p157 = por %p155, %p156
      %p158 = scmp.ne.s32.totalorder %s146, %s147
      %p159 = scmp.eq.s32.totalorder %s27, 1
      %p160 = por %p158, %p159
      %p162 = scmp.ne.s32.totalorder %s147, %s161
      %p163 = scmp.eq.s32.totalorder %s27, 0
      %p164 = por %p162, %p163
      %s166 = sadd.s32 %s165, 1
      %p169 = scmp.eq.s32.totalorder %s21, 1
      %p170 = scmp.ne.s32.totalorder %s165, %s167
      %p171 = scmp.eq.s32.totalorder %s21, 0
      %p172 = por %p170, %p171
      %p173 = scmp.ne.s32.totalorder %s165, %s167
      %p174 = scmp.eq.s32.totalorder %s26, 1
      %p175 = por %p173, %p174
      %p176 = scmp.ne.s32.totalorder %s167, %s168
      %p177 = scmp.eq.s32.totalorder %s26, 0
      %p178 = por %p176, %p177
      %p179 = scmp.ne.s32.totalorder %s167, %s168
      %p180 = scmp.eq.s32.totalorder %s27, 1
      %p181 = por %p179, %p180
      %p183 = scmp.ne.s32.totalorder %s168, %s182
      %p184 = scmp.eq.s32.totalorder %s27, 0
      %p185 = por %p183, %p184
      %s187 = sadd.s32 %s186, 1
      %p190 = scmp.eq.s32.totalorder %s21, 1
      %p191 = scmp.ne.s32.totalorder %s186, %s188
      %p192 = scmp.eq.s32.totalorder %s21, 0
      %p193 = por %p191, %p192
      %p194 = scmp.ne.s32.totalorder %s186, %s188
      %p195 = scmp.eq.s32.totalorder %s26, 1
      %p196 = por %p194, %p195
      %p197 = scmp.ne.s32.totalorder %s188, %s189
      %p198 = scmp.eq.s32.totalorder %s26, 0
      %p199 = por %p197, %p198
      %p200 = scmp.ne.s32.totalorder %s188, %s189
      %p201 = scmp.eq.s32.totalorder %s27, 1
      %p202 = por %p200, %p201
      %p204 = scmp.ne.s32.totalorder %s189, %s203
      %p205 = scmp.eq.s32.totalorder %s27, 0
      %p206 = por %p204, %p205
      %s208 = sadd.s32 %s207, 1
      %p211 = scmp.eq.s32.totalorder %s21, 1
      %p212 = scmp.ne.s32.totalorder %s207, %s209
      %p213 = scmp.eq.s32.totalorder %s21, 0
      %p214 = por %p212, %p213
      %p215 = scmp.ne.s32.totalorder %s207, %s209
      %p216 = scmp.eq.s32.totalorder %s26, 1
      %p217 = por %p215, %p216
      %p218 = scmp.ne.s32.totalorder %s209, %s210
      %p219 = scmp.eq.s32.totalorder %s26, 0
      %p220 = por %p218, %p219
      %p221 = scmp.ne.s32.totalorder %s209, %s210
      %p222 = scmp.eq.s32.totalorder %s27, 1
      %p223 = por %p221, %p222
      %p225 = scmp.ne.s32.totalorder %s210, %s224
      %p226 = scmp.eq.s32.totalorder %s27, 0
      %p227 = por %p225, %p226
      %s229 = sadd.s32 %s228, 1
      %p232 = scmp.eq.s32.totalorder %s21, 1
      %p233 = scmp.ne.s32.totalorder %s228, %s230
      %p234 = scmp.eq.s32.totalorder %s21, 0
      %p235 = por %p233, %p234
      %p236 = scmp.ne.s32.totalorder %s228, %s230
      %p237 = scmp.eq.s32.totalorder %s26, 1
      %p238 = por %p236, %p237
      %p239 = scmp.ne.s32.totalorder %s230, %s231
      %p240 = scmp.eq.s32.totalorder %s26, 0
      %p241 = por %p239, %p240
      %p242 = scmp.ne.s32.totalorder %s230, %s231
      %p243 = scmp.eq.s32.totalorder %s27, 1
      %p244 = por %p242, %p243
      %p246 = scmp.ne.s32.totalorder %s231, %s245
      %p247 = scmp.eq.s32.totalorder %s27, 0
      %p248 = por %p246, %p247
      %s250 = sadd.s32 %s249, 1
      %p253 = scmp.eq.s32.totalorder %s21, 1
      %p254 = scmp.ne.s32.totalorder %s249, %s251
      %p255 = scmp.eq.s32.totalorder %s21, 0
      %p256 = por %p254, %p255
      %p257 = scmp.ne.s32.totalorder %s249, %s251
      %p258 = scmp.eq.s32.totalorder %s26, 1
      %p259 = por %p257, %p258
      %p260 = scmp.ne.s32.totalorder %s251, %s252
      %p261 = scmp.eq.s32.totalorder %s26, 0
      %p262 = por %p260, %p261
      %p263 = scmp.ne.s32.totalorder %s251, %s252
      %p264 = scmp.eq.s32.totalorder %s27, 1
      %p265 = por %p263, %p264
      %p267 = scmp.ne.s32.totalorder %s252, %s266
      %p268 = scmp.eq.s32.totalorder %s27, 0
      %p269 = por %p267, %p268
      %s270 = ssub.s32 %s21, %s28
      %p271 = scmp.eq.s32.totalorder %s270, 0
      %s273 = sadd.s32 %s272, 1
      %s274 = scalar_select %p271, %s272, %s273
      %p277 = pneg %p271
      %p278 = scmp.eq.s32.totalorder %s21, 1
      %p279 = por %p277, %p278
      %p280 = scmp.ne.s32.totalorder %s272, %s275
      %p281 = scmp.eq.s32.totalorder %s21, 0
      %p282 = por %p280, %p281
      %p283 = scmp.ne.s32.totalorder %s272, %s275
      %p284 = scmp.eq.s32.totalorder %s26, 1
      %p285 = por %p283, %p284
      %p286 = scmp.ne.s32.totalorder %s275, %s276
      %p287 = scmp.eq.s32.totalorder %s26, 0
      %p288 = por %p286, %p287
      %p289 = scmp.ne.s32.totalorder %s275, %s276
      %p290 = scmp.eq.s32.totalorder %s27, 1
      %p291 = por %p289, %p290
      %p293 = scmp.ne.s32.totalorder %s276, %s292
      %p294 = scmp.eq.s32.totalorder %s27, 0
      %p295 = por %p293, %p294
      %p296 = scmp.le.s32.totalorder 1, %s21
      %p297 = scmp.lt.s32.totalorder %s21, 3
      %p298 = pnand %p296, %p297
      %p299 = pneg %p298
      // Predicated region
      $region9: #{tpu_custom_call.1} parent=5 // pred_check
        _
      $region10: #{tpu_custom_call.1} parent=5 // pred_check_branch
        %301 = sbr.rel (%p298) target = $region12
      $region11: #{tpu_custom_call.1} parent=5 // pred_region
        %s302 = ssub.s32 %s21, 1
        // Predicated region
        $region13: #{tpu_custom_call.1} parent=11 // pred_check
          %p303 = pneg %p94
        $region14: #{tpu_custom_call.1} parent=11 // pred_check_branch
          %305 = sbr.rel (%p303) target = $region16
        $region15: #{tpu_custom_call.1} parent=11 // pred_region
          %s307 = ssub.s32 16384, 16384
          %308 = vsyncadd [#allocation3], %s307
          %s309 = sshll.u32 [#allocation2], 4
          %s310 = int_to_ptr.vmem [resolvable:$true] %s309
          %315 = dma.hbm_to_vmem [thread:$0]  %s2, 16384, %s310, [#allocation3], 512, 512, 32
        $region16: #{tpu_custom_call.1} parent=11 // pred_fallthru
          _
        // Predicated region
        $region17: #{tpu_custom_call.1} parent=11 // pred_check
          %p316 = pneg %p115
        $region18: #{tpu_custom_call.1} parent=11 // pred_check_branch
          %318 = sbr.rel (%p316) target = $region20
        $region19: #{tpu_custom_call.1} parent=11 // pred_region
          _
        $region20: #{tpu_custom_call.1} parent=11 // pred_fallthru
          _
        // Predicated region
        $region21: #{tpu_custom_call.1} parent=11 // pred_check
          %p319 = pneg %p136
        $region22: #{tpu_custom_call.1} parent=11 // pred_check_branch
          %321 = sbr.rel (%p319) target = $region24
        $region23: #{tpu_custom_call.1} parent=11 // pred_region
          _
        $region24: #{tpu_custom_call.1} parent=11 // pred_fallthru
          _
        // Predicated region
        $region25: #{tpu_custom_call.1} parent=11 // pred_check
          %p322 = pneg %p157
        $region26: #{tpu_custom_call.1} parent=11 // pred_check_branch
          %324 = sbr.rel (%p322) target = $region28
        $region27: #{tpu_custom_call.1} parent=11 // pred_region
          _
        $region28: #{tpu_custom_call.1} parent=11 // pred_fallthru
          _
        // Predicated region
        $region29: #{tpu_custom_call.1} parent=11 // pred_check
          %p325 = pneg %p178
        $region30: #{tpu_custom_call.1} parent=11 // pred_check_branch
          %327 = sbr.rel (%p325) target = $region32
        $region31: #{tpu_custom_call.1} parent=11 // pred_region
          _
        $region32: #{tpu_custom_call.1} parent=11 // pred_fallthru
          _
        // Predicated region
        $region33: #{tpu_custom_call.1} parent=11 // pred_check
          %p328 = pneg %p199
        $region34: #{tpu_custom_call.1} parent=11 // pred_check_branch
          %330 = sbr.rel (%p328) target = $region36
        $region35: #{tpu_custom_call.1} parent=11 // pred_region
          _
        $region36: #{tpu_custom_call.1} parent=11 // pred_fallthru
          _
        // Predicated region
        $region37: #{tpu_custom_call.1} parent=11 // pred_check
          %p331 = pneg %p220
        $region38: #{tpu_custom_call.1} parent=11 // pred_check_branch
          %333 = sbr.rel (%p331) target = $region40
        $region39: #{tpu_custom_call.1} parent=11 // pred_region
          _
        $region40: #{tpu_custom_call.1} parent=11 // pred_fallthru
          _
        // Predicated region
        $region41: #{tpu_custom_call.1} parent=11 // pred_check
          %p334 = pneg %p241
        $region42: #{tpu_custom_call.1} parent=11 // pred_check_branch
          %336 = sbr.rel (%p334) target = $region44
        $region43: #{tpu_custom_call.1} parent=11 // pred_region
          _
        $region44: #{tpu_custom_call.1} parent=11 // pred_fallthru
          _
        // Predicated region
        $region45: #{tpu_custom_call.1} parent=11 // pred_check
          %p337 = pneg %p262
        $region46: #{tpu_custom_call.1} parent=11 // pred_check_branch
          %339 = sbr.rel (%p337) target = $region48
        $region47: #{tpu_custom_call.1} parent=11 // pred_region
          _
        $region48: #{tpu_custom_call.1} parent=11 // pred_fallthru
          _
      $region12: #{tpu_custom_call.1} parent=5 // pred_fallthru
        _
      %p340 = scmp.lt.s32.totalorder %s21, 2
      // Predicated region
      $region49: #{tpu_custom_call.1} parent=5 // pred_check
        %p341 = pneg %p340
      $region50: #{tpu_custom_call.1} parent=5 // pred_check_branch
        %343 = sbr.rel (%p341) target = $region52
      $region51: #{tpu_custom_call.1} parent=5 // pred_region
        // Predicated region
        $region53: #{tpu_custom_call.1} parent=51 // pred_check
          %p344 = pneg %p41
        $region54: #{tpu_custom_call.1} parent=51 // pred_check_branch
          %346 = sbr.rel (%p344) target = $region56
        $region55: #{tpu_custom_call.1} parent=51 // pred_region
          %p347 = scmp.lt.s32.totalorder %s21, 1
          %s348 = scalar_select %p347, %s21, 1
          %s349 = smul.addr %s348, 8
          %s350 = smul.addr %s349, 4
          %s351 = scalar_lea.vmem %s0, %s350
        $region56: #{tpu_custom_call.1} parent=51 // pred_fallthru
          _
        // Predicated region
        $region57: #{tpu_custom_call.1} parent=51 // pred_check
          %p352 = pneg %p67
        $region58: #{tpu_custom_call.1} parent=51 // pred_check_branch
          %354 = sbr.rel (%p352) target = $region60
        $region59: #{tpu_custom_call.1} parent=51 // pred_region
          %p355 = scmp.lt.s32.totalorder %s21, 1
          %s356 = scalar_select %p355, %s21, 1
          %s357 = smul.addr %s356, 2
          %s358 = smul.addr %s357, 4
          %s359 = scalar_lea.vmem %s1, %s358
        $region60: #{tpu_custom_call.1} parent=51 // pred_fallthru
          _
      $region52: #{tpu_custom_call.1} parent=5 // pred_fallthru
        _
      %p360 = scmp.le.s32.totalorder 1, %s21
      %p361 = scmp.lt.s32.totalorder %s21, 3
      %p362 = pnand %p360, %p361
      %p363 = pneg %p362
      // Predicated region
      $region61: #{tpu_custom_call.1} parent=5 // pred_check
        _
      $region62: #{tpu_custom_call.1} parent=5 // pred_check_branch
        %365 = sbr.rel (%p362) target = $region64
      $region63: #{tpu_custom_call.1} parent=5 // pred_region
        %s366 = ssub.s32 %s21, 1
        // Predicated region
        $region65: #{tpu_custom_call.1} parent=63 // pred_check
          %p367 = pneg %p94
        $region66: #{tpu_custom_call.1} parent=63 // pred_check_branch
          %369 = sbr.rel (%p367) target = $region68
        $region67: #{tpu_custom_call.1} parent=63 // pred_region
          %370 = dma.done [#allocation3], 16384
        $region68: #{tpu_custom_call.1} parent=63 // pred_fallthru
          _
        %p371 = scmp.lt.s32.totalorder %s26, 1
        %s372 = scalar_select %p371, %s26, 1
        %s373 = smul.addr %s372, 8
        %s374 = smul.addr %s373, 4
        %s375 = scalar_lea.vmem %s0, %s374
        %p376 = pneg %p47
        %p377 = pneg %p44
        %p378 = scmp.lt.s32.totalorder %s26, 1
        %s379 = scalar_select %p378, %s26, 1
        %s380 = smul.addr %s379, 2
        %s381 = smul.addr %s380, 4
        %s382 = scalar_lea.vmem %s1, %s381
        %p383 = pneg %p73
        %p384 = pneg %p70
        %p385 = pneg %p94
        %p386 = pneg %p91
        %p387 = pneg %p115
        %p388 = pneg %p112
        %p389 = pneg %p136
        %p390 = pneg %p133
        %p391 = pneg %p157
        %p392 = pneg %p154
        %p393 = pneg %p178
        %p394 = pneg %p175
        %p395 = pneg %p199
        %p396 = pneg %p196
        %p397 = pneg %p220
        %p398 = pneg %p217
        %p399 = pneg %p241
        %p400 = pneg %p238
        %p401 = pneg %p262
        %p402 = pneg %p259
        %p403 = pneg %p288
        %p404 = pneg %p285
        %s405 = sand.u32 %s275, 1
        %s406 = scalar_lea.sflag [#allocation4], %s405
        %s407 = sand.u32 %s275, 1
        %s408 = smul.addr %s407, 32
        %s409 = scalar_lea.vmem [#allocation5], %s408
        %p410 = scmp.lt.s32.totalorder %s26, 1
        %s411 = scalar_select %p410, %s26, 1
        %s412 = smul.addr %s411, 8
        %s413 = smul.addr %s412, 4
        %s414 = scalar_lea.vmem %s0, %s413
        %p415 = scmp.lt.s32.totalorder %s26, 1
        %s416 = scalar_select %p415, %s26, 1
        %s417 = smul.addr %s416, 2
        %s418 = smul.addr %s417, 4
        %s419 = scalar_lea.vmem %s1, %s418
        %v421 = vld [vmem:[%s414] sm:$0xff]
        %v422 = vld [vmem:[%s414 + $0x8] sm:$0xff]
        %v423 = vld [vmem:[%s414 + $0x10] sm:$0xff]
        %v424 = vld [vmem:[%s414 + $0x18] sm:$0xff]
        %v425 = vld [vmem:[%s419] sm:$0xff]
        %v427 = vcombine.high %v425, %v425
        %v429 = vpack.c.bf16 %v425, %v425
        %v430 = vpack.c.bf16 %v427, %v427
        %v431 = vld [vmem:[#allocation2] sm:$0xff]
        %v432 = vld [vmem:[#allocation2 + $0x8] sm:$0xff]
        %v433 = vld [vmem:[#allocation2 + $0x10] sm:$0xff]
        %v434 = vld [vmem:[#allocation2 + $0x18] sm:$0xff]
        %v435 = vld [vmem:[#allocation2 + $0x20] sm:$0xff]
        %v436 = vld [vmem:[#allocation2 + $0x28] sm:$0xff]
        %v437 = vld [vmem:[#allocation2 + $0x30] sm:$0xff]
        %v438 = vld [vmem:[#allocation2 + $0x38] sm:$0xff]
        %v439 = vld [vmem:[#allocation2 + $0x40] sm:$0xff]
        %v440 = vld [vmem:[#allocation2 + $0x48] sm:$0xff]
        %v441 = vld [vmem:[#allocation2 + $0x50] sm:$0xff]
        %v442 = vld [vmem:[#allocation2 + $0x58] sm:$0xff]
        %v443 = vld [vmem:[#allocation2 + $0x60] sm:$0xff]
        %v444 = vld [vmem:[#allocation2 + $0x68] sm:$0xff]
        %v445 = vld [vmem:[#allocation2 + $0x70] sm:$0xff]
        %v446 = vld [vmem:[#allocation2 + $0x78] sm:$0xff]
        %v447 = vld [vmem:[#allocation2 + $0x80] sm:$0xff]
        %v448 = vld [vmem:[#allocation2 + $0x88] sm:$0xff]
        %v449 = vld [vmem:[#allocation2 + $0x90] sm:$0xff]
        %v450 = vld [vmem:[#allocation2 + $0x98] sm:$0xff]
        %v451 = vld [vmem:[#allocation2 + $0xa0] sm:$0xff]
        %v452 = vld [vmem:[#allocation2 + $0xa8] sm:$0xff]
        %v453 = vld [vmem:[#allocation2 + $0xb0] sm:$0xff]
        %v454 = vld [vmem:[#allocation2 + $0xb8] sm:$0xff]
        %v455 = vld [vmem:[#allocation2 + $0xc0] sm:$0xff]
        %v456 = vld [vmem:[#allocation2 + $0xc8] sm:$0xff]
        %v457 = vld [vmem:[#allocation2 + $0xd0] sm:$0xff]
        %v458 = vld [vmem:[#allocation2 + $0xd8] sm:$0xff]
        %v459 = vld [vmem:[#allocation2 + $0xe0] sm:$0xff]
        %v460 = vld [vmem:[#allocation2 + $0xe8] sm:$0xff]
        %v461 = vld [vmem:[#allocation2 + $0xf0] sm:$0xff]
        %v462 = vld [vmem:[#allocation2 + $0xf8] sm:$0xff]
        %v463 = vld [vmem:[#allocation2 + $0x100] sm:$0xff]
        %v464 = vld [vmem:[#allocation2 + $0x108] sm:$0xff]
        %v465 = vld [vmem:[#allocation2 + $0x110] sm:$0xff]
        %v466 = vld [vmem:[#allocation2 + $0x118] sm:$0xff]
        %v467 = vld [vmem:[#allocation2 + $0x120] sm:$0xff]
        %v468 = vld [vmem:[#allocation2 + $0x128] sm:$0xff]
        %v469 = vld [vmem:[#allocation2 + $0x130] sm:$0xff]
        %v470 = vld [vmem:[#allocation2 + $0x138] sm:$0xff]
        %v471 = vld [vmem:[#allocation2 + $0x140] sm:$0xff]
        %v472 = vld [vmem:[#allocation2 + $0x148] sm:$0xff]
        %v473 = vld [vmem:[#allocation2 + $0x150] sm:$0xff]
        %v474 = vld [vmem:[#allocation2 + $0x158] sm:$0xff]
        %v475 = vld [vmem:[#allocation2 + $0x160] sm:$0xff]
        %v476 = vld [vmem:[#allocation2 + $0x168] sm:$0xff]
        %v477 = vld [vmem:[#allocation2 + $0x170] sm:$0xff]
        %v478 = vld [vmem:[#allocation2 + $0x178] sm:$0xff]
        %v479 = vld [vmem:[#allocation2 + $0x180] sm:$0xff]
        %v480 = vld [vmem:[#allocation2 + $0x188] sm:$0xff]
        %v481 = vld [vmem:[#allocation2 + $0x190] sm:$0xff]
        %v482 = vld [vmem:[#allocation2 + $0x198] sm:$0xff]
        %v483 = vld [vmem:[#allocation2 + $0x1a0] sm:$0xff]
        %v484 = vld [vmem:[#allocation2 + $0x1a8] sm:$0xff]
        %v485 = vld [vmem:[#allocation2 + $0x1b0] sm:$0xff]
        %v486 = vld [vmem:[#allocation2 + $0x1b8] sm:$0xff]
        %v487 = vld [vmem:[#allocation2 + $0x1c0] sm:$0xff]
        %v488 = vld [vmem:[#allocation2 + $0x1c8] sm:$0xff]
        %v489 = vld [vmem:[#allocation2 + $0x1d0] sm:$0xff]
        %v490 = vld [vmem:[#allocation2 + $0x1d8] sm:$0xff]
        %v491 = vld [vmem:[#allocation2 + $0x1e0] sm:$0xff]
        %v492 = vld [vmem:[#allocation2 + $0x1e8] sm:$0xff]
        %v493 = vld [vmem:[#allocation2 + $0x1f0] sm:$0xff]
        %v494 = vld [vmem:[#allocation2 + $0x1f8] sm:$0xff]
        %v495 = vld [vmem:[#allocation2 + $0x200] sm:$0xff]
        %v496 = vld [vmem:[#allocation2 + $0x208] sm:$0xff]
        %v497 = vld [vmem:[#allocation2 + $0x210] sm:$0xff]
        %v498 = vld [vmem:[#allocation2 + $0x218] sm:$0xff]
        %v499 = vld [vmem:[#allocation2 + $0x220] sm:$0xff]
        %v500 = vld [vmem:[#allocation2 + $0x228] sm:$0xff]
        %v501 = vld [vmem:[#allocation2 + $0x230] sm:$0xff]
        %v502 = vld [vmem:[#allocation2 + $0x238] sm:$0xff]
        %v503 = vld [vmem:[#allocation2 + $0x240] sm:$0xff]
        %v504 = vld [vmem:[#allocation2 + $0x248] sm:$0xff]
        %v505 = vld [vmem:[#allocation2 + $0x250] sm:$0xff]
        %v506 = vld [vmem:[#allocation2 + $0x258] sm:$0xff]
        %v507 = vld [vmem:[#allocation2 + $0x260] sm:$0xff]
        %v508 = vld [vmem:[#allocation2 + $0x268] sm:$0xff]
        %v509 = vld [vmem:[#allocation2 + $0x270] sm:$0xff]
        %v510 = vld [vmem:[#allocation2 + $0x278] sm:$0xff]
        %v511 = vld [vmem:[#allocation2 + $0x280] sm:$0xff]
        %v512 = vld [vmem:[#allocation2 + $0x288] sm:$0xff]
        %v513 = vld [vmem:[#allocation2 + $0x290] sm:$0xff]
        %v514 = vld [vmem:[#allocation2 + $0x298] sm:$0xff]
        %v515 = vld [vmem:[#allocation2 + $0x2a0] sm:$0xff]
        %v516 = vld [vmem:[#allocation2 + $0x2a8] sm:$0xff]
        %v517 = vld [vmem:[#allocation2 + $0x2b0] sm:$0xff]
        %v518 = vld [vmem:[#allocation2 + $0x2b8] sm:$0xff]
        %v519 = vld [vmem:[#allocation2 + $0x2c0] sm:$0xff]
        %v520 = vld [vmem:[#allocation2 + $0x2c8] sm:$0xff]
        %v521 = vld [vmem:[#allocation2 + $0x2d0] sm:$0xff]
        %v522 = vld [vmem:[#allocation2 + $0x2d8] sm:$0xff]
        %v523 = vld [vmem:[#allocation2 + $0x2e0] sm:$0xff]
        %v524 = vld [vmem:[#allocation2 + $0x2e8] sm:$0xff]
        %v525 = vld [vmem:[#allocation2 + $0x2f0] sm:$0xff]
        %v526 = vld [vmem:[#allocation2 + $0x2f8] sm:$0xff]
        %v527 = vld [vmem:[#allocation2 + $0x300] sm:$0xff]
        %v528 = vld [vmem:[#allocation2 + $0x308] sm:$0xff]
        %v529 = vld [vmem:[#allocation2 + $0x310] sm:$0xff]
        %v530 = vld [vmem:[#allocation2 + $0x318] sm:$0xff]
        %v531 = vld [vmem:[#allocation2 + $0x320] sm:$0xff]
        %v532 = vld [vmem:[#allocation2 + $0x328] sm:$0xff]
        %v533 = vld [vmem:[#allocation2 + $0x330] sm:$0xff]
        %v534 = vld [vmem:[#allocation2 + $0x338] sm:$0xff]
        %v535 = vld [vmem:[#allocation2 + $0x340] sm:$0xff]
        %v536 = vld [vmem:[#allocation2 + $0x348] sm:$0xff]
        %v537 = vld [vmem:[#allocation2 + $0x350] sm:$0xff]
        %v538 = vld [vmem:[#allocation2 + $0x358] sm:$0xff]
        %v539 = vld [vmem:[#allocation2 + $0x360] sm:$0xff]
        %v540 = vld [vmem:[#allocation2 + $0x368] sm:$0xff]
        %v541 = vld [vmem:[#allocation2 + $0x370] sm:$0xff]
        %v542 = vld [vmem:[#allocation2 + $0x378] sm:$0xff]
        %v543 = vld [vmem:[#allocation2 + $0x380] sm:$0xff]
        %v544 = vld [vmem:[#allocation2 + $0x388] sm:$0xff]
        %v545 = vld [vmem:[#allocation2 + $0x390] sm:$0xff]
        %v546 = vld [vmem:[#allocation2 + $0x398] sm:$0xff]
        %v547 = vld [vmem:[#allocation2 + $0x3a0] sm:$0xff]
        %v548 = vld [vmem:[#allocation2 + $0x3a8] sm:$0xff]
        %v549 = vld [vmem:[#allocation2 + $0x3b0] sm:$0xff]
        %v550 = vld [vmem:[#allocation2 + $0x3b8] sm:$0xff]
        %v551 = vld [vmem:[#allocation2 + $0x3c0] sm:$0xff]
        %v552 = vld [vmem:[#allocation2 + $0x3c8] sm:$0xff]
        %v553 = vld [vmem:[#allocation2 + $0x3d0] sm:$0xff]
        %v554 = vld [vmem:[#allocation2 + $0x3d8] sm:$0xff]
        %v555 = vld [vmem:[#allocation2 + $0x3e0] sm:$0xff]
        %v556 = vld [vmem:[#allocation2 + $0x3e8] sm:$0xff]
        %v557 = vld [vmem:[#allocation2 + $0x3f0] sm:$0xff]
        %v558 = vld [vmem:[#allocation2 + $0x3f8] sm:$0xff]
        %v687 = vunpack.c.l.b16 %v431
        %v688 = vunpack.c.h.b16 %v431
        %v689 = vunpack.c.l.b16 %v432
        %v690 = vunpack.c.h.b16 %v432
        %v691 = vunpack.c.l.b16 %v433
        %v692 = vunpack.c.h.b16 %v433
        %v693 = vunpack.c.l.b16 %v434
        %v694 = vunpack.c.h.b16 %v434
        %v695 = vunpack.c.l.b16 %v435
        %v696 = vunpack.c.h.b16 %v435
        %v697 = vunpack.c.l.b16 %v436
        %v698 = vunpack.c.h.b16 %v436
        %v699 = vunpack.c.l.b16 %v437
        %v700 = vunpack.c.h.b16 %v437
        %v701 = vunpack.c.l.b16 %v438
        %v702 = vunpack.c.h.b16 %v438
        %v703 = vunpack.c.l.b16 %v439
        %v704 = vunpack.c.h.b16 %v439
        %v705 = vunpack.c.l.b16 %v440
        %v706 = vunpack.c.h.b16 %v440
        %v707 = vunpack.c.l.b16 %v441
        %v708 = vunpack.c.h.b16 %v441
        %v709 = vunpack.c.l.b16 %v442
        %v710 = vunpack.c.h.b16 %v442
        %v711 = vunpack.c.l.b16 %v443
        %v712 = vunpack.c.h.b16 %v443
        %v713 = vunpack.c.l.b16 %v444
        %v714 = vunpack.c.h.b16 %v444
        %v715 = vunpack.c.l.b16 %v445
        %v716 = vunpack.c.h.b16 %v445
        %v717 = vunpack.c.l.b16 %v446
        %v718 = vunpack.c.h.b16 %v446
        %v719 = vunpack.c.l.b16 %v447
        %v720 = vunpack.c.h.b16 %v447
        %v721 = vunpack.c.l.b16 %v448
        %v722 = vunpack.c.h.b16 %v448
        %v723 = vunpack.c.l.b16 %v449
        %v724 = vunpack.c.h.b16 %v449
        %v725 = vunpack.c.l.b16 %v450
        %v726 = vunpack.c.h.b16 %v450
        %v727 = vunpack.c.l.b16 %v451
        %v728 = vunpack.c.h.b16 %v451
        %v729 = vunpack.c.l.b16 %v452
        %v730 = vunpack.c.h.b16 %v452
        %v731 = vunpack.c.l.b16 %v453
        %v732 = vunpack.c.h.b16 %v453
        %v733 = vunpack.c.l.b16 %v454
        %v734 = vunpack.c.h.b16 %v454
        %v735 = vunpack.c.l.b16 %v455
        %v736 = vunpack.c.h.b16 %v455
        %v737 = vunpack.c.l.b16 %v456
        %v738 = vunpack.c.h.b16 %v456
        %v739 = vunpack.c.l.b16 %v457
        %v740 = vunpack.c.h.b16 %v457
        %v741 = vunpack.c.l.b16 %v458
        %v742 = vunpack.c.h.b16 %v458
        %v743 = vunpack.c.l.b16 %v459
        %v744 = vunpack.c.h.b16 %v459
        %v745 = vunpack.c.l.b16 %v460
        %v746 = vunpack.c.h.b16 %v460
        %v747 = vunpack.c.l.b16 %v461
        %v748 = vunpack.c.h.b16 %v461
        %v749 = vunpack.c.l.b16 %v462
        %v750 = vunpack.c.h.b16 %v462
        %v751 = vunpack.c.l.b16 %v463
        %v752 = vunpack.c.h.b16 %v463
        %v753 = vunpack.c.l.b16 %v464
        %v754 = vunpack.c.h.b16 %v464
        %v755 = vunpack.c.l.b16 %v465
        %v756 = vunpack.c.h.b16 %v465
        %v757 = vunpack.c.l.b16 %v466
        %v758 = vunpack.c.h.b16 %v466
        %v759 = vunpack.c.l.b16 %v467
        %v760 = vunpack.c.h.b16 %v467
        %v761 = vunpack.c.l.b16 %v468
        %v762 = vunpack.c.h.b16 %v468
        %v763 = vunpack.c.l.b16 %v469
        %v764 = vunpack.c.h.b16 %v469
        %v765 = vunpack.c.l.b16 %v470
        %v766 = vunpack.c.h.b16 %v470
        %v767 = vunpack.c.l.b16 %v471
        %v768 = vunpack.c.h.b16 %v471
        %v769 = vunpack.c.l.b16 %v472
        %v770 = vunpack.c.h.b16 %v472
        %v771 = vunpack.c.l.b16 %v473
        %v772 = vunpack.c.h.b16 %v473
        %v773 = vunpack.c.l.b16 %v474
        %v774 = vunpack.c.h.b16 %v474
        %v775 = vunpack.c.l.b16 %v475
        %v776 = vunpack.c.h.b16 %v475
        %v777 = vunpack.c.l.b16 %v476
        %v778 = vunpack.c.h.b16 %v476
        %v779 = vunpack.c.l.b16 %v477
        %v780 = vunpack.c.h.b16 %v477
        %v781 = vunpack.c.l.b16 %v478
        %v782 = vunpack.c.h.b16 %v478
        %v783 = vunpack.c.l.b16 %v479
        %v784 = vunpack.c.h.b16 %v479
        %v785 = vunpack.c.l.b16 %v480
        %v786 = vunpack.c.h.b16 %v480
        %v787 = vunpack.c.l.b16 %v481
        %v788 = vunpack.c.h.b16 %v481
        %v789 = vunpack.c.l.b16 %v482
        %v790 = vunpack.c.h.b16 %v482
        %v791 = vunpack.c.l.b16 %v483
        %v792 = vunpack.c.h.b16 %v483
        %v793 = vunpack.c.l.b16 %v484
        %v794 = vunpack.c.h.b16 %v484
        %v795 = vunpack.c.l.b16 %v485
        %v796 = vunpack.c.h.b16 %v485
        %v797 = vunpack.c.l.b16 %v486
        %v798 = vunpack.c.h.b16 %v486
        %v799 = vunpack.c.l.b16 %v487
        %v800 = vunpack.c.h.b16 %v487
        %v801 = vunpack.c.l.b16 %v488
        %v802 = vunpack.c.h.b16 %v488
        %v803 = vunpack.c.l.b16 %v489
        %v804 = vunpack.c.h.b16 %v489
        %v805 = vunpack.c.l.b16 %v490
        %v806 = vunpack.c.h.b16 %v490
        %v807 = vunpack.c.l.b16 %v491
        %v808 = vunpack.c.h.b16 %v491
        %v809 = vunpack.c.l.b16 %v492
        %v810 = vunpack.c.h.b16 %v492
        %v811 = vunpack.c.l.b16 %v493
        %v812 = vunpack.c.h.b16 %v493
        %v813 = vunpack.c.l.b16 %v494
        %v814 = vunpack.c.h.b16 %v494
        %v815 = vunpack.c.l.b16 %v495
        %v816 = vunpack.c.h.b16 %v495
        %v817 = vunpack.c.l.b16 %v496
        %v818 = vunpack.c.h.b16 %v496
        %v819 = vunpack.c.l.b16 %v497
        %v820 = vunpack.c.h.b16 %v497
        %v821 = vunpack.c.l.b16 %v498
        %v822 = vunpack.c.h.b16 %v498
        %v823 = vunpack.c.l.b16 %v499
        %v824 = vunpack.c.h.b16 %v499
        %v825 = vunpack.c.l.b16 %v500
        %v826 = vunpack.c.h.b16 %v500
        %v827 = vunpack.c.l.b16 %v501
        %v828 = vunpack.c.h.b16 %v501
        %v829 = vunpack.c.l.b16 %v502
        %v830 = vunpack.c.h.b16 %v502
        %v831 = vunpack.c.l.b16 %v503
        %v832 = vunpack.c.h.b16 %v503
        %v833 = vunpack.c.l.b16 %v504
        %v834 = vunpack.c.h.b16 %v504
        %v835 = vunpack.c.l.b16 %v505
        %v836 = vunpack.c.h.b16 %v505
        %v837 = vunpack.c.l.b16 %v506
        %v838 = vunpack.c.h.b16 %v506
        %v839 = vunpack.c.l.b16 %v507
        %v840 = vunpack.c.h.b16 %v507
        %v841 = vunpack.c.l.b16 %v508
        %v842 = vunpack.c.h.b16 %v508
        %v843 = vunpack.c.l.b16 %v509
        %v844 = vunpack.c.h.b16 %v509
        %v845 = vunpack.c.l.b16 %v510
        %v846 = vunpack.c.h.b16 %v510
        %v847 = vunpack.c.l.b16 %v511
        %v848 = vunpack.c.h.b16 %v511
        %v849 = vunpack.c.l.b16 %v512
        %v850 = vunpack.c.h.b16 %v512
        %v851 = vunpack.c.l.b16 %v513
        %v852 = vunpack.c.h.b16 %v513
        %v853 = vunpack.c.l.b16 %v514
        %v854 = vunpack.c.h.b16 %v514
        %v855 = vunpack.c.l.b16 %v515
        %v856 = vunpack.c.h.b16 %v515
        %v857 = vunpack.c.l.b16 %v516
        %v858 = vunpack.c.h.b16 %v516
        %v859 = vunpack.c.l.b16 %v517
        %v860 = vunpack.c.h.b16 %v517
        %v861 = vunpack.c.l.b16 %v518
        %v862 = vunpack.c.h.b16 %v518
        %v863 = vunpack.c.l.b16 %v519
        %v864 = vunpack.c.h.b16 %v519
        %v865 = vunpack.c.l.b16 %v520
        %v866 = vunpack.c.h.b16 %v520
        %v867 = vunpack.c.l.b16 %v521
        %v868 = vunpack.c.h.b16 %v521
        %v869 = vunpack.c.l.b16 %v522
        %v870 = vunpack.c.h.b16 %v522
        %v871 = vunpack.c.l.b16 %v523
        %v872 = vunpack.c.h.b16 %v523
        %v873 = vunpack.c.l.b16 %v524
        %v874 = vunpack.c.h.b16 %v524
        %v875 = vunpack.c.l.b16 %v525
        %v876 = vunpack.c.h.b16 %v525
        %v877 = vunpack.c.l.b16 %v526
        %v878 = vunpack.c.h.b16 %v526
        %v879 = vunpack.c.l.b16 %v527
        %v880 = vunpack.c.h.b16 %v527
        %v881 = vunpack.c.l.b16 %v528
        %v882 = vunpack.c.h.b16 %v528
        %v883 = vunpack.c.l.b16 %v529
        %v884 = vunpack.c.h.b16 %v529
        %v885 = vunpack.c.l.b16 %v530
        %v886 = vunpack.c.h.b16 %v530
        %v887 = vunpack.c.l.b16 %v531
        %v888 = vunpack.c.h.b16 %v531
        %v889 = vunpack.c.l.b16 %v532
        %v890 = vunpack.c.h.b16 %v532
        %v891 = vunpack.c.l.b16 %v533
        %v892 = vunpack.c.h.b16 %v533
        %v893 = vunpack.c.l.b16 %v534
        %v894 = vunpack.c.h.b16 %v534
        %v895 = vunpack.c.l.b16 %v535
        %v896 = vunpack.c.h.b16 %v535
        %v897 = vunpack.c.l.b16 %v536
        %v898 = vunpack.c.h.b16 %v536
        %v899 = vunpack.c.l.b16 %v537
        %v900 = vunpack.c.h.b16 %v537
        %v901 = vunpack.c.l.b16 %v538
        %v902 = vunpack.c.h.b16 %v538
        %v903 = vunpack.c.l.b16 %v539
        %v904 = vunpack.c.h.b16 %v539
        %v905 = vunpack.c.l.b16 %v540
        %v906 = vunpack.c.h.b16 %v540
        %v907 = vunpack.c.l.b16 %v541
        %v908 = vunpack.c.h.b16 %v541
        %v909 = vunpack.c.l.b16 %v542
        %v910 = vunpack.c.h.b16 %v542
        %v911 = vunpack.c.l.b16 %v543
        %v912 = vunpack.c.h.b16 %v543
        %v913 = vunpack.c.l.b16 %v544
        %v914 = vunpack.c.h.b16 %v544
        %v915 = vunpack.c.l.b16 %v545
        %v916 = vunpack.c.h.b16 %v545
        %v917 = vunpack.c.l.b16 %v546
        %v918 = vunpack.c.h.b16 %v546
        %v919 = vunpack.c.l.b16 %v547
        %v920 = vunpack.c.h.b16 %v547
        %v921 = vunpack.c.l.b16 %v548
        %v922 = vunpack.c.h.b16 %v548
        %v923 = vunpack.c.l.b16 %v549
        %v924 = vunpack.c.h.b16 %v549
        %v925 = vunpack.c.l.b16 %v550
        %v926 = vunpack.c.h.b16 %v550
        %v927 = vunpack.c.l.b16 %v551
        %v928 = vunpack.c.h.b16 %v551
        %v929 = vunpack.c.l.b16 %v552
        %v930 = vunpack.c.h.b16 %v552
        %v931 = vunpack.c.l.b16 %v553
        %v932 = vunpack.c.h.b16 %v553
        %v933 = vunpack.c.l.b16 %v554
        %v934 = vunpack.c.h.b16 %v554
        %v935 = vunpack.c.l.b16 %v555
        %v936 = vunpack.c.h.b16 %v555
        %v937 = vunpack.c.l.b16 %v556
        %v938 = vunpack.c.h.b16 %v556
        %v939 = vunpack.c.l.b16 %v557
        %v940 = vunpack.c.h.b16 %v557
        %v941 = vunpack.c.l.b16 %v558
        %v942 = vunpack.c.h.b16 %v558
        %v943 = vpack.c.b16 %v695, %v687
        %v944 = vpack.c.b16 %v696, %v688
        %v945 = vpack.c.b16 %v697, %v689
        %v946 = vpack.c.b16 %v698, %v690
        %v947 = vpack.c.b16 %v699, %v691
        %v948 = vpack.c.b16 %v700, %v692
        %v949 = vpack.c.b16 %v701, %v693
        %v950 = vpack.c.b16 %v702, %v694
        %v951 = vpack.c.b16 %v711, %v703
        %v952 = vpack.c.b16 %v712, %v704
        %v953 = vpack.c.b16 %v713, %v705
        %v954 = vpack.c.b16 %v714, %v706
        %v955 = vpack.c.b16 %v715, %v707
        %v956 = vpack.c.b16 %v716, %v708
        %v957 = vpack.c.b16 %v717, %v709
        %v958 = vpack.c.b16 %v718, %v710
        %v959 = vpack.c.b16 %v727, %v719
        %v960 = vpack.c.b16 %v728, %v720
        %v961 = vpack.c.b16 %v729, %v721
        %v962 = vpack.c.b16 %v730, %v722
        %v963 = vpack.c.b16 %v731, %v723
        %v964 = vpack.c.b16 %v732, %v724
        %v965 = vpack.c.b16 %v733, %v725
        %v966 = vpack.c.b16 %v734, %v726
        %v967 = vpack.c.b16 %v743, %v735
        %v968 = vpack.c.b16 %v744, %v736
        %v969 = vpack.c.b16 %v745, %v737
        %v970 = vpack.c.b16 %v746, %v738
        %v971 = vpack.c.b16 %v747, %v739
        %v972 = vpack.c.b16 %v748, %v740
        %v973 = vpack.c.b16 %v749, %v741
        %v974 = vpack.c.b16 %v750, %v742
        %v975 = vpack.c.b16 %v759, %v751
        %v976 = vpack.c.b16 %v760, %v752
        %v977 = vpack.c.b16 %v761, %v753
        %v978 = vpack.c.b16 %v762, %v754
        %v979 = vpack.c.b16 %v763, %v755
        %v980 = vpack.c.b16 %v764, %v756
        %v981 = vpack.c.b16 %v765, %v757
        %v982 = vpack.c.b16 %v766, %v758
        %v983 = vpack.c.b16 %v775, %v767
        %v984 = vpack.c.b16 %v776, %v768
        %v985 = vpack.c.b16 %v777, %v769
        %v986 = vpack.c.b16 %v778, %v770
        %v987 = vpack.c.b16 %v779, %v771
        %v988 = vpack.c.b16 %v780, %v772
        %v989 = vpack.c.b16 %v781, %v773
        %v990 = vpack.c.b16 %v782, %v774
        %v991 = vpack.c.b16 %v791, %v783
        %v992 = vpack.c.b16 %v792, %v784
        %v993 = vpack.c.b16 %v793, %v785
        %v994 = vpack.c.b16 %v794, %v786
        %v995 = vpack.c.b16 %v795, %v787
        %v996 = vpack.c.b16 %v796, %v788
        %v997 = vpack.c.b16 %v797, %v789
        %v998 = vpack.c.b16 %v798, %v790
        %v999 = vpack.c.b16 %v807, %v799
        %v1000 = vpack.c.b16 %v808, %v800
        %v1001 = vpack.c.b16 %v809, %v801
        %v1002 = vpack.c.b16 %v810, %v802
        %v1003 = vpack.c.b16 %v811, %v803
        %v1004 = vpack.c.b16 %v812, %v804
        %v1005 = vpack.c.b16 %v813, %v805
        %v1006 = vpack.c.b16 %v814, %v806
        %v1007 = vpack.c.b16 %v823, %v815
        %v1008 = vpack.c.b16 %v824, %v816
        %v1009 = vpack.c.b16 %v825, %v817
        %v1010 = vpack.c.b16 %v826, %v818
        %v1011 = vpack.c.b16 %v827, %v819
        %v1012 = vpack.c.b16 %v828, %v820
        %v1013 = vpack.c.b16 %v829, %v821
        %v1014 = vpack.c.b16 %v830, %v822
        %v1015 = vpack.c.b16 %v839, %v831
        %v1016 = vpack.c.b16 %v840, %v832
        %v1017 = vpack.c.b16 %v841, %v833
        %v1018 = vpack.c.b16 %v842, %v834
        %v1019 = vpack.c.b16 %v843, %v835
        %v1020 = vpack.c.b16 %v844, %v836
        %v1021 = vpack.c.b16 %v845, %v837
        %v1022 = vpack.c.b16 %v846, %v838
        %v1023 = vpack.c.b16 %v855, %v847
        %v1024 = vpack.c.b16 %v856, %v848
        %v1025 = vpack.c.b16 %v857, %v849
        %v1026 = vpack.c.b16 %v858, %v850
        %v1027 = vpack.c.b16 %v859, %v851
        %v1028 = vpack.c.b16 %v860, %v852
        %v1029 = vpack.c.b16 %v861, %v853
        %v1030 = vpack.c.b16 %v862, %v854
        %v1031 = vpack.c.b16 %v871, %v863
        %v1032 = vpack.c.b16 %v872, %v864
        %v1033 = vpack.c.b16 %v873, %v865
        %v1034 = vpack.c.b16 %v874, %v866
        %v1035 = vpack.c.b16 %v875, %v867
        %v1036 = vpack.c.b16 %v876, %v868
        %v1037 = vpack.c.b16 %v877, %v869
        %v1038 = vpack.c.b16 %v878, %v870
        %v1039 = vpack.c.b16 %v887, %v879
        %v1040 = vpack.c.b16 %v888, %v880
        %v1041 = vpack.c.b16 %v889, %v881
        %v1042 = vpack.c.b16 %v890, %v882
        %v1043 = vpack.c.b16 %v891, %v883
        %v1044 = vpack.c.b16 %v892, %v884
        %v1045 = vpack.c.b16 %v893, %v885
        %v1046 = vpack.c.b16 %v894, %v886
        %v1047 = vpack.c.b16 %v903, %v895
        %v1048 = vpack.c.b16 %v904, %v896
        %v1049 = vpack.c.b16 %v905, %v897
        %v1050 = vpack.c.b16 %v906, %v898
        %v1051 = vpack.c.b16 %v907, %v899
        %v1052 = vpack.c.b16 %v908, %v900
        %v1053 = vpack.c.b16 %v909, %v901
        %v1054 = vpack.c.b16 %v910, %v902
        %v1055 = vpack.c.b16 %v919, %v911
        %v1056 = vpack.c.b16 %v920, %v912
        %v1057 = vpack.c.b16 %v921, %v913
        %v1058 = vpack.c.b16 %v922, %v914
        %v1059 = vpack.c.b16 %v923, %v915
        %v1060 = vpack.c.b16 %v924, %v916
        %v1061 = vpack.c.b16 %v925, %v917
        %v1062 = vpack.c.b16 %v926, %v918
        %v1063 = vpack.c.b16 %v935, %v927
        %v1064 = vpack.c.b16 %v936, %v928
        %v1065 = vpack.c.b16 %v937, %v929
        %v1066 = vpack.c.b16 %v938, %v930
        %v1067 = vpack.c.b16 %v939, %v931
        %v1068 = vpack.c.b16 %v940, %v932
        %v1069 = vpack.c.b16 %v941, %v933
        %v1070 = vpack.c.b16 %v942, %v934
        %1199 = vmatprep.subr.bf16.mxu0 %v944
        %1200 = vmatpush1.bf16.msra.mxu0 %v943
        %1201 = vmatprep.subr.bf16.mxu0 %v952
        %1202 = vmatpush1.bf16.msra.mxu0 %v951
        %1203 = vmatprep.subr.bf16.mxu0 %v960
        %1204 = vmatpush1.bf16.msra.mxu0 %v959
        %1205 = vmatprep.subr.bf16.mxu0 %v968
        %1206 = vmatpush1.bf16.msra.mxu0 %v967
        %1207 = vmatprep.subr.bf16.mxu0 %v976
        %1208 = vmatpush1.bf16.msra.mxu0 %v975
        %1209 = vmatprep.subr.bf16.mxu0 %v984
        %1210 = vmatpush1.bf16.msra.mxu0 %v983
        %1211 = vmatprep.subr.bf16.mxu0 %v992
        %1212 = vmatpush1.bf16.msra.mxu0 %v991
        %1213 = vmatprep.subr.bf16.mxu0 %v1000
        %1214 = vmatpush1.bf16.msra.mxu0 %v999
        %1215 = vmatprep.subr.bf16.mxu0 %v1008
        %1216 = vmatpush1.bf16.msra.mxu0 %v1007
        %1217 = vmatprep.subr.bf16.mxu0 %v1016
        %1218 = vmatpush1.bf16.msra.mxu0 %v1015
        %1219 = vmatprep.subr.bf16.mxu0 %v1024
        %1220 = vmatpush1.bf16.msra.mxu0 %v1023
        %1221 = vmatprep.subr.bf16.mxu0 %v1032
        %1222 = vmatpush1.bf16.msra.mxu0 %v1031
        %1223 = vmatprep.subr.bf16.mxu0 %v1040
        %1224 = vmatpush1.bf16.msra.mxu0 %v1039
        %1225 = vmatprep.subr.bf16.mxu0 %v1048
        %1226 = vmatpush1.bf16.msra.mxu0 %v1047
        %1227 = vmatprep.subr.bf16.mxu0 %v1056
        %1228 = vmatpush1.bf16.msra.mxu0 %v1055
        %1229 = vmatprep.subr.bf16.mxu0 %v1064
        %1230 = vmatpush1.bf16.msra.mxu0 %v1063
        %1231 = vmatprep.mubr.bf16.mxu0 %v430
        %1232 = vmatmul.mubr.bf16.gmra.mrb[0].mxu0 %v429
        %v1233 = vpop.f32.mrb[0].mxu0
        %v1234 = vadd.f32 0.0, %v1233
        %v1235 = vpop.f32.mrb[0].mxu0
        %v1236 = vadd.f32 0.0, %v1235
        %v1237 = vpop.f32.mrb[0].mxu0
        %v1238 = vpop.f32.mrb[0].mxu0
        %1239 = vdwg.mxu0
        %1240 = vmatprep.subr.bf16.mxu0 %v946
        %1241 = vmatpush1.bf16.msra.mxu0 %v945
        %1242 = vmatprep.subr.bf16.mxu0 %v954
        %1243 = vmatpush1.bf16.msra.mxu0 %v953
        %1244 = vmatprep.subr.bf16.mxu0 %v962
        %1245 = vmatpush1.bf16.msra.mxu0 %v961
        %1246 = vmatprep.subr.bf16.mxu0 %v970
        %1247 = vmatpush1.bf16.msra.mxu0 %v969
        %1248 = vmatprep.subr.bf16.mxu0 %v978
        %1249 = vmatpush1.bf16.msra.mxu0 %v977
        %1250 = vmatprep.subr.bf16.mxu0 %v986
        %1251 = vmatpush1.bf16.msra.mxu0 %v985
        %1252 = vmatprep.subr.bf16.mxu0 %v994
        %1253 = vmatpush1.bf16.msra.mxu0 %v993
        %1254 = vmatprep.subr.bf16.mxu0 %v1002
        %1255 = vmatpush1.bf16.msra.mxu0 %v1001
        %1256 = vmatprep.subr.bf16.mxu0 %v1010
        %1257 = vmatpush1.bf16.msra.mxu0 %v1009
        %1258 = vmatprep.subr.bf16.mxu0 %v1018
        %1259 = vmatpush1.bf16.msra.mxu0 %v1017
        %1260 = vmatprep.subr.bf16.mxu0 %v1026
        %1261 = vmatpush1.bf16.msra.mxu0 %v1025
        %1262 = vmatprep.subr.bf16.mxu0 %v1034
        %1263 = vmatpush1.bf16.msra.mxu0 %v1033
        %1264 = vmatprep.subr.bf16.mxu0 %v1042
        %1265 = vmatpush1.bf16.msra.mxu0 %v1041
        %1266 = vmatprep.subr.bf16.mxu0 %v1050
        %1267 = vmatpush1.bf16.msra.mxu0 %v1049
        %1268 = vmatprep.subr.bf16.mxu0 %v1058
        %1269 = vmatpush1.bf16.msra.mxu0 %v1057
        %1270 = vmatprep.subr.bf16.mxu0 %v1066
        %1271 = vmatpush1.bf16.msra.mxu0 %v1065
        %1272 = vmatprep.mubr.bf16.mxu0 %v430
        %1273 = vmatmul.mubr.bf16.gmra.mrb[0].mxu0 %v429
        %v1274 = vpop.f32.mrb[0].mxu0
        %v1275 = vadd.f32 0.0, %v1274
        %v1276 = vpop.f32.mrb[0].mxu0
        %v1277 = vadd.f32 0.0, %v1276
        %v1278 = vpop.f32.mrb[0].mxu0
        %v1279 = vpop.f32.mrb[0].mxu0
        %1280 = vdwg.mxu0
        %1281 = vmatprep.subr.bf16.mxu0 %v948
        %1282 = vmatpush1.bf16.msra.mxu0 %v947
        %1283 = vmatprep.subr.bf16.mxu0 %v956
        %1284 = vmatpush1.bf16.msra.mxu0 %v955
        %1285 = vmatprep.subr.bf16.mxu0 %v964
        %1286 = vmatpush1.bf16.msra.mxu0 %v963
        %1287 = vmatprep.subr.bf16.mxu0 %v972
        %1288 = vmatpush1.bf16.msra.mxu0 %v971
        %1289 = vmatprep.subr.bf16.mxu0 %v980
        %1290 = vmatpush1.bf16.msra.mxu0 %v979
        %1291 = vmatprep.subr.bf16.mxu0 %v988
        %1292 = vmatpush1.bf16.msra.mxu0 %v987
        %1293 = vmatprep.subr.bf16.mxu0 %v996
        %1294 = vmatpush1.bf16.msra.mxu0 %v995
        %1295 = vmatprep.subr.bf16.mxu0 %v1004
        %1296 = vmatpush1.bf16.msra.mxu0 %v1003
        %1297 = vmatprep.subr.bf16.mxu0 %v1012
        %1298 = vmatpush1.bf16.msra.mxu0 %v1011
        %1299 = vmatprep.subr.bf16.mxu0 %v1020
        %1300 = vmatpush1.bf16.msra.mxu0 %v1019
        %1301 = vmatprep.subr.bf16.mxu0 %v1028
        %1302 = vmatpush1.bf16.msra.mxu0 %v1027
        %1303 = vmatprep.subr.bf16.mxu0 %v1036
        %1304 = vmatpush1.bf16.msra.mxu0 %v1035
        %1305 = vmatprep.subr.bf16.mxu0 %v1044
        %1306 = vmatpush1.bf16.msra.mxu0 %v1043
        %1307 = vmatprep.subr.bf16.mxu0 %v1052
        %1308 = vmatpush1.bf16.msra.mxu0 %v1051
        %1309 = vmatprep.subr.bf16.mxu0 %v1060
        %1310 = vmatpush1.bf16.msra.mxu0 %v1059
        %1311 = vmatprep.subr.bf16.mxu0 %v1068
        %1312 = vmatpush1.bf16.msra.mxu0 %v1067
        %1313 = vmatprep.mubr.bf16.mxu0 %v430
        %1314 = vmatmul.mubr.bf16.gmra.mrb[0].mxu0 %v429
        %v1315 = vpop.f32.mrb[0].mxu0
        %v1316 = vadd.f32 0.0, %v1315
        %v1317 = vpop.f32.mrb[0].mxu0
        %v1318 = vadd.f32 0.0, %v1317
        %v1319 = vpop.f32.mrb[0].mxu0
        %v1320 = vpop.f32.mrb[0].mxu0
        %1321 = vdwg.mxu0
        %1322 = vmatprep.subr.bf16.mxu0 %v950
        %1323 = vmatpush1.bf16.msra.mxu0 %v949
        %1324 = vmatprep.subr.bf16.mxu0 %v958
        %1325 = vmatpush1.bf16.msra.mxu0 %v957
        %1326 = vmatprep.subr.bf16.mxu0 %v966
        %1327 = vmatpush1.bf16.msra.mxu0 %v965
        %1328 = vmatprep.subr.bf16.mxu0 %v974
        %1329 = vmatpush1.bf16.msra.mxu0 %v973
        %1330 = vmatprep.subr.bf16.mxu0 %v982
        %1331 = vmatpush1.bf16.msra.mxu0 %v981
        %1332 = vmatprep.subr.bf16.mxu0 %v990
        %1333 = vmatpush1.bf16.msra.mxu0 %v989
        %1334 = vmatprep.subr.bf16.mxu0 %v998
        %1335 = vmatpush1.bf16.msra.mxu0 %v997
        %1336 = vmatprep.subr.bf16.mxu0 %v1006
        %1337 = vmatpush1.bf16.msra.mxu0 %v1005
        %1338 = vmatprep.subr.bf16.mxu0 %v1014
        %1339 = vmatpush1.bf16.msra.mxu0 %v1013
        %1340 = vmatprep.subr.bf16.mxu0 %v1022
        %1341 = vmatpush1.bf16.msra.mxu0 %v1021
        %1342 = vmatprep.subr.bf16.mxu0 %v1030
        %1343 = vmatpush1.bf16.msra.mxu0 %v1029
        %1344 = vmatprep.subr.bf16.mxu0 %v1038
        %1345 = vmatpush1.bf16.msra.mxu0 %v1037
        %1346 = vmatprep.subr.bf16.mxu0 %v1046
        %1347 = vmatpush1.bf16.msra.mxu0 %v1045
        %1348 = vmatprep.subr.bf16.mxu0 %v1054
        %1349 = vmatpush1.bf16.msra.mxu0 %v1053
        %1350 = vmatprep.subr.bf16.mxu0 %v1062
        %1351 = vmatpush1.bf16.msra.mxu0 %v1061
        %1352 = vmatprep.subr.bf16.mxu0 %v1070
        %1353 = vmatpush1.bf16.msra.mxu0 %v1069
        %1354 = vmatprep.mubr.bf16.mxu0 %v430
        %1355 = vmatmul.mubr.bf16.gmra.mrb[0].mxu0 %v429
        %v1356 = vpop.f32.mrb[0].mxu0
        %v1357 = vadd.f32 0.0, %v1356
        %v1358 = vpop.f32.mrb[0].mxu0
        %v1359 = vadd.f32 0.0, %v1358
        %v1360 = vpop.f32.mrb[0].mxu0
        %v1361 = vpop.f32.mrb[0].mxu0
        %1362 = vdwg.mxu0
        %v1363 = vld [vmem:[%s6] sm:$0xff]
        %1364 = vrot.lane.b32.xlu0 %v1234, 33
        %v1365 = vpop.permute.xlu0 %1364
        %1366 = vrot.lane.b32.xlu0 %v1236, 33
        %v1367 = vpop.permute.xlu0 %1366
        %1368 = vrot.lane.b32.xlu0 %v1275, 33
        %v1369 = vpop.permute.xlu0 %1368
        %1370 = vrot.lane.b32.xlu0 %v1277, 33
        %v1371 = vpop.permute.xlu0 %1370
        %1372 = vrot.lane.b32.xlu0 %v1316, 33
        %v1373 = vpop.permute.xlu0 %1372
        %1374 = vrot.lane.b32.xlu0 %v1318, 33
        %v1375 = vpop.permute.xlu0 %1374
        %1376 = vrot.lane.b32.xlu0 %v1357, 33
        %v1377 = vpop.permute.xlu0 %1376
        %1378 = vrot.lane.b32.xlu0 %v1359, 33
        %v1379 = vpop.permute.xlu0 %1378
        %v1380 = vlaneseq
        %v1381 = vand.u32 %v1380, 127
        %vm1382 = vcmp.lt.s32.totalorder %v1381, 33
        %v1383 = vsel %vm1382, %v1377, %v1379
        %v1384 = vsel %vm1382, %v1375, %v1377
        %v1385 = vsel %vm1382, %v1373, %v1375
        %v1386 = vsel %vm1382, %v1371, %v1373
        %v1387 = vsel %vm1382, %v1369, %v1371
        %v1388 = vsel %vm1382, %v1367, %v1369
        %v1389 = vsel %vm1382, %v1365, %v1367
        %v1390 = vsel %vm1382, %v1379, %v1365
        %v1395 = vcombine.high %v421, %v421
        %v1396 = vcombine.high %v422, %v422
        %v1397 = vcombine.high %v423, %v423
        %v1398 = vcombine.high %v424, %v424
        %1403 = vrot.lane.b32.xlu0 %v421, 33
        %v1404 = vpop.permute.xlu0 %1403
        %1405 = vrot.lane.b32.xlu0 %v1395, 33
        %v1406 = vpop.permute.xlu0 %1405
        %1407 = vrot.lane.b32.xlu0 %v422, 33
        %v1408 = vpop.permute.xlu0 %1407
        %1409 = vrot.lane.b32.xlu0 %v1396, 33
        %v1410 = vpop.permute.xlu0 %1409
        %1411 = vrot.lane.b32.xlu0 %v423, 33
        %v1412 = vpop.permute.xlu0 %1411
        %1413 = vrot.lane.b32.xlu0 %v1397, 33
        %v1414 = vpop.permute.xlu0 %1413
        %1415 = vrot.lane.b32.xlu0 %v424, 33
        %v1416 = vpop.permute.xlu0 %1415
        %1417 = vrot.lane.b32.xlu0 %v1398, 33
        %v1418 = vpop.permute.xlu0 %1417
        %v1419 = vsel %vm1382, %v1416, %v1418
        %v1420 = vsel %vm1382, %v1414, %v1416
        %v1421 = vsel %vm1382, %v1412, %v1414
        %v1422 = vsel %vm1382, %v1410, %v1412
        %v1423 = vsel %vm1382, %v1408, %v1410
        %v1424 = vsel %vm1382, %v1406, %v1408
        %v1425 = vsel %vm1382, %v1404, %v1406
        %v1426 = vsel %vm1382, %v1418, %v1404
        %v1428 = vlaneseq
        %v1429 = vshrl.u32 %v1428, 7
        %v1430 = vsub.s32 0, %v1429
        %v1431 = vrot.slane %v1363, %v1430
        %v1432 = vlaneseq
        %v1433 = vshrl.u32 %v1432, 7
        %v1434 = vsub.s32 1, %v1433
        %v1435 = vrot.slane %v1363, %v1434
        %v1436 = vlaneseq
        %v1437 = vshrl.u32 %v1436, 7
        %v1438 = vsub.s32 2, %v1437
        %v1439 = vrot.slane %v1363, %v1438
        %v1440 = vlaneseq
        %v1441 = vshrl.u32 %v1440, 7
        %v1442 = vsub.s32 3, %v1441
        %v1443 = vrot.slane %v1363, %v1442
        %v1444 = vlaneseq
        %v1445 = vshrl.u32 %v1444, 7
        %v1446 = vsub.s32 4, %v1445
        %v1447 = vrot.slane %v1363, %v1446
        %v1448 = vlaneseq
        %v1449 = vshrl.u32 %v1448, 7
        %v1450 = vsub.s32 5, %v1449
        %v1451 = vrot.slane %v1363, %v1450
        %v1452 = vlaneseq
        %v1453 = vshrl.u32 %v1452, 7
        %v1454 = vsub.s32 6, %v1453
        %v1455 = vrot.slane %v1363, %v1454
        %v1456 = vlaneseq
        %v1457 = vshrl.u32 %v1456, 7
        %v1458 = vsub.s32 7, %v1457
        %v1459 = vrot.slane %v1363, %v1458
        %v1468 = vmul.f32 %v1390, %v1431
        %v1469 = vmul.f32 %v1389, %v1435
        %v1470 = vmul.f32 %v1388, %v1439
        %v1471 = vmul.f32 %v1387, %v1443
        %v1472 = vmul.f32 %v1386, %v1447
        %v1473 = vmul.f32 %v1385, %v1451
        %v1474 = vmul.f32 %v1384, %v1455
        %v1475 = vmul.f32 %v1383, %v1459
        %v1476 = vld [vmem:[%s4] sm:$0xf]
        %1478 = vset.pattern.permute.xlu0 0
        %1479 = vperm.xlu0 %1478, %v1476
        %v1480 = vpop.permute.xlu0 %1479
        %v1482 = vmul.f32 %v1468, %v1480
        %v1483 = vmul.f32 %v1469, %v1480
        %v1484 = vmul.f32 %v1470, %v1480
        %v1485 = vmul.f32 %v1471, %v1480
        %v1486 = vmul.f32 %v1472, %v1480
        %v1487 = vmul.f32 %v1473, %v1480
        %v1488 = vmul.f32 %v1474, %v1480
        %v1489 = vmul.f32 %v1475, %v1480
        %v1490 = vadd.f32 %v1482, 0.0
        %v1491 = vadd.f32 %v1483, 0.0
        %v1492 = vadd.f32 %v1484, 0.0
        %v1493 = vadd.f32 %v1485, 0.0
        %v1494 = vadd.f32 %v1486, 0.0
        %v1495 = vadd.f32 %v1487, 0.0
        %v1496 = vadd.f32 %v1488, 0.0
        %v1497 = vadd.f32 %v1489, 0.0
        %v1498 = vmul.f32 %v1426, %v1431
        %v1499 = vmul.f32 %v1425, %v1435
        %v1500 = vmul.f32 %v1424, %v1439
        %v1501 = vmul.f32 %v1423, %v1443
        %v1502 = vmul.f32 %v1422, %v1447
        %v1503 = vmul.f32 %v1421, %v1451
        %v1504 = vmul.f32 %v1420, %v1455
        %v1505 = vmul.f32 %v1419, %v1459
        %v1506 = vld [vmem:[%s5] sm:$0xf]
        %1508 = vset.pattern.permute.xlu0 0
        %1509 = vperm.xlu0 %1508, %v1506
        %v1510 = vpop.permute.xlu0 %1509
        %v1512 = vmul.f32 %v1498, %v1510
        %v1513 = vmul.f32 %v1499, %v1510
        %v1514 = vmul.f32 %v1500, %v1510
        %v1515 = vmul.f32 %v1501, %v1510
        %v1516 = vmul.f32 %v1502, %v1510
        %v1517 = vmul.f32 %v1503, %v1510
        %v1518 = vmul.f32 %v1504, %v1510
        %v1519 = vmul.f32 %v1505, %v1510
        %v1520 = vadd.f32 %v1512, 0.0
        %v1521 = vadd.f32 %v1513, 0.0
        %v1522 = vadd.f32 %v1514, 0.0
        %v1523 = vadd.f32 %v1515, 0.0
        %v1524 = vadd.f32 %v1516, 0.0
        %v1525 = vadd.f32 %v1517, 0.0
        %v1526 = vadd.f32 %v1518, 0.0
        %v1527 = vadd.f32 %v1519, 0.0
        %s1528 = scalar_lea.vmem %s6, 8
        %v1529 = vld [vmem:[%s1528] sm:$0xff]
        %1530 = vrot.lane.b32.xlu0 %v1234, 32
        %v1531 = vpop.permute.xlu0 %1530
        %1532 = vrot.lane.b32.xlu0 %v1236, 32
        %v1533 = vpop.permute.xlu0 %1532
        %1534 = vrot.lane.b32.xlu0 %v1275, 32
        %v1535 = vpop.permute.xlu0 %1534
        %1536 = vrot.lane.b32.xlu0 %v1277, 32
        %v1537 = vpop.permute.xlu0 %1536
        %1538 = vrot.lane.b32.xlu0 %v1316, 32
        %v1539 = vpop.permute.xlu0 %1538
        %1540 = vrot.lane.b32.xlu0 %v1318, 32
        %v1541 = vpop.permute.xlu0 %1540
        %1542 = vrot.lane.b32.xlu0 %v1357, 32
        %v1543 = vpop.permute.xlu0 %1542
        %1544 = vrot.lane.b32.xlu0 %v1359, 32
        %v1545 = vpop.permute.xlu0 %1544
        %vm1546 = vcmp.lt.s32.totalorder %v1381, 32
        %v1547 = vsel %vm1546, %v1543, %v1545
        %v1548 = vsel %vm1546, %v1541, %v1543
        %v1549 = vsel %vm1546, %v1539, %v1541
        %v1550 = vsel %vm1546, %v1537, %v1539
        %v1551 = vsel %vm1546, %v1535, %v1537
        %v1552 = vsel %vm1546, %v1533, %v1535
        %v1553 = vsel %vm1546, %v1531, %v1533
        %v1554 = vsel %vm1546, %v1545, %v1531
        %1555 = vrot.lane.b32.xlu0 %v421, 32
        %v1556 = vpop.permute.xlu0 %1555
        %1557 = vrot.lane.b32.xlu0 %v1395, 32
        %v1558 = vpop.permute.xlu0 %1557
        %1559 = vrot.lane.b32.xlu0 %v422, 32
        %v1560 = vpop.permute.xlu0 %1559
        %1561 = vrot.lane.b32.xlu0 %v1396, 32
        %v1562 = vpop.permute.xlu0 %1561
        %1563 = vrot.lane.b32.xlu0 %v423, 32
        %v1564 = vpop.permute.xlu0 %1563
        %1565 = vrot.lane.b32.xlu0 %v1397, 32
        %v1566 = vpop.permute.xlu0 %1565
        %1567 = vrot.lane.b32.xlu0 %v424, 32
        %v1568 = vpop.permute.xlu0 %1567
        %1569 = vrot.lane.b32.xlu0 %v1398, 32
        %v1570 = vpop.permute.xlu0 %1569
        %v1571 = vsel %vm1546, %v1568, %v1570
        %v1572 = vsel %vm1546, %v1566, %v1568
        %v1573 = vsel %vm1546, %v1564, %v1566
        %v1574 = vsel %vm1546, %v1562, %v1564
        %v1575 = vsel %vm1546, %v1560, %v1562
        %v1576 = vsel %vm1546, %v1558, %v1560
        %v1577 = vsel %vm1546, %v1556, %v1558
        %v1578 = vsel %vm1546, %v1570, %v1556
        %v1580 = vlaneseq
        %v1581 = vshrl.u32 %v1580, 7
        %v1582 = vsub.s32 0, %v1581
        %v1583 = vrot.slane %v1529, %v1582
        %v1584 = vlaneseq
        %v1585 = vshrl.u32 %v1584, 7
        %v1586 = vsub.s32 1, %v1585
        %v1587 = vrot.slane %v1529, %v1586
        %v1588 = vlaneseq
        %v1589 = vshrl.u32 %v1588, 7
        %v1590 = vsub.s32 2, %v1589
        %v1591 = vrot.slane %v1529, %v1590
        %v1592 = vlaneseq
        %v1593 = vshrl.u32 %v1592, 7
        %v1594 = vsub.s32 3, %v1593
        %v1595 = vrot.slane %v1529, %v1594
        %v1596 = vlaneseq
        %v1597 = vshrl.u32 %v1596, 7
        %v1598 = vsub.s32 4, %v1597
        %v1599 = vrot.slane %v1529, %v1598
        %v1600 = vlaneseq
        %v1601 = vshrl.u32 %v1600, 7
        %v1602 = vsub.s32 5, %v1601
        %v1603 = vrot.slane %v1529, %v1602
        %v1604 = vlaneseq
        %v1605 = vshrl.u32 %v1604, 7
        %v1606 = vsub.s32 6, %v1605
        %v1607 = vrot.slane %v1529, %v1606
        %v1608 = vlaneseq
        %v1609 = vshrl.u32 %v1608, 7
        %v1610 = vsub.s32 7, %v1609
        %v1611 = vrot.slane %v1529, %v1610
        %v1620 = vmul.f32 %v1554, %v1583
        %v1621 = vmul.f32 %v1553, %v1587
        %v1622 = vmul.f32 %v1552, %v1591
        %v1623 = vmul.f32 %v1551, %v1595
        %v1624 = vmul.f32 %v1550, %v1599
        %v1625 = vmul.f32 %v1549, %v1603
        %v1626 = vmul.f32 %v1548, %v1607
        %v1627 = vmul.f32 %v1547, %v1611
        %s1628 = scalar_lea.vmem %s4, 4
        %v1629 = vld [vmem:[%s1628] sm:$0xf]
        %1631 = vset.pattern.permute.xlu0 0
        %1632 = vperm.xlu0 %1631, %v1629
        %v1633 = vpop.permute.xlu0 %1632
        %v1635 = vmul.f32 %v1620, %v1633
        %v1636 = vmul.f32 %v1621, %v1633
        %v1637 = vmul.f32 %v1622, %v1633
        %v1638 = vmul.f32 %v1623, %v1633
        %v1639 = vmul.f32 %v1624, %v1633
        %v1640 = vmul.f32 %v1625, %v1633
        %v1641 = vmul.f32 %v1626, %v1633
        %v1642 = vmul.f32 %v1627, %v1633
        %v1643 = vadd.f32 %v1490, %v1635
        %v1644 = vadd.f32 %v1491, %v1636
        %v1645 = vadd.f32 %v1492, %v1637
        %v1646 = vadd.f32 %v1493, %v1638
        %v1647 = vadd.f32 %v1494, %v1639
        %v1648 = vadd.f32 %v1495, %v1640
        %v1649 = vadd.f32 %v1496, %v1641
        %v1650 = vadd.f32 %v1497, %v1642
        %v1651 = vmul.f32 %v1578, %v1583
        %v1652 = vmul.f32 %v1577, %v1587
        %v1653 = vmul.f32 %v1576, %v1591
        %v1654 = vmul.f32 %v1575, %v1595
        %v1655 = vmul.f32 %v1574, %v1599
        %v1656 = vmul.f32 %v1573, %v1603
        %v1657 = vmul.f32 %v1572, %v1607
        %v1658 = vmul.f32 %v1571, %v1611
        %s1659 = scalar_lea.vmem %s5, 4
        %v1660 = vld [vmem:[%s1659] sm:$0xf]
        %1662 = vset.pattern.permute.xlu0 0
        %1663 = vperm.xlu0 %1662, %v1660
        %v1664 = vpop.permute.xlu0 %1663
        %v1666 = vmul.f32 %v1651, %v1664
        %v1667 = vmul.f32 %v1652, %v1664
        %v1668 = vmul.f32 %v1653, %v1664
        %v1669 = vmul.f32 %v1654, %v1664
        %v1670 = vmul.f32 %v1655, %v1664
        %v1671 = vmul.f32 %v1656, %v1664
        %v1672 = vmul.f32 %v1657, %v1664
        %v1673 = vmul.f32 %v1658, %v1664
        %v1674 = vadd.f32 %v1520, %v1666
        %v1675 = vadd.f32 %v1521, %v1667
        %v1676 = vadd.f32 %v1522, %v1668
        %v1677 = vadd.f32 %v1523, %v1669
        %v1678 = vadd.f32 %v1524, %v1670
        %v1679 = vadd.f32 %v1525, %v1671
        %v1680 = vadd.f32 %v1526, %v1672
        %v1681 = vadd.f32 %v1527, %v1673
        %s1682 = scalar_lea.vmem %s6, 16
        %v1683 = vld [vmem:[%s1682] sm:$0xff]
        %1684 = vrot.lane.b32.xlu0 %v1234, 31
        %v1685 = vpop.permute.xlu0 %1684
        %1686 = vrot.lane.b32.xlu0 %v1236, 31
        %v1687 = vpop.permute.xlu0 %1686
        %1688 = vrot.lane.b32.xlu0 %v1275, 31
        %v1689 = vpop.permute.xlu0 %1688
        %1690 = vrot.lane.b32.xlu0 %v1277, 31
        %v1691 = vpop.permute.xlu0 %1690
        %1692 = vrot.lane.b32.xlu0 %v1316, 31
        %v1693 = vpop.permute.xlu0 %1692
        %1694 = vrot.lane.b32.xlu0 %v1318, 31
        %v1695 = vpop.permute.xlu0 %1694
        %1696 = vrot.lane.b32.xlu0 %v1357, 31
        %v1697 = vpop.permute.xlu0 %1696
        %1698 = vrot.lane.b32.xlu0 %v1359, 31
        %v1699 = vpop.permute.xlu0 %1698
        %vm1700 = vcmp.lt.s32.totalorder %v1381, 31
        %v1701 = vsel %vm1700, %v1697, %v1699
        %v1702 = vsel %vm1700, %v1695, %v1697
        %v1703 = vsel %vm1700, %v1693, %v1695
        %v1704 = vsel %vm1700, %v1691, %v1693
        %v1705 = vsel %vm1700, %v1689, %v1691
        %v1706 = vsel %vm1700, %v1687, %v1689
        %v1707 = vsel %vm1700, %v1685, %v1687
        %v1708 = vsel %vm1700, %v1699, %v1685
        %1709 = vrot.lane.b32.xlu0 %v421, 31
        %v1710 = vpop.permute.xlu0 %1709
        %1711 = vrot.lane.b32.xlu0 %v1395, 31
        %v1712 = vpop.permute.xlu0 %1711
        %1713 = vrot.lane.b32.xlu0 %v422, 31
        %v1714 = vpop.permute.xlu0 %1713
        %1715 = vrot.lane.b32.xlu0 %v1396, 31
        %v1716 = vpop.permute.xlu0 %1715
        %1717 = vrot.lane.b32.xlu0 %v423, 31
        %v1718 = vpop.permute.xlu0 %1717
        %1719 = vrot.lane.b32.xlu0 %v1397, 31
        %v1720 = vpop.permute.xlu0 %1719
        %1721 = vrot.lane.b32.xlu0 %v424, 31
        %v1722 = vpop.permute.xlu0 %1721
        %1723 = vrot.lane.b32.xlu0 %v1398, 31
        %v1724 = vpop.permute.xlu0 %1723
        %v1725 = vsel %vm1700, %v1722, %v1724
        %v1726 = vsel %vm1700, %v1720, %v1722
        %v1727 = vsel %vm1700, %v1718, %v1720
        %v1728 = vsel %vm1700, %v1716, %v1718
        %v1729 = vsel %vm1700, %v1714, %v1716
        %v1730 = vsel %vm1700, %v1712, %v1714
        %v1731 = vsel %vm1700, %v1710, %v1712
        %v1732 = vsel %vm1700, %v1724, %v1710
        %v1734 = vlaneseq
        %v1735 = vshrl.u32 %v1734, 7
        %v1736 = vsub.s32 0, %v1735
        %v1737 = vrot.slane %v1683, %v1736
        %v1738 = vlaneseq
        %v1739 = vshrl.u32 %v1738, 7
        %v1740 = vsub.s32 1, %v1739
        %v1741 = vrot.slane %v1683, %v1740
        %v1742 = vlaneseq
        %v1743 = vshrl.u32 %v1742, 7
        %v1744 = vsub.s32 2, %v1743
        %v1745 = vrot.slane %v1683, %v1744
        %v1746 = vlaneseq
        %v1747 = vshrl.u32 %v1746, 7
        %v1748 = vsub.s32 3, %v1747
        %v1749 = vrot.slane %v1683, %v1748
        %v1750 = vlaneseq
        %v1751 = vshrl.u32 %v1750, 7
        %v1752 = vsub.s32 4, %v1751
        %v1753 = vrot.slane %v1683, %v1752
        %v1754 = vlaneseq
        %v1755 = vshrl.u32 %v1754, 7
        %v1756 = vsub.s32 5, %v1755
        %v1757 = vrot.slane %v1683, %v1756
        %v1758 = vlaneseq
        %v1759 = vshrl.u32 %v1758, 7
        %v1760 = vsub.s32 6, %v1759
        %v1761 = vrot.slane %v1683, %v1760
        %v1762 = vlaneseq
        %v1763 = vshrl.u32 %v1762, 7
        %v1764 = vsub.s32 7, %v1763
        %v1765 = vrot.slane %v1683, %v1764
        %v1774 = vmul.f32 %v1708, %v1737
        %v1775 = vmul.f32 %v1707, %v1741
        %v1776 = vmul.f32 %v1706, %v1745
        %v1777 = vmul.f32 %v1705, %v1749
        %v1778 = vmul.f32 %v1704, %v1753
        %v1779 = vmul.f32 %v1703, %v1757
        %v1780 = vmul.f32 %v1702, %v1761
        %v1781 = vmul.f32 %v1701, %v1765
        %s1782 = scalar_lea.vmem %s4, 8
        %v1783 = vld [vmem:[%s1782] sm:$0xf]
        %1785 = vset.pattern.permute.xlu0 0
        %1786 = vperm.xlu0 %1785, %v1783
        %v1787 = vpop.permute.xlu0 %1786
        %v1789 = vmul.f32 %v1774, %v1787
        %v1790 = vmul.f32 %v1775, %v1787
        %v1791 = vmul.f32 %v1776, %v1787
        %v1792 = vmul.f32 %v1777, %v1787
        %v1793 = vmul.f32 %v1778, %v1787
        %v1794 = vmul.f32 %v1779, %v1787
        %v1795 = vmul.f32 %v1780, %v1787
        %v1796 = vmul.f32 %v1781, %v1787
        %v1797 = vadd.f32 %v1643, %v1789
        %v1798 = vadd.f32 %v1644, %v1790
        %v1799 = vadd.f32 %v1645, %v1791
        %v1800 = vadd.f32 %v1646, %v1792
        %v1801 = vadd.f32 %v1647, %v1793
        %v1802 = vadd.f32 %v1648, %v1794
        %v1803 = vadd.f32 %v1649, %v1795
        %v1804 = vadd.f32 %v1650, %v1796
        %v1805 = vmul.f32 %v1732, %v1737
        %v1806 = vmul.f32 %v1731, %v1741
        %v1807 = vmul.f32 %v1730, %v1745
        %v1808 = vmul.f32 %v1729, %v1749
        %v1809 = vmul.f32 %v1728, %v1753
        %v1810 = vmul.f32 %v1727, %v1757
        %v1811 = vmul.f32 %v1726, %v1761
        %v1812 = vmul.f32 %v1725, %v1765
        %s1813 = scalar_lea.vmem %s5, 8
        %v1814 = vld [vmem:[%s1813] sm:$0xf]
        %1816 = vset.pattern.permute.xlu0 0
        %1817 = vperm.xlu0 %1816, %v1814
        %v1818 = vpop.permute.xlu0 %1817
        %v1820 = vmul.f32 %v1805, %v1818
        %v1821 = vmul.f32 %v1806, %v1818
        %v1822 = vmul.f32 %v1807, %v1818
        %v1823 = vmul.f32 %v1808, %v1818
        %v1824 = vmul.f32 %v1809, %v1818
        %v1825 = vmul.f32 %v1810, %v1818
        %v1826 = vmul.f32 %v1811, %v1818
        %v1827 = vmul.f32 %v1812, %v1818
        %v1828 = vadd.f32 %v1674, %v1820
        %v1829 = vadd.f32 %v1675, %v1821
        %v1830 = vadd.f32 %v1676, %v1822
        %v1831 = vadd.f32 %v1677, %v1823
        %v1832 = vadd.f32 %v1678, %v1824
        %v1833 = vadd.f32 %v1679, %v1825
        %v1834 = vadd.f32 %v1680, %v1826
        %v1835 = vadd.f32 %v1681, %v1827
        %s1836 = scalar_lea.vmem %s6, 24
        %v1837 = vld [vmem:[%s1836] sm:$0xff]
        %1838 = vrot.lane.b32.xlu0 %v1234, 1
        %v1839 = vpop.permute.xlu0 %1838
        %1840 = vrot.lane.b32.xlu0 %v1236, 1
        %v1841 = vpop.permute.xlu0 %1840
        %1842 = vrot.lane.b32.xlu0 %v1275, 1
        %v1843 = vpop.permute.xlu0 %1842
        %1844 = vrot.lane.b32.xlu0 %v1277, 1
        %v1845 = vpop.permute.xlu0 %1844
        %1846 = vrot.lane.b32.xlu0 %v1316, 1
        %v1847 = vpop.permute.xlu0 %1846
        %1848 = vrot.lane.b32.xlu0 %v1318, 1
        %v1849 = vpop.permute.xlu0 %1848
        %1850 = vrot.lane.b32.xlu0 %v1357, 1
        %v1851 = vpop.permute.xlu0 %1850
        %1852 = vrot.lane.b32.xlu0 %v1359, 1
        %v1853 = vpop.permute.xlu0 %1852
        %vm1854 = vcmp.lt.s32.totalorder %v1381, 1
        %v1855 = vsel %vm1854, %v1851, %v1853
        %v1856 = vsel %vm1854, %v1849, %v1851
        %v1857 = vsel %vm1854, %v1847, %v1849
        %v1858 = vsel %vm1854, %v1845, %v1847
        %v1859 = vsel %vm1854, %v1843, %v1845
        %v1860 = vsel %vm1854, %v1841, %v1843
        %v1861 = vsel %vm1854, %v1839, %v1841
        %v1862 = vsel %vm1854, %v1853, %v1839
        %1863 = vrot.lane.b32.xlu0 %v421, 1
        %v1864 = vpop.permute.xlu0 %1863
        %1865 = vrot.lane.b32.xlu0 %v1395, 1
        %v1866 = vpop.permute.xlu0 %1865
        %1867 = vrot.lane.b32.xlu0 %v422, 1
        %v1868 = vpop.permute.xlu0 %1867
        %1869 = vrot.lane.b32.xlu0 %v1396, 1
        %v1870 = vpop.permute.xlu0 %1869
        %1871 = vrot.lane.b32.xlu0 %v423, 1
        %v1872 = vpop.permute.xlu0 %1871
        %1873 = vrot.lane.b32.xlu0 %v1397, 1
        %v1874 = vpop.permute.xlu0 %1873
        %1875 = vrot.lane.b32.xlu0 %v424, 1
        %v1876 = vpop.permute.xlu0 %1875
        %1877 = vrot.lane.b32.xlu0 %v1398, 1
        %v1878 = vpop.permute.xlu0 %1877
        %v1879 = vsel %vm1854, %v1876, %v1878
        %v1880 = vsel %vm1854, %v1874, %v1876
        %v1881 = vsel %vm1854, %v1872, %v1874
        %v1882 = vsel %vm1854, %v1870, %v1872
        %v1883 = vsel %vm1854, %v1868, %v1870
        %v1884 = vsel %vm1854, %v1866, %v1868
        %v1885 = vsel %vm1854, %v1864, %v1866
        %v1886 = vsel %vm1854, %v1878, %v1864
        %v1888 = vlaneseq
        %v1889 = vshrl.u32 %v1888, 7
        %v1890 = vsub.s32 0, %v1889
        %v1891 = vrot.slane %v1837, %v1890
        %v1892 = vlaneseq
        %v1893 = vshrl.u32 %v1892, 7
        %v1894 = vsub.s32 1, %v1893
        %v1895 = vrot.slane %v1837, %v1894
        %v1896 = vlaneseq
        %v1897 = vshrl.u32 %v1896, 7
        %v1898 = vsub.s32 2, %v1897
        %v1899 = vrot.slane %v1837, %v1898
        %v1900 = vlaneseq
        %v1901 = vshrl.u32 %v1900, 7
        %v1902 = vsub.s32 3, %v1901
        %v1903 = vrot.slane %v1837, %v1902
        %v1904 = vlaneseq
        %v1905 = vshrl.u32 %v1904, 7
        %v1906 = vsub.s32 4, %v1905
        %v1907 = vrot.slane %v1837, %v1906
        %v1908 = vlaneseq
        %v1909 = vshrl.u32 %v1908, 7
        %v1910 = vsub.s32 5, %v1909
        %v1911 = vrot.slane %v1837, %v1910
        %v1912 = vlaneseq
        %v1913 = vshrl.u32 %v1912, 7
        %v1914 = vsub.s32 6, %v1913
        %v1915 = vrot.slane %v1837, %v1914
        %v1916 = vlaneseq
        %v1917 = vshrl.u32 %v1916, 7
        %v1918 = vsub.s32 7, %v1917
        %v1919 = vrot.slane %v1837, %v1918
        %v1928 = vmul.f32 %v1862, %v1891
        %v1929 = vmul.f32 %v1861, %v1895
        %v1930 = vmul.f32 %v1860, %v1899
        %v1931 = vmul.f32 %v1859, %v1903
        %v1932 = vmul.f32 %v1858, %v1907
        %v1933 = vmul.f32 %v1857, %v1911
        %v1934 = vmul.f32 %v1856, %v1915
        %v1935 = vmul.f32 %v1855, %v1919
        %s1936 = scalar_lea.vmem %s4, 12
        %v1937 = vld [vmem:[%s1936] sm:$0xf]
        %1939 = vset.pattern.permute.xlu0 0
        %1940 = vperm.xlu0 %1939, %v1937
        %v1941 = vpop.permute.xlu0 %1940
        %v1943 = vmul.f32 %v1928, %v1941
        %v1944 = vmul.f32 %v1929, %v1941
        %v1945 = vmul.f32 %v1930, %v1941
        %v1946 = vmul.f32 %v1931, %v1941
        %v1947 = vmul.f32 %v1932, %v1941
        %v1948 = vmul.f32 %v1933, %v1941
        %v1949 = vmul.f32 %v1934, %v1941
        %v1950 = vmul.f32 %v1935, %v1941
        %v1951 = vadd.f32 %v1797, %v1943
        %v1952 = vadd.f32 %v1798, %v1944
        %v1953 = vadd.f32 %v1799, %v1945
        %v1954 = vadd.f32 %v1800, %v1946
        %v1955 = vadd.f32 %v1801, %v1947
        %v1956 = vadd.f32 %v1802, %v1948
        %v1957 = vadd.f32 %v1803, %v1949
        %v1958 = vadd.f32 %v1804, %v1950
        %v1959 = vmul.f32 %v1886, %v1891
        %v1960 = vmul.f32 %v1885, %v1895
        %v1961 = vmul.f32 %v1884, %v1899
        %v1962 = vmul.f32 %v1883, %v1903
        %v1963 = vmul.f32 %v1882, %v1907
        %v1964 = vmul.f32 %v1881, %v1911
        %v1965 = vmul.f32 %v1880, %v1915
        %v1966 = vmul.f32 %v1879, %v1919
        %s1967 = scalar_lea.vmem %s5, 12
        %v1968 = vld [vmem:[%s1967] sm:$0xf]
        %1970 = vset.pattern.permute.xlu0 0
        %1971 = vperm.xlu0 %1970, %v1968
        %v1972 = vpop.permute.xlu0 %1971
        %v1974 = vmul.f32 %v1959, %v1972
        %v1975 = vmul.f32 %v1960, %v1972
        %v1976 = vmul.f32 %v1961, %v1972
        %v1977 = vmul.f32 %v1962, %v1972
        %v1978 = vmul.f32 %v1963, %v1972
        %v1979 = vmul.f32 %v1964, %v1972
        %v1980 = vmul.f32 %v1965, %v1972
        %v1981 = vmul.f32 %v1966, %v1972
        %v1982 = vadd.f32 %v1828, %v1974
        %v1983 = vadd.f32 %v1829, %v1975
        %v1984 = vadd.f32 %v1830, %v1976
        %v1985 = vadd.f32 %v1831, %v1977
        %v1986 = vadd.f32 %v1832, %v1978
        %v1987 = vadd.f32 %v1833, %v1979
        %v1988 = vadd.f32 %v1834, %v1980
        %v1989 = vadd.f32 %v1835, %v1981
        %s1990 = scalar_lea.vmem %s6, 32
        %v1991 = vld [vmem:[%s1990] sm:$0xff]
        %v1993 = vlaneseq
        %v1994 = vshrl.u32 %v1993, 7
        %v1995 = vsub.s32 0, %v1994
        %v1996 = vrot.slane %v1991, %v1995
        %v1997 = vlaneseq
        %v1998 = vshrl.u32 %v1997, 7
        %v1999 = vsub.s32 1, %v1998
        %v2000 = vrot.slane %v1991, %v1999
        %v2001 = vlaneseq
        %v2002 = vshrl.u32 %v2001, 7
        %v2003 = vsub.s32 2, %v2002
        %v2004 = vrot.slane %v1991, %v2003
        %v2005 = vlaneseq
        %v2006 = vshrl.u32 %v2005, 7
        %v2007 = vsub.s32 3, %v2006
        %v2008 = vrot.slane %v1991, %v2007
        %v2009 = vlaneseq
        %v2010 = vshrl.u32 %v2009, 7
        %v2011 = vsub.s32 4, %v2010
        %v2012 = vrot.slane %v1991, %v2011
        %v2013 = vlaneseq
        %v2014 = vshrl.u32 %v2013, 7
        %v2015 = vsub.s32 5, %v2014
        %v2016 = vrot.slane %v1991, %v2015
        %v2017 = vlaneseq
        %v2018 = vshrl.u32 %v2017, 7
        %v2019 = vsub.s32 6, %v2018
        %v2020 = vrot.slane %v1991, %v2019
        %v2021 = vlaneseq
        %v2022 = vshrl.u32 %v2021, 7
        %v2023 = vsub.s32 7, %v2022
        %v2024 = vrot.slane %v1991, %v2023
        %v2033 = vmul.f32 %v1234, %v1996
        %v2034 = vmul.f32 %v1236, %v2000
        %v2035 = vmul.f32 %v1275, %v2004
        %v2036 = vmul.f32 %v1277, %v2008
        %v2037 = vmul.f32 %v1316, %v2012
        %v2038 = vmul.f32 %v1318, %v2016
        %v2039 = vmul.f32 %v1357, %v2020
        %v2040 = vmul.f32 %v1359, %v2024
        %s2041 = scalar_lea.vmem %s4, 16
        %v2042 = vld [vmem:[%s2041] sm:$0xf]
        %2044 = vset.pattern.permute.xlu0 0
        %2045 = vperm.xlu0 %2044, %v2042
        %v2046 = vpop.permute.xlu0 %2045
        %v2048 = vmul.f32 %v2033, %v2046
        %v2049 = vmul.f32 %v2034, %v2046
        %v2050 = vmul.f32 %v2035, %v2046
        %v2051 = vmul.f32 %v2036, %v2046
        %v2052 = vmul.f32 %v2037, %v2046
        %v2053 = vmul.f32 %v2038, %v2046
        %v2054 = vmul.f32 %v2039, %v2046
        %v2055 = vmul.f32 %v2040, %v2046
        %v2056 = vadd.f32 %v1951, %v2048
        %v2057 = vadd.f32 %v1952, %v2049
        %v2058 = vadd.f32 %v1953, %v2050
        %v2059 = vadd.f32 %v1954, %v2051
        %v2060 = vadd.f32 %v1955, %v2052
        %v2061 = vadd.f32 %v1956, %v2053
        %v2062 = vadd.f32 %v1957, %v2054
        %v2063 = vadd.f32 %v1958, %v2055
        %v2064 = vcombine.low %v1996, %v2000
        %v2065 = vcombine.low %v2004, %v2008
        %v2066 = vcombine.low %v2012, %v2016
        %v2067 = vcombine.low %v2020, %v2024
        %v2072 = vmul.f32 %v421, %v2064
        %v2073 = vmul.f32 %v422, %v2065
        %v2074 = vmul.f32 %v423, %v2066
        %v2075 = vmul.f32 %v424, %v2067
        %s2076 = scalar_lea.vmem %s5, 16
        %v2077 = vld [vmem:[%s2076] sm:$0xf]
        %2079 = vset.pattern.permute.xlu0 0
        %2080 = vperm.xlu0 %2079, %v2077
        %v2081 = vpop.permute.xlu0 %2080
        %v2083 = vunpack.c.l.s4 839922192
        %v2084 = vunpack.c.0.s8 %v2083
        %v2085 = vlaneseq
        %v2086 = vshrl.u32 %v2085, 7
        %v2087 = vsub.s32 %v2084, %v2086
        %v2088 = vrot.slane %v2081, %v2087
        %v2090 = vmul.f32 %v2072, %v2088
        %v2091 = vmul.f32 %v2073, %v2088
        %v2092 = vmul.f32 %v2074, %v2088
        %v2093 = vmul.f32 %v2075, %v2088
        %v2098 = vcombine.high %v2090, %v2090
        %v2099 = vcombine.high %v2091, %v2091
        %v2100 = vcombine.high %v2092, %v2092
        %v2101 = vcombine.high %v2093, %v2093
        %v2106 = vadd.f32 %v1982, %v2090
        %v2107 = vadd.f32 %v1983, %v2098
        %v2108 = vadd.f32 %v1984, %v2091
        %v2109 = vadd.f32 %v1985, %v2099
        %v2110 = vadd.f32 %v1986, %v2092
        %v2111 = vadd.f32 %v1987, %v2100
        %v2112 = vadd.f32 %v1988, %v2093
        %v2113 = vadd.f32 %v1989, %v2101
        %s2114 = scalar_lea.vmem %s6, 40
        %v2115 = vld [vmem:[%s2114] sm:$0xff]
        %2116 = vrot.lane.b32.xlu0 %v1234, 127
        %v2117 = vpop.permute.xlu0 %2116
        %2118 = vrot.lane.b32.xlu0 %v1236, 127
        %v2119 = vpop.permute.xlu0 %2118
        %2120 = vrot.lane.b32.xlu0 %v1275, 127
        %v2121 = vpop.permute.xlu0 %2120
        %2122 = vrot.lane.b32.xlu0 %v1277, 127
        %v2123 = vpop.permute.xlu0 %2122
        %2124 = vrot.lane.b32.xlu0 %v1316, 127
        %v2125 = vpop.permute.xlu0 %2124
        %2126 = vrot.lane.b32.xlu0 %v1318, 127
        %v2127 = vpop.permute.xlu0 %2126
        %2128 = vrot.lane.b32.xlu0 %v1357, 127
        %v2129 = vpop.permute.xlu0 %2128
        %2130 = vrot.lane.b32.xlu0 %v1359, 127
        %v2131 = vpop.permute.xlu0 %2130
        %vm2132 = vcmp.lt.s32.totalorder %v1381, 127
        %v2133 = vsel %vm2132, %v2129, %v2131
        %v2134 = vsel %vm2132, %v2127, %v2129
        %v2135 = vsel %vm2132, %v2125, %v2127
        %v2136 = vsel %vm2132, %v2123, %v2125
        %v2137 = vsel %vm2132, %v2121, %v2123
        %v2138 = vsel %vm2132, %v2119, %v2121
        %v2139 = vsel %vm2132, %v2117, %v2119
        %v2140 = vsel %vm2132, %v2131, %v2117
        %2141 = vrot.lane.b32.xlu0 %v421, 127
        %v2142 = vpop.permute.xlu0 %2141
        %2143 = vrot.lane.b32.xlu0 %v1395, 127
        %v2144 = vpop.permute.xlu0 %2143
        %2145 = vrot.lane.b32.xlu0 %v422, 127
        %v2146 = vpop.permute.xlu0 %2145
        %2147 = vrot.lane.b32.xlu0 %v1396, 127
        %v2148 = vpop.permute.xlu0 %2147
        %2149 = vrot.lane.b32.xlu0 %v423, 127
        %v2150 = vpop.permute.xlu0 %2149
        %2151 = vrot.lane.b32.xlu0 %v1397, 127
        %v2152 = vpop.permute.xlu0 %2151
        %2153 = vrot.lane.b32.xlu0 %v424, 127
        %v2154 = vpop.permute.xlu0 %2153
        %2155 = vrot.lane.b32.xlu0 %v1398, 127
        %v2156 = vpop.permute.xlu0 %2155
        %v2157 = vsel %vm2132, %v2154, %v2156
        %v2158 = vsel %vm2132, %v2152, %v2154
        %v2159 = vsel %vm2132, %v2150, %v2152
        %v2160 = vsel %vm2132, %v2148, %v2150
        %v2161 = vsel %vm2132, %v2146, %v2148
        %v2162 = vsel %vm2132, %v2144, %v2146
        %v2163 = vsel %vm2132, %v2142, %v2144
        %v2164 = vsel %vm2132, %v2156, %v2142
        %v2166 = vlaneseq
        %v2167 = vshrl.u32 %v2166, 7
        %v2168 = vsub.s32 0, %v2167
        %v2169 = vrot.slane %v2115, %v2168
        %v2170 = vlaneseq
        %v2171 = vshrl.u32 %v2170, 7
        %v2172 = vsub.s32 1, %v2171
        %v2173 = vrot.slane %v2115, %v2172
        %v2174 = vlaneseq
        %v2175 = vshrl.u32 %v2174, 7
        %v2176 = vsub.s32 2, %v2175
        %v2177 = vrot.slane %v2115, %v2176
        %v2178 = vlaneseq
        %v2179 = vshrl.u32 %v2178, 7
        %v2180 = vsub.s32 3, %v2179
        %v2181 = vrot.slane %v2115, %v2180
        %v2182 = vlaneseq
        %v2183 = vshrl.u32 %v2182, 7
        %v2184 = vsub.s32 4, %v2183
        %v2185 = vrot.slane %v2115, %v2184
        %v2186 = vlaneseq
        %v2187 = vshrl.u32 %v2186, 7
        %v2188 = vsub.s32 5, %v2187
        %v2189 = vrot.slane %v2115, %v2188
        %v2190 = vlaneseq
        %v2191 = vshrl.u32 %v2190, 7
        %v2192 = vsub.s32 6, %v2191
        %v2193 = vrot.slane %v2115, %v2192
        %v2194 = vlaneseq
        %v2195 = vshrl.u32 %v2194, 7
        %v2196 = vsub.s32 7, %v2195
        %v2197 = vrot.slane %v2115, %v2196
        %v2206 = vmul.f32 %v2139, %v2169
        %v2207 = vmul.f32 %v2138, %v2173
        %v2208 = vmul.f32 %v2137, %v2177
        %v2209 = vmul.f32 %v2136, %v2181
        %v2210 = vmul.f32 %v2135, %v2185
        %v2211 = vmul.f32 %v2134, %v2189
        %v2212 = vmul.f32 %v2133, %v2193
        %v2213 = vmul.f32 %v2140, %v2197
        %s2214 = scalar_lea.vmem %s4, 20
        %v2215 = vld [vmem:[%s2214] sm:$0xf]
        %2217 = vset.pattern.permute.xlu0 0
        %2218 = vperm.xlu0 %2217, %v2215
        %v2219 = vpop.permute.xlu0 %2218
        %v2221 = vmul.f32 %v2206, %v2219
        %v2222 = vmul.f32 %v2207, %v2219
        %v2223 = vmul.f32 %v2208, %v2219
        %v2224 = vmul.f32 %v2209, %v2219
        %v2225 = vmul.f32 %v2210, %v2219
        %v2226 = vmul.f32 %v2211, %v2219
        %v2227 = vmul.f32 %v2212, %v2219
        %v2228 = vmul.f32 %v2213, %v2219
        %v2229 = vadd.f32 %v2056, %v2221
        %v2230 = vadd.f32 %v2057, %v2222
        %v2231 = vadd.f32 %v2058, %v2223
        %v2232 = vadd.f32 %v2059, %v2224
        %v2233 = vadd.f32 %v2060, %v2225
        %v2234 = vadd.f32 %v2061, %v2226
        %v2235 = vadd.f32 %v2062, %v2227
        %v2236 = vadd.f32 %v2063, %v2228
        %v2237 = vmul.f32 %v2163, %v2169
        %v2238 = vmul.f32 %v2162, %v2173
        %v2239 = vmul.f32 %v2161, %v2177
        %v2240 = vmul.f32 %v2160, %v2181
        %v2241 = vmul.f32 %v2159, %v2185
        %v2242 = vmul.f32 %v2158, %v2189
        %v2243 = vmul.f32 %v2157, %v2193
        %v2244 = vmul.f32 %v2164, %v2197
        %s2245 = scalar_lea.vmem %s5, 20
        %v2246 = vld [vmem:[%s2245] sm:$0xf]
        %2248 = vset.pattern.permute.xlu0 0
        %2249 = vperm.xlu0 %2248, %v2246
        %v2250 = vpop.permute.xlu0 %2249
        %v2252 = vmul.f32 %v2237, %v2250
        %v2253 = vmul.f32 %v2238, %v2250
        %v2254 = vmul.f32 %v2239, %v2250
        %v2255 = vmul.f32 %v2240, %v2250
        %v2256 = vmul.f32 %v2241, %v2250
        %v2257 = vmul.f32 %v2242, %v2250
        %v2258 = vmul.f32 %v2243, %v2250
        %v2259 = vmul.f32 %v2244, %v2250
        %v2260 = vadd.f32 %v2106, %v2252
        %v2261 = vadd.f32 %v2107, %v2253
        %v2262 = vadd.f32 %v2108, %v2254
        %v2263 = vadd.f32 %v2109, %v2255
        %v2264 = vadd.f32 %v2110, %v2256
        %v2265 = vadd.f32 %v2111, %v2257
        %v2266 = vadd.f32 %v2112, %v2258
        %v2267 = vadd.f32 %v2113, %v2259
        %s2268 = scalar_lea.vmem %s6, 48
        %v2269 = vld [vmem:[%s2268] sm:$0xff]
        %2270 = vrot.lane.b32.xlu0 %v1234, 97
        %v2271 = vpop.permute.xlu0 %2270
        %2272 = vrot.lane.b32.xlu0 %v1236, 97
        %v2273 = vpop.permute.xlu0 %2272
        %2274 = vrot.lane.b32.xlu0 %v1275, 97
        %v2275 = vpop.permute.xlu0 %2274
        %2276 = vrot.lane.b32.xlu0 %v1277, 97
        %v2277 = vpop.permute.xlu0 %2276
        %2278 = vrot.lane.b32.xlu0 %v1316, 97
        %v2279 = vpop.permute.xlu0 %2278
        %2280 = vrot.lane.b32.xlu0 %v1318, 97
        %v2281 = vpop.permute.xlu0 %2280
        %2282 = vrot.lane.b32.xlu0 %v1357, 97
        %v2283 = vpop.permute.xlu0 %2282
        %2284 = vrot.lane.b32.xlu0 %v1359, 97
        %v2285 = vpop.permute.xlu0 %2284
        %vm2286 = vcmp.lt.s32.totalorder %v1381, 97
        %v2287 = vsel %vm2286, %v2283, %v2285
        %v2288 = vsel %vm2286, %v2281, %v2283
        %v2289 = vsel %vm2286, %v2279, %v2281
        %v2290 = vsel %vm2286, %v2277, %v2279
        %v2291 = vsel %vm2286, %v2275, %v2277
        %v2292 = vsel %vm2286, %v2273, %v2275
        %v2293 = vsel %vm2286, %v2271, %v2273
        %v2294 = vsel %vm2286, %v2285, %v2271
        %2295 = vrot.lane.b32.xlu0 %v421, 97
        %v2296 = vpop.permute.xlu0 %2295
        %2297 = vrot.lane.b32.xlu0 %v1395, 97
        %v2298 = vpop.permute.xlu0 %2297
        %2299 = vrot.lane.b32.xlu0 %v422, 97
        %v2300 = vpop.permute.xlu0 %2299
        %2301 = vrot.lane.b32.xlu0 %v1396, 97
        %v2302 = vpop.permute.xlu0 %2301
        %2303 = vrot.lane.b32.xlu0 %v423, 97
        %v2304 = vpop.permute.xlu0 %2303
        %2305 = vrot.lane.b32.xlu0 %v1397, 97
        %v2306 = vpop.permute.xlu0 %2305
        %2307 = vrot.lane.b32.xlu0 %v424, 97
        %v2308 = vpop.permute.xlu0 %2307
        %2309 = vrot.lane.b32.xlu0 %v1398, 97
        %v2310 = vpop.permute.xlu0 %2309
        %v2311 = vsel %vm2286, %v2308, %v2310
        %v2312 = vsel %vm2286, %v2306, %v2308
        %v2313 = vsel %vm2286, %v2304, %v2306
        %v2314 = vsel %vm2286, %v2302, %v2304
        %v2315 = vsel %vm2286, %v2300, %v2302
        %v2316 = vsel %vm2286, %v2298, %v2300
        %v2317 = vsel %vm2286, %v2296, %v2298
        %v2318 = vsel %vm2286, %v2310, %v2296
        %v2320 = vlaneseq
        %v2321 = vshrl.u32 %v2320, 7
        %v2322 = vsub.s32 0, %v2321
        %v2323 = vrot.slane %v2269, %v2322
        %v2324 = vlaneseq
        %v2325 = vshrl.u32 %v2324, 7
        %v2326 = vsub.s32 1, %v2325
        %v2327 = vrot.slane %v2269, %v2326
        %v2328 = vlaneseq
        %v2329 = vshrl.u32 %v2328, 7
        %v2330 = vsub.s32 2, %v2329
        %v2331 = vrot.slane %v2269, %v2330
        %v2332 = vlaneseq
        %v2333 = vshrl.u32 %v2332, 7
        %v2334 = vsub.s32 3, %v2333
        %v2335 = vrot.slane %v2269, %v2334
        %v2336 = vlaneseq
        %v2337 = vshrl.u32 %v2336, 7
        %v2338 = vsub.s32 4, %v2337
        %v2339 = vrot.slane %v2269, %v2338
        %v2340 = vlaneseq
        %v2341 = vshrl.u32 %v2340, 7
        %v2342 = vsub.s32 5, %v2341
        %v2343 = vrot.slane %v2269, %v2342
        %v2344 = vlaneseq
        %v2345 = vshrl.u32 %v2344, 7
        %v2346 = vsub.s32 6, %v2345
        %v2347 = vrot.slane %v2269, %v2346
        %v2348 = vlaneseq
        %v2349 = vshrl.u32 %v2348, 7
        %v2350 = vsub.s32 7, %v2349
        %v2351 = vrot.slane %v2269, %v2350
        %v2360 = vmul.f32 %v2293, %v2323
        %v2361 = vmul.f32 %v2292, %v2327
        %v2362 = vmul.f32 %v2291, %v2331
        %v2363 = vmul.f32 %v2290, %v2335
        %v2364 = vmul.f32 %v2289, %v2339
        %v2365 = vmul.f32 %v2288, %v2343
        %v2366 = vmul.f32 %v2287, %v2347
        %v2367 = vmul.f32 %v2294, %v2351
        %s2368 = scalar_lea.vmem %s4, 24
        %v2369 = vld [vmem:[%s2368] sm:$0xf]
        %2371 = vset.pattern.permute.xlu0 0
        %2372 = vperm.xlu0 %2371, %v2369
        %v2373 = vpop.permute.xlu0 %2372
        %v2375 = vmul.f32 %v2360, %v2373
        %v2376 = vmul.f32 %v2361, %v2373
        %v2377 = vmul.f32 %v2362, %v2373
        %v2378 = vmul.f32 %v2363, %v2373
        %v2379 = vmul.f32 %v2364, %v2373
        %v2380 = vmul.f32 %v2365, %v2373
        %v2381 = vmul.f32 %v2366, %v2373
        %v2382 = vmul.f32 %v2367, %v2373
        %v2383 = vadd.f32 %v2229, %v2375
        %v2384 = vadd.f32 %v2230, %v2376
        %v2385 = vadd.f32 %v2231, %v2377
        %v2386 = vadd.f32 %v2232, %v2378
        %v2387 = vadd.f32 %v2233, %v2379
        %v2388 = vadd.f32 %v2234, %v2380
        %v2389 = vadd.f32 %v2235, %v2381
        %v2390 = vadd.f32 %v2236, %v2382
        %v2391 = vmul.f32 %v2317, %v2323
        %v2392 = vmul.f32 %v2316, %v2327
        %v2393 = vmul.f32 %v2315, %v2331
        %v2394 = vmul.f32 %v2314, %v2335
        %v2395 = vmul.f32 %v2313, %v2339
        %v2396 = vmul.f32 %v2312, %v2343
        %v2397 = vmul.f32 %v2311, %v2347
        %v2398 = vmul.f32 %v2318, %v2351
        %s2399 = scalar_lea.vmem %s5, 24
        %v2400 = vld [vmem:[%s2399] sm:$0xf]
        %2402 = vset.pattern.permute.xlu0 0
        %2403 = vperm.xlu0 %2402, %v2400
        %v2404 = vpop.permute.xlu0 %2403
        %v2406 = vmul.f32 %v2391, %v2404
        %v2407 = vmul.f32 %v2392, %v2404
        %v2408 = vmul.f32 %v2393, %v2404
        %v2409 = vmul.f32 %v2394, %v2404
        %v2410 = vmul.f32 %v2395, %v2404
        %v2411 = vmul.f32 %v2396, %v2404
        %v2412 = vmul.f32 %v2397, %v2404
        %v2413 = vmul.f32 %v2398, %v2404
        %v2414 = vadd.f32 %v2260, %v2406
        %v2415 = vadd.f32 %v2261, %v2407
        %v2416 = vadd.f32 %v2262, %v2408
        %v2417 = vadd.f32 %v2263, %v2409
        %v2418 = vadd.f32 %v2264, %v2410
        %v2419 = vadd.f32 %v2265, %v2411
        %v2420 = vadd.f32 %v2266, %v2412
        %v2421 = vadd.f32 %v2267, %v2413
        %s2422 = scalar_lea.vmem %s6, 56
        %v2423 = vld [vmem:[%s2422] sm:$0xff]
        %2424 = vrot.lane.b32.xlu0 %v1234, 96
        %v2425 = vpop.permute.xlu0 %2424
        %2426 = vrot.lane.b32.xlu0 %v1236, 96
        %v2427 = vpop.permute.xlu0 %2426
        %2428 = vrot.lane.b32.xlu0 %v1275, 96
        %v2429 = vpop.permute.xlu0 %2428
        %2430 = vrot.lane.b32.xlu0 %v1277, 96
        %v2431 = vpop.permute.xlu0 %2430
        %2432 = vrot.lane.b32.xlu0 %v1316, 96
        %v2433 = vpop.permute.xlu0 %2432
        %2434 = vrot.lane.b32.xlu0 %v1318, 96
        %v2435 = vpop.permute.xlu0 %2434
        %2436 = vrot.lane.b32.xlu0 %v1357, 96
        %v2437 = vpop.permute.xlu0 %2436
        %2438 = vrot.lane.b32.xlu0 %v1359, 96
        %v2439 = vpop.permute.xlu0 %2438
        %vm2440 = vcmp.lt.s32.totalorder %v1381, 96
        %v2441 = vsel %vm2440, %v2437, %v2439
        %v2442 = vsel %vm2440, %v2435, %v2437
        %v2443 = vsel %vm2440, %v2433, %v2435
        %v2444 = vsel %vm2440, %v2431, %v2433
        %v2445 = vsel %vm2440, %v2429, %v2431
        %v2446 = vsel %vm2440, %v2427, %v2429
        %v2447 = vsel %vm2440, %v2425, %v2427
        %v2448 = vsel %vm2440, %v2439, %v2425
        %2449 = vrot.lane.b32.xlu0 %v421, 96
        %v2450 = vpop.permute.xlu0 %2449
        %2451 = vrot.lane.b32.xlu0 %v1395, 96
        %v2452 = vpop.permute.xlu0 %2451
        %2453 = vrot.lane.b32.xlu0 %v422, 96
        %v2454 = vpop.permute.xlu0 %2453
        %2455 = vrot.lane.b32.xlu0 %v1396, 96
        %v2456 = vpop.permute.xlu0 %2455
        %2457 = vrot.lane.b32.xlu0 %v423, 96
        %v2458 = vpop.permute.xlu0 %2457
        %2459 = vrot.lane.b32.xlu0 %v1397, 96
        %v2460 = vpop.permute.xlu0 %2459
        %2461 = vrot.lane.b32.xlu0 %v424, 96
        %v2462 = vpop.permute.xlu0 %2461
        %2463 = vrot.lane.b32.xlu0 %v1398, 96
        %v2464 = vpop.permute.xlu0 %2463
        %v2465 = vsel %vm2440, %v2462, %v2464
        %v2466 = vsel %vm2440, %v2460, %v2462
        %v2467 = vsel %vm2440, %v2458, %v2460
        %v2468 = vsel %vm2440, %v2456, %v2458
        %v2469 = vsel %vm2440, %v2454, %v2456
        %v2470 = vsel %vm2440, %v2452, %v2454
        %v2471 = vsel %vm2440, %v2450, %v2452
        %v2472 = vsel %vm2440, %v2464, %v2450
        %v2474 = vlaneseq
        %v2475 = vshrl.u32 %v2474, 7
        %v2476 = vsub.s32 0, %v2475
        %v2477 = vrot.slane %v2423, %v2476
        %v2478 = vlaneseq
        %v2479 = vshrl.u32 %v2478, 7
        %v2480 = vsub.s32 1, %v2479
        %v2481 = vrot.slane %v2423, %v2480
        %v2482 = vlaneseq
        %v2483 = vshrl.u32 %v2482, 7
        %v2484 = vsub.s32 2, %v2483
        %v2485 = vrot.slane %v2423, %v2484
        %v2486 = vlaneseq
        %v2487 = vshrl.u32 %v2486, 7
        %v2488 = vsub.s32 3, %v2487
        %v2489 = vrot.slane %v2423, %v2488
        %v2490 = vlaneseq
        %v2491 = vshrl.u32 %v2490, 7
        %v2492 = vsub.s32 4, %v2491
        %v2493 = vrot.slane %v2423, %v2492
        %v2494 = vlaneseq
        %v2495 = vshrl.u32 %v2494, 7
        %v2496 = vsub.s32 5, %v2495
        %v2497 = vrot.slane %v2423, %v2496
        %v2498 = vlaneseq
        %v2499 = vshrl.u32 %v2498, 7
        %v2500 = vsub.s32 6, %v2499
        %v2501 = vrot.slane %v2423, %v2500
        %v2502 = vlaneseq
        %v2503 = vshrl.u32 %v2502, 7
        %v2504 = vsub.s32 7, %v2503
        %v2505 = vrot.slane %v2423, %v2504
        %v2514 = vmul.f32 %v2447, %v2477
        %v2515 = vmul.f32 %v2446, %v2481
        %v2516 = vmul.f32 %v2445, %v2485
        %v2517 = vmul.f32 %v2444, %v2489
        %v2518 = vmul.f32 %v2443, %v2493
        %v2519 = vmul.f32 %v2442, %v2497
        %v2520 = vmul.f32 %v2441, %v2501
        %v2521 = vmul.f32 %v2448, %v2505
        %s2522 = scalar_lea.vmem %s4, 28
        %v2523 = vld [vmem:[%s2522] sm:$0xf]
        %2525 = vset.pattern.permute.xlu0 0
        %2526 = vperm.xlu0 %2525, %v2523
        %v2527 = vpop.permute.xlu0 %2526
        %v2529 = vmul.f32 %v2514, %v2527
        %v2530 = vmul.f32 %v2515, %v2527
        %v2531 = vmul.f32 %v2516, %v2527
        %v2532 = vmul.f32 %v2517, %v2527
        %v2533 = vmul.f32 %v2518, %v2527
        %v2534 = vmul.f32 %v2519, %v2527
        %v2535 = vmul.f32 %v2520, %v2527
        %v2536 = vmul.f32 %v2521, %v2527
        %v2537 = vadd.f32 %v2383, %v2529
        %v2538 = vadd.f32 %v2384, %v2530
        %v2539 = vadd.f32 %v2385, %v2531
        %v2540 = vadd.f32 %v2386, %v2532
        %v2541 = vadd.f32 %v2387, %v2533
        %v2542 = vadd.f32 %v2388, %v2534
        %v2543 = vadd.f32 %v2389, %v2535
        %v2544 = vadd.f32 %v2390, %v2536
        %v2545 = vmul.f32 %v2471, %v2477
        %v2546 = vmul.f32 %v2470, %v2481
        %v2547 = vmul.f32 %v2469, %v2485
        %v2548 = vmul.f32 %v2468, %v2489
        %v2549 = vmul.f32 %v2467, %v2493
        %v2550 = vmul.f32 %v2466, %v2497
        %v2551 = vmul.f32 %v2465, %v2501
        %v2552 = vmul.f32 %v2472, %v2505
        %s2553 = scalar_lea.vmem %s5, 28
        %v2554 = vld [vmem:[%s2553] sm:$0xf]
        %2556 = vset.pattern.permute.xlu0 0
        %2557 = vperm.xlu0 %2556, %v2554
        %v2558 = vpop.permute.xlu0 %2557
        %v2560 = vmul.f32 %v2545, %v2558
        %v2561 = vmul.f32 %v2546, %v2558
        %v2562 = vmul.f32 %v2547, %v2558
        %v2563 = vmul.f32 %v2548, %v2558
        %v2564 = vmul.f32 %v2549, %v2558
        %v2565 = vmul.f32 %v2550, %v2558
        %v2566 = vmul.f32 %v2551, %v2558
        %v2567 = vmul.f32 %v2552, %v2558
        %v2568 = vadd.f32 %v2414, %v2560
        %v2569 = vadd.f32 %v2415, %v2561
        %v2570 = vadd.f32 %v2416, %v2562
        %v2571 = vadd.f32 %v2417, %v2563
        %v2572 = vadd.f32 %v2418, %v2564
        %v2573 = vadd.f32 %v2419, %v2565
        %v2574 = vadd.f32 %v2420, %v2566
        %v2575 = vadd.f32 %v2421, %v2567
        %s2576 = scalar_lea.vmem %s6, 64
        %v2577 = vld [vmem:[%s2576] sm:$0xff]
        %2578 = vrot.lane.b32.xlu0 %v1234, 95
        %v2579 = vpop.permute.xlu0 %2578
        %2580 = vrot.lane.b32.xlu0 %v1236, 95
        %v2581 = vpop.permute.xlu0 %2580
        %2582 = vrot.lane.b32.xlu0 %v1275, 95
        %v2583 = vpop.permute.xlu0 %2582
        %2584 = vrot.lane.b32.xlu0 %v1277, 95
        %v2585 = vpop.permute.xlu0 %2584
        %2586 = vrot.lane.b32.xlu0 %v1316, 95
        %v2587 = vpop.permute.xlu0 %2586
        %2588 = vrot.lane.b32.xlu0 %v1318, 95
        %v2589 = vpop.permute.xlu0 %2588
        %2590 = vrot.lane.b32.xlu0 %v1357, 95
        %v2591 = vpop.permute.xlu0 %2590
        %2592 = vrot.lane.b32.xlu0 %v1359, 95
        %v2593 = vpop.permute.xlu0 %2592
        %vm2594 = vcmp.lt.s32.totalorder %v1381, 95
        %v2595 = vsel %vm2594, %v2591, %v2593
        %v2596 = vsel %vm2594, %v2589, %v2591
        %v2597 = vsel %vm2594, %v2587, %v2589
        %v2598 = vsel %vm2594, %v2585, %v2587
        %v2599 = vsel %vm2594, %v2583, %v2585
        %v2600 = vsel %vm2594, %v2581, %v2583
        %v2601 = vsel %vm2594, %v2579, %v2581
        %v2602 = vsel %vm2594, %v2593, %v2579
        %2603 = vrot.lane.b32.xlu0 %v421, 95
        %v2604 = vpop.permute.xlu0 %2603
        %2605 = vrot.lane.b32.xlu0 %v1395, 95
        %v2606 = vpop.permute.xlu0 %2605
        %2607 = vrot.lane.b32.xlu0 %v422, 95
        %v2608 = vpop.permute.xlu0 %2607
        %2609 = vrot.lane.b32.xlu0 %v1396, 95
        %v2610 = vpop.permute.xlu0 %2609
        %2611 = vrot.lane.b32.xlu0 %v423, 95
        %v2612 = vpop.permute.xlu0 %2611
        %2613 = vrot.lane.b32.xlu0 %v1397, 95
        %v2614 = vpop.permute.xlu0 %2613
        %2615 = vrot.lane.b32.xlu0 %v424, 95
        %v2616 = vpop.permute.xlu0 %2615
        %2617 = vrot.lane.b32.xlu0 %v1398, 95
        %v2618 = vpop.permute.xlu0 %2617
        %v2619 = vsel %vm2594, %v2616, %v2618
        %v2620 = vsel %vm2594, %v2614, %v2616
        %v2621 = vsel %vm2594, %v2612, %v2614
        %v2622 = vsel %vm2594, %v2610, %v2612
        %v2623 = vsel %vm2594, %v2608, %v2610
        %v2624 = vsel %vm2594, %v2606, %v2608
        %v2625 = vsel %vm2594, %v2604, %v2606
        %v2626 = vsel %vm2594, %v2618, %v2604
        %v2628 = vlaneseq
        %v2629 = vshrl.u32 %v2628, 7
        %v2630 = vsub.s32 0, %v2629
        %v2631 = vrot.slane %v2577, %v2630
        %v2632 = vlaneseq
        %v2633 = vshrl.u32 %v2632, 7
        %v2634 = vsub.s32 1, %v2633
        %v2635 = vrot.slane %v2577, %v2634
        %v2636 = vlaneseq
        %v2637 = vshrl.u32 %v2636, 7
        %v2638 = vsub.s32 2, %v2637
        %v2639 = vrot.slane %v2577, %v2638
        %v2640 = vlaneseq
        %v2641 = vshrl.u32 %v2640, 7
        %v2642 = vsub.s32 3, %v2641
        %v2643 = vrot.slane %v2577, %v2642
        %v2644 = vlaneseq
        %v2645 = vshrl.u32 %v2644, 7
        %v2646 = vsub.s32 4, %v2645
        %v2647 = vrot.slane %v2577, %v2646
        %v2648 = vlaneseq
        %v2649 = vshrl.u32 %v2648, 7
        %v2650 = vsub.s32 5, %v2649
        %v2651 = vrot.slane %v2577, %v2650
        %v2652 = vlaneseq
        %v2653 = vshrl.u32 %v2652, 7
        %v2654 = vsub.s32 6, %v2653
        %v2655 = vrot.slane %v2577, %v2654
        %v2656 = vlaneseq
        %v2657 = vshrl.u32 %v2656, 7
        %v2658 = vsub.s32 7, %v2657
        %v2659 = vrot.slane %v2577, %v2658
        %v2668 = vmul.f32 %v2601, %v2631
        %v2669 = vmul.f32 %v2600, %v2635
        %v2670 = vmul.f32 %v2599, %v2639
        %v2671 = vmul.f32 %v2598, %v2643
        %v2672 = vmul.f32 %v2597, %v2647
        %v2673 = vmul.f32 %v2596, %v2651
        %v2674 = vmul.f32 %v2595, %v2655
        %v2675 = vmul.f32 %v2602, %v2659
        %s2676 = scalar_lea.vmem %s4, 32
        %v2677 = vld [vmem:[%s2676] sm:$0xf]
        %2679 = vset.pattern.permute.xlu0 0
        %2680 = vperm.xlu0 %2679, %v2677
        %v2681 = vpop.permute.xlu0 %2680
        %v2683 = vmul.f32 %v2668, %v2681
        %v2684 = vmul.f32 %v2669, %v2681
        %v2685 = vmul.f32 %v2670, %v2681
        %v2686 = vmul.f32 %v2671, %v2681
        %v2687 = vmul.f32 %v2672, %v2681
        %v2688 = vmul.f32 %v2673, %v2681
        %v2689 = vmul.f32 %v2674, %v2681
        %v2690 = vmul.f32 %v2675, %v2681
        %v2691 = vadd.f32 %v2537, %v2683
        %v2692 = vadd.f32 %v2538, %v2684
        %v2693 = vadd.f32 %v2539, %v2685
        %v2694 = vadd.f32 %v2540, %v2686
        %v2695 = vadd.f32 %v2541, %v2687
        %v2696 = vadd.f32 %v2542, %v2688
        %v2697 = vadd.f32 %v2543, %v2689
        %v2698 = vadd.f32 %v2544, %v2690
        %v2699 = vmul.f32 %v2625, %v2631
        %v2700 = vmul.f32 %v2624, %v2635
        %v2701 = vmul.f32 %v2623, %v2639
        %v2702 = vmul.f32 %v2622, %v2643
        %v2703 = vmul.f32 %v2621, %v2647
        %v2704 = vmul.f32 %v2620, %v2651
        %v2705 = vmul.f32 %v2619, %v2655
        %v2706 = vmul.f32 %v2626, %v2659
        %s2707 = scalar_lea.vmem %s5, 32
        %v2708 = vld [vmem:[%s2707] sm:$0xf]
        %2710 = vset.pattern.permute.xlu0 0
        %2711 = vperm.xlu0 %2710, %v2708
        %v2712 = vpop.permute.xlu0 %2711
        %v2714 = vmul.f32 %v2699, %v2712
        %v2715 = vmul.f32 %v2700, %v2712
        %v2716 = vmul.f32 %v2701, %v2712
        %v2717 = vmul.f32 %v2702, %v2712
        %v2718 = vmul.f32 %v2703, %v2712
        %v2719 = vmul.f32 %v2704, %v2712
        %v2720 = vmul.f32 %v2705, %v2712
        %v2721 = vmul.f32 %v2706, %v2712
        %v2722 = vadd.f32 %v2568, %v2714
        %v2723 = vadd.f32 %v2569, %v2715
        %v2724 = vadd.f32 %v2570, %v2716
        %v2725 = vadd.f32 %v2571, %v2717
        %v2726 = vadd.f32 %v2572, %v2718
        %v2727 = vadd.f32 %v2573, %v2719
        %v2728 = vadd.f32 %v2574, %v2720
        %v2729 = vadd.f32 %v2575, %v2721
        %v2730 = vpack.c.bf16 %v2722, %v2722
        %v2731 = vpack.c.bf16 %v2723, %v2723
        %v2732 = vpack.c.bf16 %v2724, %v2724
        %v2733 = vpack.c.bf16 %v2725, %v2725
        %v2734 = vpack.c.bf16 %v2726, %v2726
        %v2735 = vpack.c.bf16 %v2727, %v2727
        %v2736 = vpack.c.bf16 %v2728, %v2728
        %v2737 = vpack.c.bf16 %v2729, %v2729
        %v2738 = vld [vmem:[%s3] sm:$0xf]
        %v2739 = vld [vmem:[%s3 + $0x4] sm:$0xf]
        %v2740 = vld [vmem:[%s3 + $0x8] sm:$0xf]
        %v2741 = vld [vmem:[%s3 + $0xc] sm:$0xf]
        %v2742 = vld [vmem:[%s3 + $0x10] sm:$0xf]
        %v2743 = vld [vmem:[%s3 + $0x14] sm:$0xf]
        %v2744 = vld [vmem:[%s3 + $0x18] sm:$0xf]
        %v2745 = vld [vmem:[%s3 + $0x1c] sm:$0xf]
        %v2746 = vld [vmem:[%s3 + $0x20] sm:$0xf]
        %v2747 = vld [vmem:[%s3 + $0x24] sm:$0xf]
        %v2748 = vld [vmem:[%s3 + $0x28] sm:$0xf]
        %v2749 = vld [vmem:[%s3 + $0x2c] sm:$0xf]
        %v2750 = vld [vmem:[%s3 + $0x30] sm:$0xf]
        %v2751 = vld [vmem:[%s3 + $0x34] sm:$0xf]
        %v2752 = vld [vmem:[%s3 + $0x38] sm:$0xf]
        %v2753 = vld [vmem:[%s3 + $0x3c] sm:$0xf]
        %v2754 = vld [vmem:[%s3 + $0x40] sm:$0xf]
        %v2755 = vld [vmem:[%s3 + $0x44] sm:$0xf]
        %v2756 = vld [vmem:[%s3 + $0x48] sm:$0xf]
        %v2757 = vld [vmem:[%s3 + $0x4c] sm:$0xf]
        %v2758 = vld [vmem:[%s3 + $0x50] sm:$0xf]
        %v2759 = vld [vmem:[%s3 + $0x54] sm:$0xf]
        %v2760 = vld [vmem:[%s3 + $0x58] sm:$0xf]
        %v2761 = vld [vmem:[%s3 + $0x5c] sm:$0xf]
        %v2762 = vld [vmem:[%s3 + $0x60] sm:$0xf]
        %v2763 = vld [vmem:[%s3 + $0x64] sm:$0xf]
        %v2764 = vld [vmem:[%s3 + $0x68] sm:$0xf]
        %v2765 = vld [vmem:[%s3 + $0x6c] sm:$0xf]
        %v2766 = vld [vmem:[%s3 + $0x70] sm:$0xf]
        %v2767 = vld [vmem:[%s3 + $0x74] sm:$0xf]
        %v2768 = vld [vmem:[%s3 + $0x78] sm:$0xf]
        %v2769 = vld [vmem:[%s3 + $0x7c] sm:$0xf]
        %v2770 = vld [vmem:[%s3 + $0x80] sm:$0xf]
        %v2771 = vld [vmem:[%s3 + $0x84] sm:$0xf]
        %v2772 = vld [vmem:[%s3 + $0x88] sm:$0xf]
        %v2773 = vld [vmem:[%s3 + $0x8c] sm:$0xf]
        %v2774 = vld [vmem:[%s3 + $0x90] sm:$0xf]
        %v2775 = vld [vmem:[%s3 + $0x94] sm:$0xf]
        %v2776 = vld [vmem:[%s3 + $0x98] sm:$0xf]
        %v2777 = vld [vmem:[%s3 + $0x9c] sm:$0xf]
        %v2778 = vld [vmem:[%s3 + $0xa0] sm:$0xf]
        %v2779 = vld [vmem:[%s3 + $0xa4] sm:$0xf]
        %v2780 = vld [vmem:[%s3 + $0xa8] sm:$0xf]
        %v2781 = vld [vmem:[%s3 + $0xac] sm:$0xf]
        %v2782 = vld [vmem:[%s3 + $0xb0] sm:$0xf]
        %v2783 = vld [vmem:[%s3 + $0xb4] sm:$0xf]
        %v2784 = vld [vmem:[%s3 + $0xb8] sm:$0xf]
        %v2785 = vld [vmem:[%s3 + $0xbc] sm:$0xf]
        %v2786 = vld [vmem:[%s3 + $0xc0] sm:$0xf]
        %v2787 = vld [vmem:[%s3 + $0xc4] sm:$0xf]
        %v2788 = vld [vmem:[%s3 + $0xc8] sm:$0xf]
        %v2789 = vld [vmem:[%s3 + $0xcc] sm:$0xf]
        %v2790 = vld [vmem:[%s3 + $0xd0] sm:$0xf]
        %v2791 = vld [vmem:[%s3 + $0xd4] sm:$0xf]
        %v2792 = vld [vmem:[%s3 + $0xd8] sm:$0xf]
        %v2793 = vld [vmem:[%s3 + $0xdc] sm:$0xf]
        %v2794 = vld [vmem:[%s3 + $0xe0] sm:$0xf]
        %v2795 = vld [vmem:[%s3 + $0xe4] sm:$0xf]
        %v2796 = vld [vmem:[%s3 + $0xe8] sm:$0xf]
        %v2797 = vld [vmem:[%s3 + $0xec] sm:$0xf]
        %v2798 = vld [vmem:[%s3 + $0xf0] sm:$0xf]
        %v2799 = vld [vmem:[%s3 + $0xf4] sm:$0xf]
        %v2800 = vld [vmem:[%s3 + $0xf8] sm:$0xf]
        %v2801 = vld [vmem:[%s3 + $0xfc] sm:$0xf]
        %v2802 = vld [vmem:[%s3 + $0x100] sm:$0xf]
        %v2803 = vld [vmem:[%s3 + $0x104] sm:$0xf]
        %v2804 = vld [vmem:[%s3 + $0x108] sm:$0xf]
        %v2805 = vld [vmem:[%s3 + $0x10c] sm:$0xf]
        %v2806 = vld [vmem:[%s3 + $0x110] sm:$0xf]
        %v2807 = vld [vmem:[%s3 + $0x114] sm:$0xf]
        %v2808 = vld [vmem:[%s3 + $0x118] sm:$0xf]
        %v2809 = vld [vmem:[%s3 + $0x11c] sm:$0xf]
        %v2810 = vld [vmem:[%s3 + $0x120] sm:$0xf]
        %v2811 = vld [vmem:[%s3 + $0x124] sm:$0xf]
        %v2812 = vld [vmem:[%s3 + $0x128] sm:$0xf]
        %v2813 = vld [vmem:[%s3 + $0x12c] sm:$0xf]
        %v2814 = vld [vmem:[%s3 + $0x130] sm:$0xf]
        %v2815 = vld [vmem:[%s3 + $0x134] sm:$0xf]
        %v2816 = vld [vmem:[%s3 + $0x138] sm:$0xf]
        %v2817 = vld [vmem:[%s3 + $0x13c] sm:$0xf]
        %v2818 = vld [vmem:[%s3 + $0x140] sm:$0xf]
        %v2819 = vld [vmem:[%s3 + $0x144] sm:$0xf]
        %v2820 = vld [vmem:[%s3 + $0x148] sm:$0xf]
        %v2821 = vld [vmem:[%s3 + $0x14c] sm:$0xf]
        %v2822 = vld [vmem:[%s3 + $0x150] sm:$0xf]
        %v2823 = vld [vmem:[%s3 + $0x154] sm:$0xf]
        %v2824 = vld [vmem:[%s3 + $0x158] sm:$0xf]
        %v2825 = vld [vmem:[%s3 + $0x15c] sm:$0xf]
        %v2826 = vld [vmem:[%s3 + $0x160] sm:$0xf]
        %v2827 = vld [vmem:[%s3 + $0x164] sm:$0xf]
        %v2828 = vld [vmem:[%s3 + $0x168] sm:$0xf]
        %v2829 = vld [vmem:[%s3 + $0x16c] sm:$0xf]
        %v2830 = vld [vmem:[%s3 + $0x170] sm:$0xf]
        %v2831 = vld [vmem:[%s3 + $0x174] sm:$0xf]
        %v2832 = vld [vmem:[%s3 + $0x178] sm:$0xf]
        %v2833 = vld [vmem:[%s3 + $0x17c] sm:$0xf]
        %v2834 = vld [vmem:[%s3 + $0x180] sm:$0xf]
        %v2835 = vld [vmem:[%s3 + $0x184] sm:$0xf]
        %v2836 = vld [vmem:[%s3 + $0x188] sm:$0xf]
        %v2837 = vld [vmem:[%s3 + $0x18c] sm:$0xf]
        %v2838 = vld [vmem:[%s3 + $0x190] sm:$0xf]
        %v2839 = vld [vmem:[%s3 + $0x194] sm:$0xf]
        %v2840 = vld [vmem:[%s3 + $0x198] sm:$0xf]
        %v2841 = vld [vmem:[%s3 + $0x19c] sm:$0xf]
        %v2842 = vld [vmem:[%s3 + $0x1a0] sm:$0xf]
        %v2843 = vld [vmem:[%s3 + $0x1a4] sm:$0xf]
        %v2844 = vld [vmem:[%s3 + $0x1a8] sm:$0xf]
        %v2845 = vld [vmem:[%s3 + $0x1ac] sm:$0xf]
        %v2846 = vld [vmem:[%s3 + $0x1b0] sm:$0xf]
        %v2847 = vld [vmem:[%s3 + $0x1b4] sm:$0xf]
        %v2848 = vld [vmem:[%s3 + $0x1b8] sm:$0xf]
        %v2849 = vld [vmem:[%s3 + $0x1bc] sm:$0xf]
        %v2850 = vld [vmem:[%s3 + $0x1c0] sm:$0xf]
        %v2851 = vld [vmem:[%s3 + $0x1c4] sm:$0xf]
        %v2852 = vld [vmem:[%s3 + $0x1c8] sm:$0xf]
        %v2853 = vld [vmem:[%s3 + $0x1cc] sm:$0xf]
        %v2854 = vld [vmem:[%s3 + $0x1d0] sm:$0xf]
        %v2855 = vld [vmem:[%s3 + $0x1d4] sm:$0xf]
        %v2856 = vld [vmem:[%s3 + $0x1d8] sm:$0xf]
        %v2857 = vld [vmem:[%s3 + $0x1dc] sm:$0xf]
        %v2858 = vld [vmem:[%s3 + $0x1e0] sm:$0xf]
        %v2859 = vld [vmem:[%s3 + $0x1e4] sm:$0xf]
        %v2860 = vld [vmem:[%s3 + $0x1e8] sm:$0xf]
        %v2861 = vld [vmem:[%s3 + $0x1ec] sm:$0xf]
        %v2862 = vld [vmem:[%s3 + $0x1f0] sm:$0xf]
        %v2863 = vld [vmem:[%s3 + $0x1f4] sm:$0xf]
        %v2864 = vld [vmem:[%s3 + $0x1f8] sm:$0xf]
        %v2865 = vld [vmem:[%s3 + $0x1fc] sm:$0xf]
        %v2994 = vunpack.c.l.b16 %v2738
        %v2995 = vunpack.c.l.b16 %v2739
        %v2996 = vunpack.c.l.b16 %v2740
        %v2997 = vunpack.c.l.b16 %v2741
        %v2998 = vunpack.c.l.b16 %v2742
        %v2999 = vunpack.c.l.b16 %v2743
        %v3000 = vunpack.c.l.b16 %v2744
        %v3001 = vunpack.c.l.b16 %v2745
        %v3002 = vunpack.c.l.b16 %v2746
        %v3003 = vunpack.c.l.b16 %v2747
        %v3004 = vunpack.c.l.b16 %v2748
        %v3005 = vunpack.c.l.b16 %v2749
        %v3006 = vunpack.c.l.b16 %v2750
        %v3007 = vunpack.c.l.b16 %v2751
        %v3008 = vunpack.c.l.b16 %v2752
        %v3009 = vunpack.c.l.b16 %v2753
        %v3010 = vunpack.c.l.b16 %v2754
        %v3011 = vunpack.c.l.b16 %v2755
        %v3012 = vunpack.c.l.b16 %v2756
        %v3013 = vunpack.c.l.b16 %v2757
        %v3014 = vunpack.c.l.b16 %v2758
        %v3015 = vunpack.c.l.b16 %v2759
        %v3016 = vunpack.c.l.b16 %v2760
        %v3017 = vunpack.c.l.b16 %v2761
        %v3018 = vunpack.c.l.b16 %v2762
        %v3019 = vunpack.c.l.b16 %v2763
        %v3020 = vunpack.c.l.b16 %v2764
        %v3021 = vunpack.c.l.b16 %v2765
        %v3022 = vunpack.c.l.b16 %v2766
        %v3023 = vunpack.c.l.b16 %v2767
        %v3024 = vunpack.c.l.b16 %v2768
        %v3025 = vunpack.c.l.b16 %v2769
        %v3026 = vunpack.c.l.b16 %v2770
        %v3027 = vunpack.c.l.b16 %v2771
        %v3028 = vunpack.c.l.b16 %v2772
        %v3029 = vunpack.c.l.b16 %v2773
        %v3030 = vunpack.c.l.b16 %v2774
        %v3031 = vunpack.c.l.b16 %v2775
        %v3032 = vunpack.c.l.b16 %v2776
        %v3033 = vunpack.c.l.b16 %v2777
        %v3034 = vunpack.c.l.b16 %v2778
        %v3035 = vunpack.c.l.b16 %v2779
        %v3036 = vunpack.c.l.b16 %v2780
        %v3037 = vunpack.c.l.b16 %v2781
        %v3038 = vunpack.c.l.b16 %v2782
        %v3039 = vunpack.c.l.b16 %v2783
        %v3040 = vunpack.c.l.b16 %v2784
        %v3041 = vunpack.c.l.b16 %v2785
        %v3042 = vunpack.c.l.b16 %v2786
        %v3043 = vunpack.c.l.b16 %v2787
        %v3044 = vunpack.c.l.b16 %v2788
        %v3045 = vunpack.c.l.b16 %v2789
        %v3046 = vunpack.c.l.b16 %v2790
        %v3047 = vunpack.c.l.b16 %v2791
        %v3048 = vunpack.c.l.b16 %v2792
        %v3049 = vunpack.c.l.b16 %v2793
        %v3050 = vunpack.c.l.b16 %v2794
        %v3051 = vunpack.c.l.b16 %v2795
        %v3052 = vunpack.c.l.b16 %v2796
        %v3053 = vunpack.c.l.b16 %v2797
        %v3054 = vunpack.c.l.b16 %v2798
        %v3055 = vunpack.c.l.b16 %v2799
        %v3056 = vunpack.c.l.b16 %v2800
        %v3057 = vunpack.c.l.b16 %v2801
        %v3058 = vunpack.c.l.b16 %v2802
        %v3059 = vunpack.c.l.b16 %v2803
        %v3060 = vunpack.c.l.b16 %v2804
        %v3061 = vunpack.c.l.b16 %v2805
        %v3062 = vunpack.c.l.b16 %v2806
        %v3063 = vunpack.c.l.b16 %v2807
        %v3064 = vunpack.c.l.b16 %v2808
        %v3065 = vunpack.c.l.b16 %v2809
        %v3066 = vunpack.c.l.b16 %v2810
        %v3067 = vunpack.c.l.b16 %v2811
        %v3068 = vunpack.c.l.b16 %v2812
        %v3069 = vunpack.c.l.b16 %v2813
        %v3070 = vunpack.c.l.b16 %v2814
        %v3071 = vunpack.c.l.b16 %v2815
        %v3072 = vunpack.c.l.b16 %v2816
        %v3073 = vunpack.c.l.b16 %v2817
        %v3074 = vunpack.c.l.b16 %v2818
        %v3075 = vunpack.c.l.b16 %v2819
        %v3076 = vunpack.c.l.b16 %v2820
        %v3077 = vunpack.c.l.b16 %v2821
        %v3078 = vunpack.c.l.b16 %v2822
        %v3079 = vunpack.c.l.b16 %v2823
        %v3080 = vunpack.c.l.b16 %v2824
        %v3081 = vunpack.c.l.b16 %v2825
        %v3082 = vunpack.c.l.b16 %v2826
        %v3083 = vunpack.c.l.b16 %v2827
        %v3084 = vunpack.c.l.b16 %v2828
        %v3085 = vunpack.c.l.b16 %v2829
        %v3086 = vunpack.c.l.b16 %v2830
        %v3087 = vunpack.c.l.b16 %v2831
        %v3088 = vunpack.c.l.b16 %v2832
        %v3089 = vunpack.c.l.b16 %v2833
        %v3090 = vunpack.c.l.b16 %v2834
        %v3091 = vunpack.c.l.b16 %v2835
        %v3092 = vunpack.c.l.b16 %v2836
        %v3093 = vunpack.c.l.b16 %v2837
        %v3094 = vunpack.c.l.b16 %v2838
        %v3095 = vunpack.c.l.b16 %v2839
        %v3096 = vunpack.c.l.b16 %v2840
        %v3097 = vunpack.c.l.b16 %v2841
        %v3098 = vunpack.c.l.b16 %v2842
        %v3099 = vunpack.c.l.b16 %v2843
        %v3100 = vunpack.c.l.b16 %v2844
        %v3101 = vunpack.c.l.b16 %v2845
        %v3102 = vunpack.c.l.b16 %v2846
        %v3103 = vunpack.c.l.b16 %v2847
        %v3104 = vunpack.c.l.b16 %v2848
        %v3105 = vunpack.c.l.b16 %v2849
        %v3106 = vunpack.c.l.b16 %v2850
        %v3107 = vunpack.c.l.b16 %v2851
        %v3108 = vunpack.c.l.b16 %v2852
        %v3109 = vunpack.c.l.b16 %v2853
        %v3110 = vunpack.c.l.b16 %v2854
        %v3111 = vunpack.c.l.b16 %v2855
        %v3112 = vunpack.c.l.b16 %v2856
        %v3113 = vunpack.c.l.b16 %v2857
        %v3114 = vunpack.c.l.b16 %v2858
        %v3115 = vunpack.c.l.b16 %v2859
        %v3116 = vunpack.c.l.b16 %v2860
        %v3117 = vunpack.c.l.b16 %v2861
        %v3118 = vunpack.c.l.b16 %v2862
        %v3119 = vunpack.c.l.b16 %v2863
        %v3120 = vunpack.c.l.b16 %v2864
        %v3121 = vunpack.c.l.b16 %v2865
        %v3122 = vpack.c.b16 %v2995, %v2994
        %v3123 = vpack.c.b16 %v2997, %v2996
        %v3124 = vpack.c.b16 %v2999, %v2998
        %v3125 = vpack.c.b16 %v3001, %v3000
        %v3126 = vpack.c.b16 %v3003, %v3002
        %v3127 = vpack.c.b16 %v3005, %v3004
        %v3128 = vpack.c.b16 %v3007, %v3006
        %v3129 = vpack.c.b16 %v3009, %v3008
        %v3130 = vpack.c.b16 %v3011, %v3010
        %v3131 = vpack.c.b16 %v3013, %v3012
        %v3132 = vpack.c.b16 %v3015, %v3014
        %v3133 = vpack.c.b16 %v3017, %v3016
        %v3134 = vpack.c.b16 %v3019, %v3018
        %v3135 = vpack.c.b16 %v3021, %v3020
        %v3136 = vpack.c.b16 %v3023, %v3022
        %v3137 = vpack.c.b16 %v3025, %v3024
        %v3138 = vpack.c.b16 %v3027, %v3026
        %v3139 = vpack.c.b16 %v3029, %v3028
        %v3140 = vpack.c.b16 %v3031, %v3030
        %v3141 = vpack.c.b16 %v3033, %v3032
        %v3142 = vpack.c.b16 %v3035, %v3034
        %v3143 = vpack.c.b16 %v3037, %v3036
        %v3144 = vpack.c.b16 %v3039, %v3038
        %v3145 = vpack.c.b16 %v3041, %v3040
        %v3146 = vpack.c.b16 %v3043, %v3042
        %v3147 = vpack.c.b16 %v3045, %v3044
        %v3148 = vpack.c.b16 %v3047, %v3046
        %v3149 = vpack.c.b16 %v3049, %v3048
        %v3150 = vpack.c.b16 %v3051, %v3050
        %v3151 = vpack.c.b16 %v3053, %v3052
        %v3152 = vpack.c.b16 %v3055, %v3054
        %v3153 = vpack.c.b16 %v3057, %v3056
        %v3154 = vpack.c.b16 %v3059, %v3058
        %v3155 = vpack.c.b16 %v3061, %v3060
        %v3156 = vpack.c.b16 %v3063, %v3062
        %v3157 = vpack.c.b16 %v3065, %v3064
        %v3158 = vpack.c.b16 %v3067, %v3066
        %v3159 = vpack.c.b16 %v3069, %v3068
        %v3160 = vpack.c.b16 %v3071, %v3070
        %v3161 = vpack.c.b16 %v3073, %v3072
        %v3162 = vpack.c.b16 %v3075, %v3074
        %v3163 = vpack.c.b16 %v3077, %v3076
        %v3164 = vpack.c.b16 %v3079, %v3078
        %v3165 = vpack.c.b16 %v3081, %v3080
        %v3166 = vpack.c.b16 %v3083, %v3082
        %v3167 = vpack.c.b16 %v3085, %v3084
        %v3168 = vpack.c.b16 %v3087, %v3086
        %v3169 = vpack.c.b16 %v3089, %v3088
        %v3170 = vpack.c.b16 %v3091, %v3090
        %v3171 = vpack.c.b16 %v3093, %v3092
        %v3172 = vpack.c.b16 %v3095, %v3094
        %v3173 = vpack.c.b16 %v3097, %v3096
        %v3174 = vpack.c.b16 %v3099, %v3098
        %v3175 = vpack.c.b16 %v3101, %v3100
        %v3176 = vpack.c.b16 %v3103, %v3102
        %v3177 = vpack.c.b16 %v3105, %v3104
        %v3178 = vpack.c.b16 %v3107, %v3106
        %v3179 = vpack.c.b16 %v3109, %v3108
        %v3180 = vpack.c.b16 %v3111, %v3110
        %v3181 = vpack.c.b16 %v3113, %v3112
        %v3182 = vpack.c.b16 %v3115, %v3114
        %v3183 = vpack.c.b16 %v3117, %v3116
        %v3184 = vpack.c.b16 %v3119, %v3118
        %v3185 = vpack.c.b16 %v3121, %v3120
        %3250 = vmatprep.subr.bf16.mxu0 0
        %3251 = vmatpush1.bf16.msra.mxu0 %v3122
        %3252 = vmatprep.subr.bf16.mxu0 0
        %3253 = vmatpush1.bf16.msra.mxu0 %v3123
        %3254 = vmatprep.subr.bf16.mxu0 0
        %3255 = vmatpush1.bf16.msra.mxu0 %v3124
        %3256 = vmatprep.subr.bf16.mxu0 0
        %3257 = vmatpush1.bf16.msra.mxu0 %v3125
        %3258 = vmatprep.subr.bf16.mxu0 0
        %3259 = vmatpush1.bf16.msra.mxu0 %v3126
        %3260 = vmatprep.subr.bf16.mxu0 0
        %3261 = vmatpush1.bf16.msra.mxu0 %v3127
        %3262 = vmatprep.subr.bf16.mxu0 0
        %3263 = vmatpush1.bf16.msra.mxu0 %v3128
        %3264 = vmatprep.subr.bf16.mxu0 0
        %3265 = vmatpush1.bf16.msra.mxu0 %v3129
        %3266 = vmatprep.subr.bf16.mxu0 0
        %3267 = vmatpush1.bf16.msra.mxu0 %v3130
        %3268 = vmatprep.subr.bf16.mxu0 0
        %3269 = vmatpush1.bf16.msra.mxu0 %v3131
        %3270 = vmatprep.subr.bf16.mxu0 0
        %3271 = vmatpush1.bf16.msra.mxu0 %v3132
        %3272 = vmatprep.subr.bf16.mxu0 0
        %3273 = vmatpush1.bf16.msra.mxu0 %v3133
        %3274 = vmatprep.subr.bf16.mxu0 0
        %3275 = vmatpush1.bf16.msra.mxu0 %v3134
        %3276 = vmatprep.subr.bf16.mxu0 0
        %3277 = vmatpush1.bf16.msra.mxu0 %v3135
        %3278 = vmatprep.subr.bf16.mxu0 0
        %3279 = vmatpush1.bf16.msra.mxu0 %v3136
        %3280 = vmatprep.subr.bf16.mxu0 0
        %3281 = vmatpush1.bf16.msra.mxu0 %v3137
        %3282 = vmatprep.mubr.bf16.mxu0 %v2731
        %3283 = vmatmul.mubr.bf16.gmra.mrb[0].mxu0 %v2730
        %v3284 = vpop.f32.mrb[0].mxu0
        %v3285 = vadd.f32 0.0, %v3284
        %v3286 = vpop.f32.mrb[0].mxu0
        %v3287 = vpop.f32.mrb[0].mxu0
        %v3288 = vpop.f32.mrb[0].mxu0
        %3289 = vdwg.mxu0
        %3290 = vmatprep.subr.bf16.mxu0 0
        %3291 = vmatpush1.bf16.msra.mxu0 %v3138
        %3292 = vmatprep.subr.bf16.mxu0 0
        %3293 = vmatpush1.bf16.msra.mxu0 %v3139
        %3294 = vmatprep.subr.bf16.mxu0 0
        %3295 = vmatpush1.bf16.msra.mxu0 %v3140
        %3296 = vmatprep.subr.bf16.mxu0 0
        %3297 = vmatpush1.bf16.msra.mxu0 %v3141
        %3298 = vmatprep.subr.bf16.mxu0 0
        %3299 = vmatpush1.bf16.msra.mxu0 %v3142
        %3300 = vmatprep.subr.bf16.mxu0 0
        %3301 = vmatpush1.bf16.msra.mxu0 %v3143
        %3302 = vmatprep.subr.bf16.mxu0 0
        %3303 = vmatpush1.bf16.msra.mxu0 %v3144
        %3304 = vmatprep.subr.bf16.mxu0 0
        %3305 = vmatpush1.bf16.msra.mxu0 %v3145
        %3306 = vmatprep.subr.bf16.mxu0 0
        %3307 = vmatpush1.bf16.msra.mxu0 %v3146
        %3308 = vmatprep.subr.bf16.mxu0 0
        %3309 = vmatpush1.bf16.msra.mxu0 %v3147
        %3310 = vmatprep.subr.bf16.mxu0 0
        %3311 = vmatpush1.bf16.msra.mxu0 %v3148
        %3312 = vmatprep.subr.bf16.mxu0 0
        %3313 = vmatpush1.bf16.msra.mxu0 %v3149
        %3314 = vmatprep.subr.bf16.mxu0 0
        %3315 = vmatpush1.bf16.msra.mxu0 %v3150
        %3316 = vmatprep.subr.bf16.mxu0 0
        %3317 = vmatpush1.bf16.msra.mxu0 %v3151
        %3318 = vmatprep.subr.bf16.mxu0 0
        %3319 = vmatpush1.bf16.msra.mxu0 %v3152
        %3320 = vmatprep.subr.bf16.mxu0 0
        %3321 = vmatpush1.bf16.msra.mxu0 %v3153
        %3322 = vmatprep.mubr.bf16.mxu0 %v2733
        %3323 = vmatmul.mubr.bf16.gmra.mrb[0].mxu0 %v2732
        %v3324 = vpop.f32.mrb[0].mxu0
        %v3325 = vadd.f32 %v3285, %v3324
        %v3326 = vpop.f32.mrb[0].mxu0
        %v3327 = vpop.f32.mrb[0].mxu0
        %v3328 = vpop.f32.mrb[0].mxu0
        %3329 = vdwg.mxu0
        %3330 = vmatprep.subr.bf16.mxu0 0
        %3331 = vmatpush1.bf16.msra.mxu0 %v3154
        %3332 = vmatprep.subr.bf16.mxu0 0
        %3333 = vmatpush1.bf16.msra.mxu0 %v3155
        %3334 = vmatprep.subr.bf16.mxu0 0
        %3335 = vmatpush1.bf16.msra.mxu0 %v3156
        %3336 = vmatprep.subr.bf16.mxu0 0
        %3337 = vmatpush1.bf16.msra.mxu0 %v3157
        %3338 = vmatprep.subr.bf16.mxu0 0
        %3339 = vmatpush1.bf16.msra.mxu0 %v3158
        %3340 = vmatprep.subr.bf16.mxu0 0
        %3341 = vmatpush1.bf16.msra.mxu0 %v3159
        %3342 = vmatprep.subr.bf16.mxu0 0
        %3343 = vmatpush1.bf16.msra.mxu0 %v3160
        %3344 = vmatprep.subr.bf16.mxu0 0
        %3345 = vmatpush1.bf16.msra.mxu0 %v3161
        %3346 = vmatprep.subr.bf16.mxu0 0
        %3347 = vmatpush1.bf16.msra.mxu0 %v3162
        %3348 = vmatprep.subr.bf16.mxu0 0
        %3349 = vmatpush1.bf16.msra.mxu0 %v3163
        %3350 = vmatprep.subr.bf16.mxu0 0
        %3351 = vmatpush1.bf16.msra.mxu0 %v3164
        %3352 = vmatprep.subr.bf16.mxu0 0
        %3353 = vmatpush1.bf16.msra.mxu0 %v3165
        %3354 = vmatprep.subr.bf16.mxu0 0
        %3355 = vmatpush1.bf16.msra.mxu0 %v3166
        %3356 = vmatprep.subr.bf16.mxu0 0
        %3357 = vmatpush1.bf16.msra.mxu0 %v3167
        %3358 = vmatprep.subr.bf16.mxu0 0
        %3359 = vmatpush1.bf16.msra.mxu0 %v3168
        %3360 = vmatprep.subr.bf16.mxu0 0
        %3361 = vmatpush1.bf16.msra.mxu0 %v3169
        %3362 = vmatprep.mubr.bf16.mxu0 %v2735
        %3363 = vmatmul.mubr.bf16.gmra.mrb[0].mxu0 %v2734
        %v3364 = vpop.f32.mrb[0].mxu0
        %v3365 = vadd.f32 %v3325, %v3364
        %v3366 = vpop.f32.mrb[0].mxu0
        %v3367 = vpop.f32.mrb[0].mxu0
        %v3368 = vpop.f32.mrb[0].mxu0
        %3369 = vdwg.mxu0
        %3370 = vmatprep.subr.bf16.mxu0 0
        %3371 = vmatpush1.bf16.msra.mxu0 %v3170
        %3372 = vmatprep.subr.bf16.mxu0 0
        %3373 = vmatpush1.bf16.msra.mxu0 %v3171
        %3374 = vmatprep.subr.bf16.mxu0 0
        %3375 = vmatpush1.bf16.msra.mxu0 %v3172
        %3376 = vmatprep.subr.bf16.mxu0 0
        %3377 = vmatpush1.bf16.msra.mxu0 %v3173
        %3378 = vmatprep.subr.bf16.mxu0 0
        %3379 = vmatpush1.bf16.msra.mxu0 %v3174
        %3380 = vmatprep.subr.bf16.mxu0 0
        %3381 = vmatpush1.bf16.msra.mxu0 %v3175
        %3382 = vmatprep.subr.bf16.mxu0 0
        %3383 = vmatpush1.bf16.msra.mxu0 %v3176
        %3384 = vmatprep.subr.bf16.mxu0 0
        %3385 = vmatpush1.bf16.msra.mxu0 %v3177
        %3386 = vmatprep.subr.bf16.mxu0 0
        %3387 = vmatpush1.bf16.msra.mxu0 %v3178
        %3388 = vmatprep.subr.bf16.mxu0 0
        %3389 = vmatpush1.bf16.msra.mxu0 %v3179
        %3390 = vmatprep.subr.bf16.mxu0 0
        %3391 = vmatpush1.bf16.msra.mxu0 %v3180
        %3392 = vmatprep.subr.bf16.mxu0 0
        %3393 = vmatpush1.bf16.msra.mxu0 %v3181
        %3394 = vmatprep.subr.bf16.mxu0 0
        %3395 = vmatpush1.bf16.msra.mxu0 %v3182
        %3396 = vmatprep.subr.bf16.mxu0 0
        %3397 = vmatpush1.bf16.msra.mxu0 %v3183
        %3398 = vmatprep.subr.bf16.mxu0 0
        %3399 = vmatpush1.bf16.msra.mxu0 %v3184
        %3400 = vmatprep.subr.bf16.mxu0 0
        %3401 = vmatpush1.bf16.msra.mxu0 %v3185
        %3402 = vmatprep.mubr.bf16.mxu0 %v2737
        %3403 = vmatmul.mubr.bf16.gmra.mrb[0].mxu0 %v2736
        %v3404 = vpop.f32.mrb[0].mxu0
        %v3405 = vadd.f32 %v3365, %v3404
        %v3406 = vpop.f32.mrb[0].mxu0
        %v3407 = vpop.f32.mrb[0].mxu0
        %v3408 = vpop.f32.mrb[0].mxu0
        %3409 = vdwg.mxu0
        %v3410 = vpack.c.bf16 %v421, %v421
        %v3411 = vpack.c.bf16 %v1395, %v1395
        %v3412 = vpack.c.bf16 %v422, %v422
        %v3413 = vpack.c.bf16 %v1396, %v1396
        %v3414 = vpack.c.bf16 %v423, %v423
        %v3415 = vpack.c.bf16 %v1397, %v1397
        %v3416 = vpack.c.bf16 %v424, %v424
        %v3417 = vpack.c.bf16 %v1398, %v1398
        %3418 = vmatprep.subr.bf16.mxu0 0
        %3419 = vmatpush1.bf16.msra.mxu0 %v3122
        %3420 = vmatprep.subr.bf16.mxu0 0
        %3421 = vmatpush1.bf16.msra.mxu0 %v3123
        %3422 = vmatprep.subr.bf16.mxu0 0
        %3423 = vmatpush1.bf16.msra.mxu0 %v3124
        %3424 = vmatprep.subr.bf16.mxu0 0
        %3425 = vmatpush1.bf16.msra.mxu0 %v3125
        %3426 = vmatprep.subr.bf16.mxu0 0
        %3427 = vmatpush1.bf16.msra.mxu0 %v3126
        %3428 = vmatprep.subr.bf16.mxu0 0
        %3429 = vmatpush1.bf16.msra.mxu0 %v3127
        %3430 = vmatprep.subr.bf16.mxu0 0
        %3431 = vmatpush1.bf16.msra.mxu0 %v3128
        %3432 = vmatprep.subr.bf16.mxu0 0
        %3433 = vmatpush1.bf16.msra.mxu0 %v3129
        %3434 = vmatprep.subr.bf16.mxu0 0
        %3435 = vmatpush1.bf16.msra.mxu0 %v3130
        %3436 = vmatprep.subr.bf16.mxu0 0
        %3437 = vmatpush1.bf16.msra.mxu0 %v3131
        %3438 = vmatprep.subr.bf16.mxu0 0
        %3439 = vmatpush1.bf16.msra.mxu0 %v3132
        %3440 = vmatprep.subr.bf16.mxu0 0
        %3441 = vmatpush1.bf16.msra.mxu0 %v3133
        %3442 = vmatprep.subr.bf16.mxu0 0
        %3443 = vmatpush1.bf16.msra.mxu0 %v3134
        %3444 = vmatprep.subr.bf16.mxu0 0
        %3445 = vmatpush1.bf16.msra.mxu0 %v3135
        %3446 = vmatprep.subr.bf16.mxu0 0
        %3447 = vmatpush1.bf16.msra.mxu0 %v3136
        %3448 = vmatprep.subr.bf16.mxu0 0
        %3449 = vmatpush1.bf16.msra.mxu0 %v3137
        %3450 = vmatprep.mubr.bf16.mxu0 %v3411
        %3451 = vmatmul.mubr.bf16.gmra.mrb[0].mxu0 %v3410
        %v3452 = vpop.f32.mrb[0].mxu0
        %v3453 = vadd.f32 0.0, %v3452
        %v3454 = vpop.f32.mrb[0].mxu0
        %v3455 = vpop.f32.mrb[0].mxu0
        %v3456 = vpop.f32.mrb[0].mxu0
        %3457 = vdwg.mxu0
        %3458 = vmatprep.subr.bf16.mxu0 0
        %3459 = vmatpush1.bf16.msra.mxu0 %v3138
        %3460 = vmatprep.subr.bf16.mxu0 0
        %3461 = vmatpush1.bf16.msra.mxu0 %v3139
        %3462 = vmatprep.subr.bf16.mxu0 0
        %3463 = vmatpush1.bf16.msra.mxu0 %v3140
        %3464 = vmatprep.subr.bf16.mxu0 0
        %3465 = vmatpush1.bf16.msra.mxu0 %v3141
        %3466 = vmatprep.subr.bf16.mxu0 0
        %3467 = vmatpush1.bf16.msra.mxu0 %v3142
        %3468 = vmatprep.subr.bf16.mxu0 0
        %3469 = vmatpush1.bf16.msra.mxu0 %v3143
        %3470 = vmatprep.subr.bf16.mxu0 0
        %3471 = vmatpush1.bf16.msra.mxu0 %v3144
        %3472 = vmatprep.subr.bf16.mxu0 0
        %3473 = vmatpush1.bf16.msra.mxu0 %v3145
        %3474 = vmatprep.subr.bf16.mxu0 0
        %3475 = vmatpush1.bf16.msra.mxu0 %v3146
        %3476 = vmatprep.subr.bf16.mxu0 0
        %3477 = vmatpush1.bf16.msra.mxu0 %v3147
        %3478 = vmatprep.subr.bf16.mxu0 0
        %3479 = vmatpush1.bf16.msra.mxu0 %v3148
        %3480 = vmatprep.subr.bf16.mxu0 0
        %3481 = vmatpush1.bf16.msra.mxu0 %v3149
        %3482 = vmatprep.subr.bf16.mxu0 0
        %3483 = vmatpush1.bf16.msra.mxu0 %v3150
        %3484 = vmatprep.subr.bf16.mxu0 0
        %3485 = vmatpush1.bf16.msra.mxu0 %v3151
        %3486 = vmatprep.subr.bf16.mxu0 0
        %3487 = vmatpush1.bf16.msra.mxu0 %v3152
        %3488 = vmatprep.subr.bf16.mxu0 0
        %3489 = vmatpush1.bf16.msra.mxu0 %v3153
        %3490 = vmatprep.mubr.bf16.mxu0 %v3413
        %3491 = vmatmul.mubr.bf16.gmra.mrb[0].mxu0 %v3412
        %v3492 = vpop.f32.mrb[0].mxu0
        %v3493 = vadd.f32 %v3453, %v3492
        %v3494 = vpop.f32.mrb[0].mxu0
        %v3495 = vpop.f32.mrb[0].mxu0
        %v3496 = vpop.f32.mrb[0].mxu0
        %3497 = vdwg.mxu0
        %3498 = vmatprep.subr.bf16.mxu0 0
        %3499 = vmatpush1.bf16.msra.mxu0 %v3154
        %3500 = vmatprep.subr.bf16.mxu0 0
        %3501 = vmatpush1.bf16.msra.mxu0 %v3155
        %3502 = vmatprep.subr.bf16.mxu0 0
        %3503 = vmatpush1.bf16.msra.mxu0 %v3156
        %3504 = vmatprep.subr.bf16.mxu0 0
        %3505 = vmatpush1.bf16.msra.mxu0 %v3157
        %3506 = vmatprep.subr.bf16.mxu0 0
        %3507 = vmatpush1.bf16.msra.mxu0 %v3158
        %3508 = vmatprep.subr.bf16.mxu0 0
        %3509 = vmatpush1.bf16.msra.mxu0 %v3159
        %3510 = vmatprep.subr.bf16.mxu0 0
        %3511 = vmatpush1.bf16.msra.mxu0 %v3160
        %3512 = vmatprep.subr.bf16.mxu0 0
        %3513 = vmatpush1.bf16.msra.mxu0 %v3161
        %3514 = vmatprep.subr.bf16.mxu0 0
        %3515 = vmatpush1.bf16.msra.mxu0 %v3162
        %3516 = vmatprep.subr.bf16.mxu0 0
        %3517 = vmatpush1.bf16.msra.mxu0 %v3163
        %3518 = vmatprep.subr.bf16.mxu0 0
        %3519 = vmatpush1.bf16.msra.mxu0 %v3164
        %3520 = vmatprep.subr.bf16.mxu0 0
        %3521 = vmatpush1.bf16.msra.mxu0 %v3165
        %3522 = vmatprep.subr.bf16.mxu0 0
        %3523 = vmatpush1.bf16.msra.mxu0 %v3166
        %3524 = vmatprep.subr.bf16.mxu0 0
        %3525 = vmatpush1.bf16.msra.mxu0 %v3167
        %3526 = vmatprep.subr.bf16.mxu0 0
        %3527 = vmatpush1.bf16.msra.mxu0 %v3168
        %3528 = vmatprep.subr.bf16.mxu0 0
        %3529 = vmatpush1.bf16.msra.mxu0 %v3169
        %3530 = vmatprep.mubr.bf16.mxu0 %v3415
        %3531 = vmatmul.mubr.bf16.gmra.mrb[0].mxu0 %v3414
        %v3532 = vpop.f32.mrb[0].mxu0
        %v3533 = vadd.f32 %v3493, %v3532
        %v3534 = vpop.f32.mrb[0].mxu0
        %v3535 = vpop.f32.mrb[0].mxu0
        %v3536 = vpop.f32.mrb[0].mxu0
        %3537 = vdwg.mxu0
        %3538 = vmatprep.subr.bf16.mxu0 0
        %3539 = vmatpush1.bf16.msra.mxu0 %v3170
        %3540 = vmatprep.subr.bf16.mxu0 0
        %3541 = vmatpush1.bf16.msra.mxu0 %v3171
        %3542 = vmatprep.subr.bf16.mxu0 0
        %3543 = vmatpush1.bf16.msra.mxu0 %v3172
        %3544 = vmatprep.subr.bf16.mxu0 0
        %3545 = vmatpush1.bf16.msra.mxu0 %v3173
        %3546 = vmatprep.subr.bf16.mxu0 0
        %3547 = vmatpush1.bf16.msra.mxu0 %v3174
        %3548 = vmatprep.subr.bf16.mxu0 0
        %3549 = vmatpush1.bf16.msra.mxu0 %v3175
        %3550 = vmatprep.subr.bf16.mxu0 0
        %3551 = vmatpush1.bf16.msra.mxu0 %v3176
        %3552 = vmatprep.subr.bf16.mxu0 0
        %3553 = vmatpush1.bf16.msra.mxu0 %v3177
        %3554 = vmatprep.subr.bf16.mxu0 0
        %3555 = vmatpush1.bf16.msra.mxu0 %v3178
        %3556 = vmatprep.subr.bf16.mxu0 0
        %3557 = vmatpush1.bf16.msra.mxu0 %v3179
        %3558 = vmatprep.subr.bf16.mxu0 0
        %3559 = vmatpush1.bf16.msra.mxu0 %v3180
        %3560 = vmatprep.subr.bf16.mxu0 0
        %3561 = vmatpush1.bf16.msra.mxu0 %v3181
        %3562 = vmatprep.subr.bf16.mxu0 0
        %3563 = vmatpush1.bf16.msra.mxu0 %v3182
        %3564 = vmatprep.subr.bf16.mxu0 0
        %3565 = vmatpush1.bf16.msra.mxu0 %v3183
        %3566 = vmatprep.subr.bf16.mxu0 0
        %3567 = vmatpush1.bf16.msra.mxu0 %v3184
        %3568 = vmatprep.subr.bf16.mxu0 0
        %3569 = vmatpush1.bf16.msra.mxu0 %v3185
        %3570 = vmatprep.mubr.bf16.mxu0 %v3417
        %3571 = vmatmul.mubr.bf16.gmra.mrb[0].mxu0 %v3416
        %v3572 = vpop.f32.mrb[0].mxu0
        %v3573 = vadd.f32 %v3533, %v3572
        %v3574 = vpop.f32.mrb[0].mxu0
        %v3575 = vpop.f32.mrb[0].mxu0
        %v3576 = vpop.f32.mrb[0].mxu0
        %3577 = vdwg.mxu0
        %v3578 = vld [vmem:[%s7] sm:$0xf]
        %v3579 = vld [vmem:[%s8] sm:$0xf]
        %3581 = vset.pattern.permute.xlu0 0
        %3582 = vperm.xlu0 %3581, %v3579
        %v3583 = vpop.permute.xlu0 %3582
        %vm3585 = vcmask 31744
        %v3587 = vsel %vm3585, %v3578, 0
        %vm3589 = vcmask 1043456
        %v3591 = vsel %vm3589, %v2691, 0
        %v3594 = vsel %vm3589, %v2692, 0
        %v3597 = vsel %vm3589, %v2693, 0
        %v3600 = vsel %vm3589, %v2694, 0
        %v3603 = vsel %vm3589, %v2695, 0
        %v3606 = vsel %vm3589, %v2696, 0
        %v3609 = vsel %vm3589, %v2697, 0
        %v3612 = vsel %vm3589, %v2698, 0
        %3614 = vmatprep.subr.mxu0 %v3594
        %3615 = vmatpush1.msra.mxu0 %v3591
        %3616 = vmatprep.subr.mxu0 0.0
        %3617 = vmatpush1.msra.mxu0 0.0
        %3618 = vmatprep.subr.mxu0 0.0
        %3619 = vmatpush1.msra.mxu0 0.0
        %3620 = vmatprep.subr.mxu0 0.0
        %3621 = vmatpush1.msra.mxu0 0.0
        %3622 = vmatprep.subr.mxu0 0.0
        %3623 = vmatpush1.msra.mxu0 0.0
        %3624 = vmatprep.subr.mxu0 0.0
        %3625 = vmatpush1.msra.mxu0 0.0
        %3626 = vmatprep.subr.mxu0 0.0
        %3627 = vmatpush1.msra.mxu0 0.0
        %3628 = vmatprep.subr.mxu0 0.0
        %3629 = vmatpush1.msra.mxu0 0.0
        %3630 = vmatprep.subr.mxu0 0.0
        %3631 = vmatpush1.msra.mxu0 0.0
        %3632 = vmatprep.subr.mxu0 0.0
        %3633 = vmatpush1.msra.mxu0 0.0
        %3634 = vmatprep.subr.mxu0 0.0
        %3635 = vmatpush1.msra.mxu0 0.0
        %3636 = vmatprep.subr.mxu0 0.0
        %3637 = vmatpush1.msra.mxu0 0.0
        %3638 = vmatprep.subr.mxu0 0.0
        %3639 = vmatpush1.msra.mxu0 0.0
        %3640 = vmatprep.subr.mxu0 0.0
        %3641 = vmatpush1.msra.mxu0 0.0
        %3642 = vmatprep.subr.mxu0 0.0
        %3643 = vmatpush1.msra.mxu0 0.0
        %3644 = vmatprep.subr.mxu0 0.0
        %3645 = vmatpush1.msra.mxu0 0.0
        %3646 = vmatprep.subr.mxu0 0.0
        %3647 = vmatpush1.msra.mxu0 0.0
        %3648 = vmatprep.subr.mxu0 0.0
        %3649 = vmatpush1.msra.mxu0 0.0
        %3650 = vmatprep.subr.mxu0 0.0
        %3651 = vmatpush1.msra.mxu0 0.0
        %3652 = vmatprep.subr.mxu0 0.0
        %3653 = vmatpush1.msra.mxu0 0.0
        %3654 = vmatprep.subr.mxu0 0.0
        %3655 = vmatpush1.msra.mxu0 0.0
        %3656 = vmatprep.subr.mxu0 0.0
        %3657 = vmatpush1.msra.mxu0 0.0
        %3658 = vmatprep.subr.mxu0 0.0
        %3659 = vmatpush1.msra.mxu0 0.0
        %3660 = vmatprep.subr.mxu0 0.0
        %3661 = vmatpush1.msra.mxu0 0.0
        %3662 = vmatprep.subr.mxu0 0.0
        %3663 = vmatpush1.msra.mxu0 0.0
        %3664 = vmatprep.subr.mxu0 0.0
        %3665 = vmatpush1.msra.mxu0 0.0
        %3666 = vmatprep.subr.mxu0 0.0
        %3667 = vmatpush1.msra.mxu0 0.0
        %3668 = vmatprep.subr.mxu0 0.0
        %3669 = vmatpush1.msra.mxu0 0.0
        %3670 = vmatprep.subr.mxu0 0.0
        %3671 = vmatpush1.msra.mxu0 0.0
        %3672 = vmatprep.subr.mxu0 0.0
        %3673 = vmatpush1.msra.mxu0 0.0
        %3674 = vmatprep.subr.mxu0 0.0
        %3675 = vmatpush1.msra.mxu0 0.0
        %3676 = vmatprep.subr.mxu0 0.0
        %3677 = vmatpush1.msra.mxu0 0.0
        %3678 = vmatprep.mubr.f32.mxu0 0.0
        %3679 = vmatmul.mubr.f32.gmra.mrb[0].mxu0 %v3587
        %v3680 = vpop.f32.mrb[0].mxu0
        %v3681 = vadd.f32 %v3583, %v3680
        %v3682 = vpop.f32.mrb[0].mxu0
        %v3683 = vadd.f32 %v3583, %v3682
        %3684 = vdwg.mxu0
        %3685 = vmatprep.subr.mxu0 %v3600
        %3686 = vmatpush1.msra.mxu0 %v3597
        %3687 = vmatprep.subr.mxu0 0.0
        %3688 = vmatpush1.msra.mxu0 0.0
        %3689 = vmatprep.subr.mxu0 0.0
        %3690 = vmatpush1.msra.mxu0 0.0
        %3691 = vmatprep.subr.mxu0 0.0
        %3692 = vmatpush1.msra.mxu0 0.0
        %3693 = vmatprep.subr.mxu0 0.0
        %3694 = vmatpush1.msra.mxu0 0.0
        %3695 = vmatprep.subr.mxu0 0.0
        %3696 = vmatpush1.msra.mxu0 0.0
        %3697 = vmatprep.subr.mxu0 0.0
        %3698 = vmatpush1.msra.mxu0 0.0
        %3699 = vmatprep.subr.mxu0 0.0
        %3700 = vmatpush1.msra.mxu0 0.0
        %3701 = vmatprep.subr.mxu0 0.0
        %3702 = vmatpush1.msra.mxu0 0.0
        %3703 = vmatprep.subr.mxu0 0.0
        %3704 = vmatpush1.msra.mxu0 0.0
        %3705 = vmatprep.subr.mxu0 0.0
        %3706 = vmatpush1.msra.mxu0 0.0
        %3707 = vmatprep.subr.mxu0 0.0
        %3708 = vmatpush1.msra.mxu0 0.0
        %3709 = vmatprep.subr.mxu0 0.0
        %3710 = vmatpush1.msra.mxu0 0.0
        %3711 = vmatprep.subr.mxu0 0.0
        %3712 = vmatpush1.msra.mxu0 0.0
        %3713 = vmatprep.subr.mxu0 0.0
        %3714 = vmatpush1.msra.mxu0 0.0
        %3715 = vmatprep.subr.mxu0 0.0
        %3716 = vmatpush1.msra.mxu0 0.0
        %3717 = vmatprep.subr.mxu0 0.0
        %3718 = vmatpush1.msra.mxu0 0.0
        %3719 = vmatprep.subr.mxu0 0.0
        %3720 = vmatpush1.msra.mxu0 0.0
        %3721 = vmatprep.subr.mxu0 0.0
        %3722 = vmatpush1.msra.mxu0 0.0
        %3723 = vmatprep.subr.mxu0 0.0
        %3724 = vmatpush1.msra.mxu0 0.0
        %3725 = vmatprep.subr.mxu0 0.0
        %3726 = vmatpush1.msra.mxu0 0.0
        %3727 = vmatprep.subr.mxu0 0.0
        %3728 = vmatpush1.msra.mxu0 0.0
        %3729 = vmatprep.subr.mxu0 0.0
        %3730 = vmatpush1.msra.mxu0 0.0
        %3731 = vmatprep.subr.mxu0 0.0
        %3732 = vmatpush1.msra.mxu0 0.0
        %3733 = vmatprep.subr.mxu0 0.0
        %3734 = vmatpush1.msra.mxu0 0.0
        %3735 = vmatprep.subr.mxu0 0.0
        %3736 = vmatpush1.msra.mxu0 0.0
        %3737 = vmatprep.subr.mxu0 0.0
        %3738 = vmatpush1.msra.mxu0 0.0
        %3739 = vmatprep.subr.mxu0 0.0
        %3740 = vmatpush1.msra.mxu0 0.0
        %3741 = vmatprep.subr.mxu0 0.0
        %3742 = vmatpush1.msra.mxu0 0.0
        %3743 = vmatprep.subr.mxu0 0.0
        %3744 = vmatpush1.msra.mxu0 0.0
        %3745 = vmatprep.subr.mxu0 0.0
        %3746 = vmatpush1.msra.mxu0 0.0
        %3747 = vmatprep.subr.mxu0 0.0
        %3748 = vmatpush1.msra.mxu0 0.0
        %3749 = vmatprep.mubr.f32.mxu0 0.0
        %3750 = vmatmul.mubr.f32.gmra.mrb[0].mxu0 %v3587
        %v3751 = vpop.f32.mrb[0].mxu0
        %v3752 = vadd.f32 %v3583, %v3751
        %v3753 = vpop.f32.mrb[0].mxu0
        %v3754 = vadd.f32 %v3583, %v3753
        %3755 = vdwg.mxu0
        %3756 = vmatprep.subr.mxu0 %v3606
        %3757 = vmatpush1.msra.mxu0 %v3603
        %3758 = vmatprep.subr.mxu0 0.0
        %3759 = vmatpush1.msra.mxu0 0.0
        %3760 = vmatprep.subr.mxu0 0.0
        %3761 = vmatpush1.msra.mxu0 0.0
        %3762 = vmatprep.subr.mxu0 0.0
        %3763 = vmatpush1.msra.mxu0 0.0
        %3764 = vmatprep.subr.mxu0 0.0
        %3765 = vmatpush1.msra.mxu0 0.0
        %3766 = vmatprep.subr.mxu0 0.0
        %3767 = vmatpush1.msra.mxu0 0.0
        %3768 = vmatprep.subr.mxu0 0.0
        %3769 = vmatpush1.msra.mxu0 0.0
        %3770 = vmatprep.subr.mxu0 0.0
        %3771 = vmatpush1.msra.mxu0 0.0
        %3772 = vmatprep.subr.mxu0 0.0
        %3773 = vmatpush1.msra.mxu0 0.0
        %3774 = vmatprep.subr.mxu0 0.0
        %3775 = vmatpush1.msra.mxu0 0.0
        %3776 = vmatprep.subr.mxu0 0.0
        %3777 = vmatpush1.msra.mxu0 0.0
        %3778 = vmatprep.subr.mxu0 0.0
        %3779 = vmatpush1.msra.mxu0 0.0
        %3780 = vmatprep.subr.mxu0 0.0
        %3781 = vmatpush1.msra.mxu0 0.0
        %3782 = vmatprep.subr.mxu0 0.0
        %3783 = vmatpush1.msra.mxu0 0.0
        %3784 = vmatprep.subr.mxu0 0.0
        %3785 = vmatpush1.msra.mxu0 0.0
        %3786 = vmatprep.subr.mxu0 0.0
        %3787 = vmatpush1.msra.mxu0 0.0
        %3788 = vmatprep.subr.mxu0 0.0
        %3789 = vmatpush1.msra.mxu0 0.0
        %3790 = vmatprep.subr.mxu0 0.0
        %3791 = vmatpush1.msra.mxu0 0.0
        %3792 = vmatprep.subr.mxu0 0.0
        %3793 = vmatpush1.msra.mxu0 0.0
        %3794 = vmatprep.subr.mxu0 0.0
        %3795 = vmatpush1.msra.mxu0 0.0
        %3796 = vmatprep.subr.mxu0 0.0
        %3797 = vmatpush1.msra.mxu0 0.0
        %3798 = vmatprep.subr.mxu0 0.0
        %3799 = vmatpush1.msra.mxu0 0.0
        %3800 = vmatprep.subr.mxu0 0.0
        %3801 = vmatpush1.msra.mxu0 0.0
        %3802 = vmatprep.subr.mxu0 0.0
        %3803 = vmatpush1.msra.mxu0 0.0
        %3804 = vmatprep.subr.mxu0 0.0
        %3805 = vmatpush1.msra.mxu0 0.0
        %3806 = vmatprep.subr.mxu0 0.0
        %3807 = vmatpush1.msra.mxu0 0.0
        %3808 = vmatprep.subr.mxu0 0.0
        %3809 = vmatpush1.msra.mxu0 0.0
        %3810 = vmatprep.subr.mxu0 0.0
        %3811 = vmatpush1.msra.mxu0 0.0
        %3812 = vmatprep.subr.mxu0 0.0
        %3813 = vmatpush1.msra.mxu0 0.0
        %3814 = vmatprep.subr.mxu0 0.0
        %3815 = vmatpush1.msra.mxu0 0.0
        %3816 = vmatprep.subr.mxu0 0.0
        %3817 = vmatpush1.msra.mxu0 0.0
        %3818 = vmatprep.subr.mxu0 0.0
        %3819 = vmatpush1.msra.mxu0 0.0
        %3820 = vmatprep.mubr.f32.mxu0 0.0
        %3821 = vmatmul.mubr.f32.gmra.mrb[0].mxu0 %v3587
        %v3822 = vpop.f32.mrb[0].mxu0
        %v3823 = vadd.f32 %v3583, %v3822
        %v3824 = vpop.f32.mrb[0].mxu0
        %v3825 = vadd.f32 %v3583, %v3824
        %3826 = vdwg.mxu0
        %3827 = vmatprep.subr.mxu0 %v3612
        %3828 = vmatpush1.msra.mxu0 %v3609
        %3829 = vmatprep.subr.mxu0 0.0
        %3830 = vmatpush1.msra.mxu0 0.0
        %3831 = vmatprep.subr.mxu0 0.0
        %3832 = vmatpush1.msra.mxu0 0.0
        %3833 = vmatprep.subr.mxu0 0.0
        %3834 = vmatpush1.msra.mxu0 0.0
        %3835 = vmatprep.subr.mxu0 0.0
        %3836 = vmatpush1.msra.mxu0 0.0
        %3837 = vmatprep.subr.mxu0 0.0
        %3838 = vmatpush1.msra.mxu0 0.0
        %3839 = vmatprep.subr.mxu0 0.0
        %3840 = vmatpush1.msra.mxu0 0.0
        %3841 = vmatprep.subr.mxu0 0.0
        %3842 = vmatpush1.msra.mxu0 0.0
        %3843 = vmatprep.subr.mxu0 0.0
        %3844 = vmatpush1.msra.mxu0 0.0
        %3845 = vmatprep.subr.mxu0 0.0
        %3846 = vmatpush1.msra.mxu0 0.0
        %3847 = vmatprep.subr.mxu0 0.0
        %3848 = vmatpush1.msra.mxu0 0.0
        %3849 = vmatprep.subr.mxu0 0.0
        %3850 = vmatpush1.msra.mxu0 0.0
        %3851 = vmatprep.subr.mxu0 0.0
        %3852 = vmatpush1.msra.mxu0 0.0
        %3853 = vmatprep.subr.mxu0 0.0
        %3854 = vmatpush1.msra.mxu0 0.0
        %3855 = vmatprep.subr.mxu0 0.0
        %3856 = vmatpush1.msra.mxu0 0.0
        %3857 = vmatprep.subr.mxu0 0.0
        %3858 = vmatpush1.msra.mxu0 0.0
        %3859 = vmatprep.subr.mxu0 0.0
        %3860 = vmatpush1.msra.mxu0 0.0
        %3861 = vmatprep.subr.mxu0 0.0
        %3862 = vmatpush1.msra.mxu0 0.0
        %3863 = vmatprep.subr.mxu0 0.0
        %3864 = vmatpush1.msra.mxu0 0.0
        %3865 = vmatprep.subr.mxu0 0.0
        %3866 = vmatpush1.msra.mxu0 0.0
        %3867 = vmatprep.subr.mxu0 0.0
        %3868 = vmatpush1.msra.mxu0 0.0
        %3869 = vmatprep.subr.mxu0 0.0
        %3870 = vmatpush1.msra.mxu0 0.0
        %3871 = vmatprep.subr.mxu0 0.0
        %3872 = vmatpush1.msra.mxu0 0.0
        %3873 = vmatprep.subr.mxu0 0.0
        %3874 = vmatpush1.msra.mxu0 0.0
        %3875 = vmatprep.subr.mxu0 0.0
        %3876 = vmatpush1.msra.mxu0 0.0
        %3877 = vmatprep.subr.mxu0 0.0
        %3878 = vmatpush1.msra.mxu0 0.0
        %3879 = vmatprep.subr.mxu0 0.0
        %3880 = vmatpush1.msra.mxu0 0.0
        %3881 = vmatprep.subr.mxu0 0.0
        %3882 = vmatpush1.msra.mxu0 0.0
        %3883 = vmatprep.subr.mxu0 0.0
        %3884 = vmatpush1.msra.mxu0 0.0
        %3885 = vmatprep.subr.mxu0 0.0
        %3886 = vmatpush1.msra.mxu0 0.0
        %3887 = vmatprep.subr.mxu0 0.0
        %3888 = vmatpush1.msra.mxu0 0.0
        %3889 = vmatprep.subr.mxu0 0.0
        %3890 = vmatpush1.msra.mxu0 0.0
        %3891 = vmatprep.mubr.f32.mxu0 0.0
        %3892 = vmatmul.mubr.f32.gmra.mrb[0].mxu0 %v3587
        %v3893 = vpop.f32.mrb[0].mxu0
        %v3894 = vadd.f32 %v3583, %v3893
        %v3895 = vpop.f32.mrb[0].mxu0
        %v3896 = vadd.f32 %v3583, %v3895
        %3897 = vdwg.mxu0
        %s3898 = scalar_lea.vmem %s7, 4
        %v3899 = vld [vmem:[%s3898] sm:$0xf]
        %s3900 = scalar_lea.vmem %s8, 4
        %v3901 = vld [vmem:[%s3900] sm:$0xf]
        %3903 = vset.pattern.permute.xlu0 0
        %3904 = vperm.xlu0 %3903, %v3901
        %v3905 = vpop.permute.xlu0 %3904
        %v3908 = vsel %vm3585, %v3899, 0
        %v3911 = vsel %vm3589, %v3405, 0
        %3913 = vmatprep.subr.mxu0 0.0
        %3914 = vmatpush1.msra.mxu0 %v3911
        %3915 = vmatprep.subr.mxu0 0.0
        %3916 = vmatpush1.msra.mxu0 0.0
        %3917 = vmatprep.subr.mxu0 0.0
        %3918 = vmatpush1.msra.mxu0 0.0
        %3919 = vmatprep.subr.mxu0 0.0
        %3920 = vmatpush1.msra.mxu0 0.0
        %3921 = vmatprep.subr.mxu0 0.0
        %3922 = vmatpush1.msra.mxu0 0.0
        %3923 = vmatprep.subr.mxu0 0.0
        %3924 = vmatpush1.msra.mxu0 0.0
        %3925 = vmatprep.subr.mxu0 0.0
        %3926 = vmatpush1.msra.mxu0 0.0
        %3927 = vmatprep.subr.mxu0 0.0
        %3928 = vmatpush1.msra.mxu0 0.0
        %3929 = vmatprep.subr.mxu0 0.0
        %3930 = vmatpush1.msra.mxu0 0.0
        %3931 = vmatprep.subr.mxu0 0.0
        %3932 = vmatpush1.msra.mxu0 0.0
        %3933 = vmatprep.subr.mxu0 0.0
        %3934 = vmatpush1.msra.mxu0 0.0
        %3935 = vmatprep.subr.mxu0 0.0
        %3936 = vmatpush1.msra.mxu0 0.0
        %3937 = vmatprep.subr.mxu0 0.0
        %3938 = vmatpush1.msra.mxu0 0.0
        %3939 = vmatprep.subr.mxu0 0.0
        %3940 = vmatpush1.msra.mxu0 0.0
        %3941 = vmatprep.subr.mxu0 0.0
        %3942 = vmatpush1.msra.mxu0 0.0
        %3943 = vmatprep.subr.mxu0 0.0
        %3944 = vmatpush1.msra.mxu0 0.0
        %3945 = vmatprep.subr.mxu0 0.0
        %3946 = vmatpush1.msra.mxu0 0.0
        %3947 = vmatprep.subr.mxu0 0.0
        %3948 = vmatpush1.msra.mxu0 0.0
        %3949 = vmatprep.subr.mxu0 0.0
        %3950 = vmatpush1.msra.mxu0 0.0
        %3951 = vmatprep.subr.mxu0 0.0
        %3952 = vmatpush1.msra.mxu0 0.0
        %3953 = vmatprep.subr.mxu0 0.0
        %3954 = vmatpush1.msra.mxu0 0.0
        %3955 = vmatprep.subr.mxu0 0.0
        %3956 = vmatpush1.msra.mxu0 0.0
        %3957 = vmatprep.subr.mxu0 0.0
        %3958 = vmatpush1.msra.mxu0 0.0
        %3959 = vmatprep.subr.mxu0 0.0
        %3960 = vmatpush1.msra.mxu0 0.0
        %3961 = vmatprep.subr.mxu0 0.0
        %3962 = vmatpush1.msra.mxu0 0.0
        %3963 = vmatprep.subr.mxu0 0.0
        %3964 = vmatpush1.msra.mxu0 0.0
        %3965 = vmatprep.subr.mxu0 0.0
        %3966 = vmatpush1.msra.mxu0 0.0
        %3967 = vmatprep.subr.mxu0 0.0
        %3968 = vmatpush1.msra.mxu0 0.0
        %3969 = vmatprep.subr.mxu0 0.0
        %3970 = vmatpush1.msra.mxu0 0.0
        %3971 = vmatprep.subr.mxu0 0.0
        %3972 = vmatpush1.msra.mxu0 0.0
        %3973 = vmatprep.subr.mxu0 0.0
        %3974 = vmatpush1.msra.mxu0 0.0
        %3975 = vmatprep.subr.mxu0 0.0
        %3976 = vmatpush1.msra.mxu0 0.0
        %3977 = vmatprep.mubr.f32.mxu0 0.0
        %3978 = vmatmul.mubr.f32.gmra.mrb[0].mxu0 %v3908
        %v3979 = vpop.f32.mrb[0].mxu0
        %v3980 = vadd.f32 %v3905, %v3979
        %v3981 = vpop.f32.mrb[0].mxu0
        %3982 = vdwg.mxu0
        %s3983 = scalar_lea.vmem %s7, 8
        %v3984 = vld [vmem:[%s3983] sm:$0xf]
        %s3985 = scalar_lea.vmem %s8, 8
        %v3986 = vld [vmem:[%s3985] sm:$0xf]
        %3988 = vset.pattern.permute.xlu0 0
        %3989 = vperm.xlu0 %3988, %v3986
        %v3990 = vpop.permute.xlu0 %3989
        %v3993 = vsel %vm3585, %v3984, 0
        %v3996 = vsel %vm3589, %v3573, 0
        %3998 = vmatprep.subr.mxu0 0.0
        %3999 = vmatpush1.msra.mxu0 %v3996
        %4000 = vmatprep.subr.mxu0 0.0
        %4001 = vmatpush1.msra.mxu0 0.0
        %4002 = vmatprep.subr.mxu0 0.0
        %4003 = vmatpush1.msra.mxu0 0.0
        %4004 = vmatprep.subr.mxu0 0.0
        %4005 = vmatpush1.msra.mxu0 0.0
        %4006 = vmatprep.subr.mxu0 0.0
        %4007 = vmatpush1.msra.mxu0 0.0
        %4008 = vmatprep.subr.mxu0 0.0
        %4009 = vmatpush1.msra.mxu0 0.0
        %4010 = vmatprep.subr.mxu0 0.0
        %4011 = vmatpush1.msra.mxu0 0.0
        %4012 = vmatprep.subr.mxu0 0.0
        %4013 = vmatpush1.msra.mxu0 0.0
        %4014 = vmatprep.subr.mxu0 0.0
        %4015 = vmatpush1.msra.mxu0 0.0
        %4016 = vmatprep.subr.mxu0 0.0
        %4017 = vmatpush1.msra.mxu0 0.0
        %4018 = vmatprep.subr.mxu0 0.0
        %4019 = vmatpush1.msra.mxu0 0.0
        %4020 = vmatprep.subr.mxu0 0.0
        %4021 = vmatpush1.msra.mxu0 0.0
        %4022 = vmatprep.subr.mxu0 0.0
        %4023 = vmatpush1.msra.mxu0 0.0
        %4024 = vmatprep.subr.mxu0 0.0
        %4025 = vmatpush1.msra.mxu0 0.0
        %4026 = vmatprep.subr.mxu0 0.0
        %4027 = vmatpush1.msra.mxu0 0.0
        %4028 = vmatprep.subr.mxu0 0.0
        %4029 = vmatpush1.msra.mxu0 0.0
        %4030 = vmatprep.subr.mxu0 0.0
        %4031 = vmatpush1.msra.mxu0 0.0
        %4032 = vmatprep.subr.mxu0 0.0
        %4033 = vmatpush1.msra.mxu0 0.0
        %4034 = vmatprep.subr.mxu0 0.0
        %4035 = vmatpush1.msra.mxu0 0.0
        %4036 = vmatprep.subr.mxu0 0.0
        %4037 = vmatpush1.msra.mxu0 0.0
        %4038 = vmatprep.subr.mxu0 0.0
        %4039 = vmatpush1.msra.mxu0 0.0
        %4040 = vmatprep.subr.mxu0 0.0
        %4041 = vmatpush1.msra.mxu0 0.0
        %4042 = vmatprep.subr.mxu0 0.0
        %4043 = vmatpush1.msra.mxu0 0.0
        %4044 = vmatprep.subr.mxu0 0.0
        %4045 = vmatpush1.msra.mxu0 0.0
        %4046 = vmatprep.subr.mxu0 0.0
        %4047 = vmatpush1.msra.mxu0 0.0
        %4048 = vmatprep.subr.mxu0 0.0
        %4049 = vmatpush1.msra.mxu0 0.0
        %4050 = vmatprep.subr.mxu0 0.0
        %4051 = vmatpush1.msra.mxu0 0.0
        %4052 = vmatprep.subr.mxu0 0.0
        %4053 = vmatpush1.msra.mxu0 0.0
        %4054 = vmatprep.subr.mxu0 0.0
        %4055 = vmatpush1.msra.mxu0 0.0
        %4056 = vmatprep.subr.mxu0 0.0
        %4057 = vmatpush1.msra.mxu0 0.0
        %4058 = vmatprep.subr.mxu0 0.0
        %4059 = vmatpush1.msra.mxu0 0.0
        %4060 = vmatprep.subr.mxu0 0.0
        %4061 = vmatpush1.msra.mxu0 0.0
        %4062 = vmatprep.mubr.f32.mxu0 0.0
        %4063 = vmatmul.mubr.f32.gmra.mrb[0].mxu0 %v3993
        %v4064 = vpop.f32.mrb[0].mxu0
        %v4065 = vadd.f32 %v3990, %v4064
        %v4066 = vpop.f32.mrb[0].mxu0
        %4067 = vdwg.mxu0
        %4068 = vxpose.xlu0.b32.start [1/16] %v3980, 128
        %4069 = vxpose.xlu0.b32.cont [2/16] 0.0, 128
        %4070 = vxpose.xlu0.b32.cont [3/16] 0.0, 128
        %4071 = vxpose.xlu0.b32.cont [4/16] 0.0, 128
        %4072 = vxpose.xlu0.b32.cont [5/16] 0.0, 128
        %4073 = vxpose.xlu0.b32.cont [6/16] 0.0, 128
        %4074 = vxpose.xlu0.b32.cont [7/16] 0.0, 128
        %4075 = vxpose.xlu0.b32.cont [8/16] 0.0, 128
        %4076 = vxpose.xlu0.b32.cont [9/16] 0.0, 128
        %4077 = vxpose.xlu0.b32.cont [10/16] 0.0, 128
        %4078 = vxpose.xlu0.b32.cont [11/16] 0.0, 128
        %4079 = vxpose.xlu0.b32.cont [12/16] 0.0, 128
        %4080 = vxpose.xlu0.b32.cont [13/16] 0.0, 128
        %4081 = vxpose.xlu0.b32.cont [14/16] 0.0, 128
        %4082 = vxpose.xlu0.b32.cont [15/16] 0.0, 128
        %4083 = vxpose.xlu0.b32.end [16/16] 0.0, 128
        %v4084 = vpop.trf.xlu0
        %v4085 = vpop.trf.xlu0
        %v4086 = vpop.trf.xlu0
        %v4087 = vpop.trf.xlu0
        %v4088 = vpop.trf.xlu0
        %v4089 = vpop.trf.xlu0
        %v4090 = vpop.trf.xlu0
        %v4091 = vpop.trf.xlu0
        %v4092 = vpop.trf.xlu0
        %v4093 = vpop.trf.xlu0
        %v4094 = vpop.trf.xlu0
        %v4095 = vpop.trf.xlu0
        %v4096 = vpop.trf.xlu0
        %v4097 = vpop.trf.xlu0
        %v4098 = vpop.trf.xlu0
        %v4099 = vpop.trf.xlu0
        %v4101 = vsel %vm3585, %v4084, 0
        %v4104 = vsel %vm3589, %v3681, 0
        %v4107 = vsel %vm3589, %v3683, 0
        %v4110 = vsel %vm3589, %v3752, 0
        %v4113 = vsel %vm3589, %v3754, 0
        %v4116 = vsel %vm3589, %v3823, 0
        %v4119 = vsel %vm3589, %v3825, 0
        %v4122 = vsel %vm3589, %v3894, 0
        %v4125 = vsel %vm3589, %v3896, 0
        %4127 = vmatprep.subr.mxu0 %v4107
        %4128 = vmatpush1.msra.mxu0 %v4104
        %4129 = vmatprep.subr.mxu0 0.0
        %4130 = vmatpush1.msra.mxu0 0.0
        %4131 = vmatprep.subr.mxu0 0.0
        %4132 = vmatpush1.msra.mxu0 0.0
        %4133 = vmatprep.subr.mxu0 0.0
        %4134 = vmatpush1.msra.mxu0 0.0
        %4135 = vmatprep.subr.mxu0 0.0
        %4136 = vmatpush1.msra.mxu0 0.0
        %4137 = vmatprep.subr.mxu0 0.0
        %4138 = vmatpush1.msra.mxu0 0.0
        %4139 = vmatprep.subr.mxu0 0.0
        %4140 = vmatpush1.msra.mxu0 0.0
        %4141 = vmatprep.subr.mxu0 0.0
        %4142 = vmatpush1.msra.mxu0 0.0
        %4143 = vmatprep.subr.mxu0 0.0
        %4144 = vmatpush1.msra.mxu0 0.0
        %4145 = vmatprep.subr.mxu0 0.0
        %4146 = vmatpush1.msra.mxu0 0.0
        %4147 = vmatprep.subr.mxu0 0.0
        %4148 = vmatpush1.msra.mxu0 0.0
        %4149 = vmatprep.subr.mxu0 0.0
        %4150 = vmatpush1.msra.mxu0 0.0
        %4151 = vmatprep.subr.mxu0 0.0
        %4152 = vmatpush1.msra.mxu0 0.0
        %4153 = vmatprep.subr.mxu0 0.0
        %4154 = vmatpush1.msra.mxu0 0.0
        %4155 = vmatprep.subr.mxu0 0.0
        %4156 = vmatpush1.msra.mxu0 0.0
        %4157 = vmatprep.subr.mxu0 0.0
        %4158 = vmatpush1.msra.mxu0 0.0
        %4159 = vmatprep.subr.mxu0 0.0
        %4160 = vmatpush1.msra.mxu0 0.0
        %4161 = vmatprep.subr.mxu0 0.0
        %4162 = vmatpush1.msra.mxu0 0.0
        %4163 = vmatprep.subr.mxu0 0.0
        %4164 = vmatpush1.msra.mxu0 0.0
        %4165 = vmatprep.subr.mxu0 0.0
        %4166 = vmatpush1.msra.mxu0 0.0
        %4167 = vmatprep.subr.mxu0 0.0
        %4168 = vmatpush1.msra.mxu0 0.0
        %4169 = vmatprep.subr.mxu0 0.0
        %4170 = vmatpush1.msra.mxu0 0.0
        %4171 = vmatprep.subr.mxu0 0.0
        %4172 = vmatpush1.msra.mxu0 0.0
        %4173 = vmatprep.subr.mxu0 0.0
        %4174 = vmatpush1.msra.mxu0 0.0
        %4175 = vmatprep.subr.mxu0 0.0
        %4176 = vmatpush1.msra.mxu0 0.0
        %4177 = vmatprep.subr.mxu0 0.0
        %4178 = vmatpush1.msra.mxu0 0.0
        %4179 = vmatprep.subr.mxu0 0.0
        %4180 = vmatpush1.msra.mxu0 0.0
        %4181 = vmatprep.subr.mxu0 0.0
        %4182 = vmatpush1.msra.mxu0 0.0
        %4183 = vmatprep.subr.mxu0 0.0
        %4184 = vmatpush1.msra.mxu0 0.0
        %4185 = vmatprep.subr.mxu0 0.0
        %4186 = vmatpush1.msra.mxu0 0.0
        %4187 = vmatprep.subr.mxu0 0.0
        %4188 = vmatpush1.msra.mxu0 0.0
        %4189 = vmatprep.subr.mxu0 0.0
        %4190 = vmatpush1.msra.mxu0 0.0
        %4191 = vmatprep.mubr.f32.mxu0 0.0
        %4192 = vmatmul.mubr.f32.gmra.mrb[0].mxu0 %v4101
        %v4193 = vpop.f32.mrb[0].mxu0
        %v4194 = vadd.f32 0.0, %v4193
        %v4195 = vpop.f32.mrb[0].mxu0
        %v4196 = vadd.f32 0.0, %v4195
        %4197 = vdwg.mxu0
        %4198 = vmatprep.subr.mxu0 %v4113
        %4199 = vmatpush1.msra.mxu0 %v4110
        %4200 = vmatprep.subr.mxu0 0.0
        %4201 = vmatpush1.msra.mxu0 0.0
        %4202 = vmatprep.subr.mxu0 0.0
        %4203 = vmatpush1.msra.mxu0 0.0
        %4204 = vmatprep.subr.mxu0 0.0
        %4205 = vmatpush1.msra.mxu0 0.0
        %4206 = vmatprep.subr.mxu0 0.0
        %4207 = vmatpush1.msra.mxu0 0.0
        %4208 = vmatprep.subr.mxu0 0.0
        %4209 = vmatpush1.msra.mxu0 0.0
        %4210 = vmatprep.subr.mxu0 0.0
        %4211 = vmatpush1.msra.mxu0 0.0
        %4212 = vmatprep.subr.mxu0 0.0
        %4213 = vmatpush1.msra.mxu0 0.0
        %4214 = vmatprep.subr.mxu0 0.0
        %4215 = vmatpush1.msra.mxu0 0.0
        %4216 = vmatprep.subr.mxu0 0.0
        %4217 = vmatpush1.msra.mxu0 0.0
        %4218 = vmatprep.subr.mxu0 0.0
        %4219 = vmatpush1.msra.mxu0 0.0
        %4220 = vmatprep.subr.mxu0 0.0
        %4221 = vmatpush1.msra.mxu0 0.0
        %4222 = vmatprep.subr.mxu0 0.0
        %4223 = vmatpush1.msra.mxu0 0.0
        %4224 = vmatprep.subr.mxu0 0.0
        %4225 = vmatpush1.msra.mxu0 0.0
        %4226 = vmatprep.subr.mxu0 0.0
        %4227 = vmatpush1.msra.mxu0 0.0
        %4228 = vmatprep.subr.mxu0 0.0
        %4229 = vmatpush1.msra.mxu0 0.0
        %4230 = vmatprep.subr.mxu0 0.0
        %4231 = vmatpush1.msra.mxu0 0.0
        %4232 = vmatprep.subr.mxu0 0.0
        %4233 = vmatpush1.msra.mxu0 0.0
        %4234 = vmatprep.subr.mxu0 0.0
        %4235 = vmatpush1.msra.mxu0 0.0
        %4236 = vmatprep.subr.mxu0 0.0
        %4237 = vmatpush1.msra.mxu0 0.0
        %4238 = vmatprep.subr.mxu0 0.0
        %4239 = vmatpush1.msra.mxu0 0.0
        %4240 = vmatprep.subr.mxu0 0.0
        %4241 = vmatpush1.msra.mxu0 0.0
        %4242 = vmatprep.subr.mxu0 0.0
        %4243 = vmatpush1.msra.mxu0 0.0
        %4244 = vmatprep.subr.mxu0 0.0
        %4245 = vmatpush1.msra.mxu0 0.0
        %4246 = vmatprep.subr.mxu0 0.0
        %4247 = vmatpush1.msra.mxu0 0.0
        %4248 = vmatprep.subr.mxu0 0.0
        %4249 = vmatpush1.msra.mxu0 0.0
        %4250 = vmatprep.subr.mxu0 0.0
        %4251 = vmatpush1.msra.mxu0 0.0
        %4252 = vmatprep.subr.mxu0 0.0
        %4253 = vmatpush1.msra.mxu0 0.0
        %4254 = vmatprep.subr.mxu0 0.0
        %4255 = vmatpush1.msra.mxu0 0.0
        %4256 = vmatprep.subr.mxu0 0.0
        %4257 = vmatpush1.msra.mxu0 0.0
        %4258 = vmatprep.subr.mxu0 0.0
        %4259 = vmatpush1.msra.mxu0 0.0
        %4260 = vmatprep.subr.mxu0 0.0
        %4261 = vmatpush1.msra.mxu0 0.0
        %4262 = vmatprep.mubr.f32.mxu0 0.0
        %4263 = vmatmul.mubr.f32.gmra.mrb[0].mxu0 %v4101
        %v4264 = vpop.f32.mrb[0].mxu0
        %v4265 = vadd.f32 0.0, %v4264
        %v4266 = vpop.f32.mrb[0].mxu0
        %v4267 = vadd.f32 0.0, %v4266
        %4268 = vdwg.mxu0
        %4269 = vmatprep.subr.mxu0 %v4119
        %4270 = vmatpush1.msra.mxu0 %v4116
        %4271 = vmatprep.subr.mxu0 0.0
        %4272 = vmatpush1.msra.mxu0 0.0
        %4273 = vmatprep.subr.mxu0 0.0
        %4274 = vmatpush1.msra.mxu0 0.0
        %4275 = vmatprep.subr.mxu0 0.0
        %4276 = vmatpush1.msra.mxu0 0.0
        %4277 = vmatprep.subr.mxu0 0.0
        %4278 = vmatpush1.msra.mxu0 0.0
        %4279 = vmatprep.subr.mxu0 0.0
        %4280 = vmatpush1.msra.mxu0 0.0
        %4281 = vmatprep.subr.mxu0 0.0
        %4282 = vmatpush1.msra.mxu0 0.0
        %4283 = vmatprep.subr.mxu0 0.0
        %4284 = vmatpush1.msra.mxu0 0.0
        %4285 = vmatprep.subr.mxu0 0.0
        %4286 = vmatpush1.msra.mxu0 0.0
        %4287 = vmatprep.subr.mxu0 0.0
        %4288 = vmatpush1.msra.mxu0 0.0
        %4289 = vmatprep.subr.mxu0 0.0
        %4290 = vmatpush1.msra.mxu0 0.0
        %4291 = vmatprep.subr.mxu0 0.0
        %4292 = vmatpush1.msra.mxu0 0.0
        %4293 = vmatprep.subr.mxu0 0.0
        %4294 = vmatpush1.msra.mxu0 0.0
        %4295 = vmatprep.subr.mxu0 0.0
        %4296 = vmatpush1.msra.mxu0 0.0
        %4297 = vmatprep.subr.mxu0 0.0
        %4298 = vmatpush1.msra.mxu0 0.0
        %4299 = vmatprep.subr.mxu0 0.0
        %4300 = vmatpush1.msra.mxu0 0.0
        %4301 = vmatprep.subr.mxu0 0.0
        %4302 = vmatpush1.msra.mxu0 0.0
        %4303 = vmatprep.subr.mxu0 0.0
        %4304 = vmatpush1.msra.mxu0 0.0
        %4305 = vmatprep.subr.mxu0 0.0
        %4306 = vmatpush1.msra.mxu0 0.0
        %4307 = vmatprep.subr.mxu0 0.0
        %4308 = vmatpush1.msra.mxu0 0.0
        %4309 = vmatprep.subr.mxu0 0.0
        %4310 = vmatpush1.msra.mxu0 0.0
        %4311 = vmatprep.subr.mxu0 0.0
        %4312 = vmatpush1.msra.mxu0 0.0
        %4313 = vmatprep.subr.mxu0 0.0
        %4314 = vmatpush1.msra.mxu0 0.0
        %4315 = vmatprep.subr.mxu0 0.0
        %4316 = vmatpush1.msra.mxu0 0.0
        %4317 = vmatprep.subr.mxu0 0.0
        %4318 = vmatpush1.msra.mxu0 0.0
        %4319 = vmatprep.subr.mxu0 0.0
        %4320 = vmatpush1.msra.mxu0 0.0
        %4321 = vmatprep.subr.mxu0 0.0
        %4322 = vmatpush1.msra.mxu0 0.0
        %4323 = vmatprep.subr.mxu0 0.0
        %4324 = vmatpush1.msra.mxu0 0.0
        %4325 = vmatprep.subr.mxu0 0.0
        %4326 = vmatpush1.msra.mxu0 0.0
        %4327 = vmatprep.subr.mxu0 0.0
        %4328 = vmatpush1.msra.mxu0 0.0
        %4329 = vmatprep.subr.mxu0 0.0
        %4330 = vmatpush1.msra.mxu0 0.0
        %4331 = vmatprep.subr.mxu0 0.0
        %4332 = vmatpush1.msra.mxu0 0.0
        %4333 = vmatprep.mubr.f32.mxu0 0.0
        %4334 = vmatmul.mubr.f32.gmra.mrb[0].mxu0 %v4101
        %v4335 = vpop.f32.mrb[0].mxu0
        %v4336 = vadd.f32 0.0, %v4335
        %v4337 = vpop.f32.mrb[0].mxu0
        %v4338 = vadd.f32 0.0, %v4337
        %4339 = vdwg.mxu0
        %4340 = vmatprep.subr.mxu0 %v4125
        %4341 = vmatpush1.msra.mxu0 %v4122
        %4342 = vmatprep.subr.mxu0 0.0
        %4343 = vmatpush1.msra.mxu0 0.0
        %4344 = vmatprep.subr.mxu0 0.0
        %4345 = vmatpush1.msra.mxu0 0.0
        %4346 = vmatprep.subr.mxu0 0.0
        %4347 = vmatpush1.msra.mxu0 0.0
        %4348 = vmatprep.subr.mxu0 0.0
        %4349 = vmatpush1.msra.mxu0 0.0
        %4350 = vmatprep.subr.mxu0 0.0
        %4351 = vmatpush1.msra.mxu0 0.0
        %4352 = vmatprep.subr.mxu0 0.0
        %4353 = vmatpush1.msra.mxu0 0.0
        %4354 = vmatprep.subr.mxu0 0.0
        %4355 = vmatpush1.msra.mxu0 0.0
        %4356 = vmatprep.subr.mxu0 0.0
        %4357 = vmatpush1.msra.mxu0 0.0
        %4358 = vmatprep.subr.mxu0 0.0
        %4359 = vmatpush1.msra.mxu0 0.0
        %4360 = vmatprep.subr.mxu0 0.0
        %4361 = vmatpush1.msra.mxu0 0.0
        %4362 = vmatprep.subr.mxu0 0.0
        %4363 = vmatpush1.msra.mxu0 0.0
        %4364 = vmatprep.subr.mxu0 0.0
        %4365 = vmatpush1.msra.mxu0 0.0
        %4366 = vmatprep.subr.mxu0 0.0
        %4367 = vmatpush1.msra.mxu0 0.0
        %4368 = vmatprep.subr.mxu0 0.0
        %4369 = vmatpush1.msra.mxu0 0.0
        %4370 = vmatprep.subr.mxu0 0.0
        %4371 = vmatpush1.msra.mxu0 0.0
        %4372 = vmatprep.subr.mxu0 0.0
        %4373 = vmatpush1.msra.mxu0 0.0
        %4374 = vmatprep.subr.mxu0 0.0
        %4375 = vmatpush1.msra.mxu0 0.0
        %4376 = vmatprep.subr.mxu0 0.0
        %4377 = vmatpush1.msra.mxu0 0.0
        %4378 = vmatprep.subr.mxu0 0.0
        %4379 = vmatpush1.msra.mxu0 0.0
        %4380 = vmatprep.subr.mxu0 0.0
        %4381 = vmatpush1.msra.mxu0 0.0
        %4382 = vmatprep.subr.mxu0 0.0
        %4383 = vmatpush1.msra.mxu0 0.0
        %4384 = vmatprep.subr.mxu0 0.0
        %4385 = vmatpush1.msra.mxu0 0.0
        %4386 = vmatprep.subr.mxu0 0.0
        %4387 = vmatpush1.msra.mxu0 0.0
        %4388 = vmatprep.subr.mxu0 0.0
        %4389 = vmatpush1.msra.mxu0 0.0
        %4390 = vmatprep.subr.mxu0 0.0
        %4391 = vmatpush1.msra.mxu0 0.0
        %4392 = vmatprep.subr.mxu0 0.0
        %4393 = vmatpush1.msra.mxu0 0.0
        %4394 = vmatprep.subr.mxu0 0.0
        %4395 = vmatpush1.msra.mxu0 0.0
        %4396 = vmatprep.subr.mxu0 0.0
        %4397 = vmatpush1.msra.mxu0 0.0
        %4398 = vmatprep.subr.mxu0 0.0
        %4399 = vmatpush1.msra.mxu0 0.0
        %4400 = vmatprep.subr.mxu0 0.0
        %4401 = vmatpush1.msra.mxu0 0.0
        %4402 = vmatprep.subr.mxu0 0.0
        %4403 = vmatpush1.msra.mxu0 0.0
        %4404 = vmatprep.mubr.f32.mxu0 0.0
        %4405 = vmatmul.mubr.f32.gmra.mrb[0].mxu0 %v4101
        %v4406 = vpop.f32.mrb[0].mxu0
        %v4407 = vadd.f32 0.0, %v4406
        %v4408 = vpop.f32.mrb[0].mxu0
        %v4409 = vadd.f32 0.0, %v4408
        %4410 = vdwg.mxu0
        %v4411 = vsel %vm3589, %v4194, -inf
        %v4412 = vrot.slane %v4411, 4
        %v4413 = vmax.f32 %v4411, %v4412
        %v4414 = vrot.slane %v4413, 2
        %v4415 = vmax.f32 %v4413, %v4414
        %v4416 = vrot.slane %v4415, 1
        %v4417 = vmax.f32 %v4415, %v4416
        %v4418 = vsel %vm3589, %v4196, -inf
        %v4419 = vrot.slane %v4418, 4
        %v4420 = vmax.f32 %v4418, %v4419
        %v4421 = vrot.slane %v4420, 2
        %v4422 = vmax.f32 %v4420, %v4421
        %v4423 = vrot.slane %v4422, 1
        %v4424 = vmax.f32 %v4422, %v4423
        %v4425 = vsel %vm3589, %v4265, -inf
        %v4426 = vrot.slane %v4425, 4
        %v4427 = vmax.f32 %v4425, %v4426
        %v4428 = vrot.slane %v4427, 2
        %v4429 = vmax.f32 %v4427, %v4428
        %v4430 = vrot.slane %v4429, 1
        %v4431 = vmax.f32 %v4429, %v4430
        %v4432 = vsel %vm3589, %v4267, -inf
        %v4433 = vrot.slane %v4432, 4
        %v4434 = vmax.f32 %v4432, %v4433
        %v4435 = vrot.slane %v4434, 2
        %v4436 = vmax.f32 %v4434, %v4435
        %v4437 = vrot.slane %v4436, 1
        %v4438 = vmax.f32 %v4436, %v4437
        %v4439 = vsel %vm3589, %v4336, -inf
        %v4440 = vrot.slane %v4439, 4
        %v4441 = vmax.f32 %v4439, %v4440
        %v4442 = vrot.slane %v4441, 2
        %v4443 = vmax.f32 %v4441, %v4442
        %v4444 = vrot.slane %v4443, 1
        %v4445 = vmax.f32 %v4443, %v4444
        %v4446 = vsel %vm3589, %v4338, -inf
        %v4447 = vrot.slane %v4446, 4
        %v4448 = vmax.f32 %v4446, %v4447
        %v4449 = vrot.slane %v4448, 2
        %v4450 = vmax.f32 %v4448, %v4449
        %v4451 = vrot.slane %v4450, 1
        %v4452 = vmax.f32 %v4450, %v4451
        %v4453 = vsel %vm3589, %v4407, -inf
        %v4454 = vrot.slane %v4453, 4
        %v4455 = vmax.f32 %v4453, %v4454
        %v4456 = vrot.slane %v4455, 2
        %v4457 = vmax.f32 %v4455, %v4456
        %v4458 = vrot.slane %v4457, 1
        %v4459 = vmax.f32 %v4457, %v4458
        %v4460 = vsel %vm3589, %v4409, -inf
        %v4461 = vrot.slane %v4460, 4
        %v4462 = vmax.f32 %v4460, %v4461
        %v4463 = vrot.slane %v4462, 2
        %v4464 = vmax.f32 %v4462, %v4463
        %v4465 = vrot.slane %v4464, 1
        %v4466 = vmax.f32 %v4464, %v4465
        %v4467 = vsub.f32 %v4194, %v4417
        %v4468 = vsub.f32 %v4196, %v4424
        %v4469 = vsub.f32 %v4265, %v4431
        %v4470 = vsub.f32 %v4267, %v4438
        %v4471 = vsub.f32 %v4336, %v4445
        %v4472 = vsub.f32 %v4338, %v4452
        %v4473 = vsub.f32 %v4407, %v4459
        %v4474 = vsub.f32 %v4409, %v4466
        %v4475 = vmul.f32 %v4467, 1.442695
        %v4476 = vpow.pop %v4475
        %v4477 = vmul.f32 %v4468, 1.442695
        %v4478 = vpow.pop %v4477
        %v4479 = vmul.f32 %v4469, 1.442695
        %v4480 = vpow.pop %v4479
        %v4481 = vmul.f32 %v4470, 1.442695
        %v4482 = vpow.pop %v4481
        %v4483 = vmul.f32 %v4471, 1.442695
        %v4484 = vpow.pop %v4483
        %v4485 = vmul.f32 %v4472, 1.442695
        %v4486 = vpow.pop %v4485
        %v4487 = vmul.f32 %v4473, 1.442695
        %v4488 = vpow.pop %v4487
        %v4489 = vmul.f32 %v4474, 1.442695
        %v4490 = vpow.pop %v4489
        %v4491 = vsel %vm3589, %v4476, 0.0
        %v4492 = vrot.slane %v4491, 4
        %v4493 = vadd.f32 %v4491, %v4492
        %v4494 = vrot.slane %v4493, 2
        %v4495 = vadd.f32 %v4493, %v4494
        %v4496 = vrot.slane %v4495, 1
        %v4497 = vadd.f32 %v4495, %v4496
        %v4498 = vsel %vm3589, %v4478, 0.0
        %v4499 = vrot.slane %v4498, 4
        %v4500 = vadd.f32 %v4498, %v4499
        %v4501 = vrot.slane %v4500, 2
        %v4502 = vadd.f32 %v4500, %v4501
        %v4503 = vrot.slane %v4502, 1
        %v4504 = vadd.f32 %v4502, %v4503
        %v4505 = vsel %vm3589, %v4480, 0.0
        %v4506 = vrot.slane %v4505, 4
        %v4507 = vadd.f32 %v4505, %v4506
        %v4508 = vrot.slane %v4507, 2
        %v4509 = vadd.f32 %v4507, %v4508
        %v4510 = vrot.slane %v4509, 1
        %v4511 = vadd.f32 %v4509, %v4510
        %v4512 = vsel %vm3589, %v4482, 0.0
        %v4513 = vrot.slane %v4512, 4
        %v4514 = vadd.f32 %v4512, %v4513
        %v4515 = vrot.slane %v4514, 2
        %v4516 = vadd.f32 %v4514, %v4515
        %v4517 = vrot.slane %v4516, 1
        %v4518 = vadd.f32 %v4516, %v4517
        %v4519 = vsel %vm3589, %v4484, 0.0
        %v4520 = vrot.slane %v4519, 4
        %v4521 = vadd.f32 %v4519, %v4520
        %v4522 = vrot.slane %v4521, 2
        %v4523 = vadd.f32 %v4521, %v4522
        %v4524 = vrot.slane %v4523, 1
        %v4525 = vadd.f32 %v4523, %v4524
        %v4526 = vsel %vm3589, %v4486, 0.0
        %v4527 = vrot.slane %v4526, 4
        %v4528 = vadd.f32 %v4526, %v4527
        %v4529 = vrot.slane %v4528, 2
        %v4530 = vadd.f32 %v4528, %v4529
        %v4531 = vrot.slane %v4530, 1
        %v4532 = vadd.f32 %v4530, %v4531
        %v4533 = vsel %vm3589, %v4488, 0.0
        %v4534 = vrot.slane %v4533, 4
        %v4535 = vadd.f32 %v4533, %v4534
        %v4536 = vrot.slane %v4535, 2
        %v4537 = vadd.f32 %v4535, %v4536
        %v4538 = vrot.slane %v4537, 1
        %v4539 = vadd.f32 %v4537, %v4538
        %v4540 = vsel %vm3589, %v4490, 0.0
        %v4541 = vrot.slane %v4540, 4
        %v4542 = vadd.f32 %v4540, %v4541
        %v4543 = vrot.slane %v4542, 2
        %v4544 = vadd.f32 %v4542, %v4543
        %v4545 = vrot.slane %v4544, 1
        %v4546 = vadd.f32 %v4544, %v4545
        %v4548 = vsel %vm3585, %v4065, 0
        %v4551 = vsel %vm3589, %v4476, 0
        %v4554 = vsel %vm3589, %v4478, 0
        %v4557 = vsel %vm3589, %v4480, 0
        %v4560 = vsel %vm3589, %v4482, 0
        %v4563 = vsel %vm3589, %v4484, 0
        %v4566 = vsel %vm3589, %v4486, 0
        %v4569 = vsel %vm3589, %v4488, 0
        %v4572 = vsel %vm3589, %v4490, 0
        %4574 = vmatprep.subr.mxu0 %v4554
        %4575 = vmatpush1.msra.mxu0 %v4551
        %4576 = vmatprep.subr.mxu0 0.0
        %4577 = vmatpush1.msra.mxu0 0.0
        %4578 = vmatprep.subr.mxu0 0.0
        %4579 = vmatpush1.msra.mxu0 0.0
        %4580 = vmatprep.subr.mxu0 0.0
        %4581 = vmatpush1.msra.mxu0 0.0
        %4582 = vmatprep.subr.mxu0 0.0
        %4583 = vmatpush1.msra.mxu0 0.0
        %4584 = vmatprep.subr.mxu0 0.0
        %4585 = vmatpush1.msra.mxu0 0.0
        %4586 = vmatprep.subr.mxu0 0.0
        %4587 = vmatpush1.msra.mxu0 0.0
        %4588 = vmatprep.subr.mxu0 0.0
        %4589 = vmatpush1.msra.mxu0 0.0
        %4590 = vmatprep.subr.mxu0 0.0
        %4591 = vmatpush1.msra.mxu0 0.0
        %4592 = vmatprep.subr.mxu0 0.0
        %4593 = vmatpush1.msra.mxu0 0.0
        %4594 = vmatprep.subr.mxu0 0.0
        %4595 = vmatpush1.msra.mxu0 0.0
        %4596 = vmatprep.subr.mxu0 0.0
        %4597 = vmatpush1.msra.mxu0 0.0
        %4598 = vmatprep.subr.mxu0 0.0
        %4599 = vmatpush1.msra.mxu0 0.0
        %4600 = vmatprep.subr.mxu0 0.0
        %4601 = vmatpush1.msra.mxu0 0.0
        %4602 = vmatprep.subr.mxu0 0.0
        %4603 = vmatpush1.msra.mxu0 0.0
        %4604 = vmatprep.subr.mxu0 0.0
        %4605 = vmatpush1.msra.mxu0 0.0
        %4606 = vmatprep.subr.mxu0 0.0
        %4607 = vmatpush1.msra.mxu0 0.0
        %4608 = vmatprep.subr.mxu0 0.0
        %4609 = vmatpush1.msra.mxu0 0.0
        %4610 = vmatprep.subr.mxu0 0.0
        %4611 = vmatpush1.msra.mxu0 0.0
        %4612 = vmatprep.subr.mxu0 0.0
        %4613 = vmatpush1.msra.mxu0 0.0
        %4614 = vmatprep.subr.mxu0 0.0
        %4615 = vmatpush1.msra.mxu0 0.0
        %4616 = vmatprep.subr.mxu0 0.0
        %4617 = vmatpush1.msra.mxu0 0.0
        %4618 = vmatprep.subr.mxu0 0.0
        %4619 = vmatpush1.msra.mxu0 0.0
        %4620 = vmatprep.subr.mxu0 0.0
        %4621 = vmatpush1.msra.mxu0 0.0
        %4622 = vmatprep.subr.mxu0 0.0
        %4623 = vmatpush1.msra.mxu0 0.0
        %4624 = vmatprep.subr.mxu0 0.0
        %4625 = vmatpush1.msra.mxu0 0.0
        %4626 = vmatprep.subr.mxu0 0.0
        %4627 = vmatpush1.msra.mxu0 0.0
        %4628 = vmatprep.subr.mxu0 0.0
        %4629 = vmatpush1.msra.mxu0 0.0
        %4630 = vmatprep.subr.mxu0 0.0
        %4631 = vmatpush1.msra.mxu0 0.0
        %4632 = vmatprep.subr.mxu0 0.0
        %4633 = vmatpush1.msra.mxu0 0.0
        %4634 = vmatprep.subr.mxu0 0.0
        %4635 = vmatpush1.msra.mxu0 0.0
        %4636 = vmatprep.subr.mxu0 0.0
        %4637 = vmatpush1.msra.mxu0 0.0
        %4638 = vmatprep.mubr.f32.mxu0 0.0
        %4639 = vmatmul.mubr.f32.gmra.mrb[0].mxu0 %v4548
        %v4640 = vpop.f32.mrb[0].mxu0
        %v4641 = vadd.f32 0.0, %v4640
        %v4642 = vpop.f32.mrb[0].mxu0
        %v4643 = vadd.f32 0.0, %v4642
        %4644 = vdwg.mxu0
        %4645 = vmatprep.subr.mxu0 %v4560
        %4646 = vmatpush1.msra.mxu0 %v4557
        %4647 = vmatprep.subr.mxu0 0.0
        %4648 = vmatpush1.msra.mxu0 0.0
        %4649 = vmatprep.subr.mxu0 0.0
        %4650 = vmatpush1.msra.mxu0 0.0
        %4651 = vmatprep.subr.mxu0 0.0
        %4652 = vmatpush1.msra.mxu0 0.0
        %4653 = vmatprep.subr.mxu0 0.0
        %4654 = vmatpush1.msra.mxu0 0.0
        %4655 = vmatprep.subr.mxu0 0.0
        %4656 = vmatpush1.msra.mxu0 0.0
        %4657 = vmatprep.subr.mxu0 0.0
        %4658 = vmatpush1.msra.mxu0 0.0
        %4659 = vmatprep.subr.mxu0 0.0
        %4660 = vmatpush1.msra.mxu0 0.0
        %4661 = vmatprep.subr.mxu0 0.0
        %4662 = vmatpush1.msra.mxu0 0.0
        %4663 = vmatprep.subr.mxu0 0.0
        %4664 = vmatpush1.msra.mxu0 0.0
        %4665 = vmatprep.subr.mxu0 0.0
        %4666 = vmatpush1.msra.mxu0 0.0
        %4667 = vmatprep.subr.mxu0 0.0
        %4668 = vmatpush1.msra.mxu0 0.0
        %4669 = vmatprep.subr.mxu0 0.0
        %4670 = vmatpush1.msra.mxu0 0.0
        %4671 = vmatprep.subr.mxu0 0.0
        %4672 = vmatpush1.msra.mxu0 0.0
        %4673 = vmatprep.subr.mxu0 0.0
        %4674 = vmatpush1.msra.mxu0 0.0
        %4675 = vmatprep.subr.mxu0 0.0
        %4676 = vmatpush1.msra.mxu0 0.0
        %4677 = vmatprep.subr.mxu0 0.0
        %4678 = vmatpush1.msra.mxu0 0.0
        %4679 = vmatprep.subr.mxu0 0.0
        %4680 = vmatpush1.msra.mxu0 0.0
        %4681 = vmatprep.subr.mxu0 0.0
        %4682 = vmatpush1.msra.mxu0 0.0
        %4683 = vmatprep.subr.mxu0 0.0
        %4684 = vmatpush1.msra.mxu0 0.0
        %4685 = vmatprep.subr.mxu0 0.0
        %4686 = vmatpush1.msra.mxu0 0.0
        %4687 = vmatprep.subr.mxu0 0.0
        %4688 = vmatpush1.msra.mxu0 0.0
        %4689 = vmatprep.subr.mxu0 0.0
        %4690 = vmatpush1.msra.mxu0 0.0
        %4691 = vmatprep.subr.mxu0 0.0
        %4692 = vmatpush1.msra.mxu0 0.0
        %4693 = vmatprep.subr.mxu0 0.0
        %4694 = vmatpush1.msra.mxu0 0.0
        %4695 = vmatprep.subr.mxu0 0.0
        %4696 = vmatpush1.msra.mxu0 0.0
        %4697 = vmatprep.subr.mxu0 0.0
        %4698 = vmatpush1.msra.mxu0 0.0
        %4699 = vmatprep.subr.mxu0 0.0
        %4700 = vmatpush1.msra.mxu0 0.0
        %4701 = vmatprep.subr.mxu0 0.0
        %4702 = vmatpush1.msra.mxu0 0.0
        %4703 = vmatprep.subr.mxu0 0.0
        %4704 = vmatpush1.msra.mxu0 0.0
        %4705 = vmatprep.subr.mxu0 0.0
        %4706 = vmatpush1.msra.mxu0 0.0
        %4707 = vmatprep.subr.mxu0 0.0
        %4708 = vmatpush1.msra.mxu0 0.0
        %4709 = vmatprep.mubr.f32.mxu0 0.0
        %4710 = vmatmul.mubr.f32.gmra.mrb[0].mxu0 %v4548
        %v4711 = vpop.f32.mrb[0].mxu0
        %v4712 = vadd.f32 0.0, %v4711
        %v4713 = vpop.f32.mrb[0].mxu0
        %v4714 = vadd.f32 0.0, %v4713
        %4715 = vdwg.mxu0
        %4716 = vmatprep.subr.mxu0 %v4566
        %4717 = vmatpush1.msra.mxu0 %v4563
        %4718 = vmatprep.subr.mxu0 0.0
        %4719 = vmatpush1.msra.mxu0 0.0
        %4720 = vmatprep.subr.mxu0 0.0
        %4721 = vmatpush1.msra.mxu0 0.0
        %4722 = vmatprep.subr.mxu0 0.0
        %4723 = vmatpush1.msra.mxu0 0.0
        %4724 = vmatprep.subr.mxu0 0.0
        %4725 = vmatpush1.msra.mxu0 0.0
        %4726 = vmatprep.subr.mxu0 0.0
        %4727 = vmatpush1.msra.mxu0 0.0
        %4728 = vmatprep.subr.mxu0 0.0
        %4729 = vmatpush1.msra.mxu0 0.0
        %4730 = vmatprep.subr.mxu0 0.0
        %4731 = vmatpush1.msra.mxu0 0.0
        %4732 = vmatprep.subr.mxu0 0.0
        %4733 = vmatpush1.msra.mxu0 0.0
        %4734 = vmatprep.subr.mxu0 0.0
        %4735 = vmatpush1.msra.mxu0 0.0
        %4736 = vmatprep.subr.mxu0 0.0
        %4737 = vmatpush1.msra.mxu0 0.0
        %4738 = vmatprep.subr.mxu0 0.0
        %4739 = vmatpush1.msra.mxu0 0.0
        %4740 = vmatprep.subr.mxu0 0.0
        %4741 = vmatpush1.msra.mxu0 0.0
        %4742 = vmatprep.subr.mxu0 0.0
        %4743 = vmatpush1.msra.mxu0 0.0
        %4744 = vmatprep.subr.mxu0 0.0
        %4745 = vmatpush1.msra.mxu0 0.0
        %4746 = vmatprep.subr.mxu0 0.0
        %4747 = vmatpush1.msra.mxu0 0.0
        %4748 = vmatprep.subr.mxu0 0.0
        %4749 = vmatpush1.msra.mxu0 0.0
        %4750 = vmatprep.subr.mxu0 0.0
        %4751 = vmatpush1.msra.mxu0 0.0
        %4752 = vmatprep.subr.mxu0 0.0
        %4753 = vmatpush1.msra.mxu0 0.0
        %4754 = vmatprep.subr.mxu0 0.0
        %4755 = vmatpush1.msra.mxu0 0.0
        %4756 = vmatprep.subr.mxu0 0.0
        %4757 = vmatpush1.msra.mxu0 0.0
        %4758 = vmatprep.subr.mxu0 0.0
        %4759 = vmatpush1.msra.mxu0 0.0
        %4760 = vmatprep.subr.mxu0 0.0
        %4761 = vmatpush1.msra.mxu0 0.0
        %4762 = vmatprep.subr.mxu0 0.0
        %4763 = vmatpush1.msra.mxu0 0.0
        %4764 = vmatprep.subr.mxu0 0.0
        %4765 = vmatpush1.msra.mxu0 0.0
        %4766 = vmatprep.subr.mxu0 0.0
        %4767 = vmatpush1.msra.mxu0 0.0
        %4768 = vmatprep.subr.mxu0 0.0
        %4769 = vmatpush1.msra.mxu0 0.0
        %4770 = vmatprep.subr.mxu0 0.0
        %4771 = vmatpush1.msra.mxu0 0.0
        %4772 = vmatprep.subr.mxu0 0.0
        %4773 = vmatpush1.msra.mxu0 0.0
        %4774 = vmatprep.subr.mxu0 0.0
        %4775 = vmatpush1.msra.mxu0 0.0
        %4776 = vmatprep.subr.mxu0 0.0
        %4777 = vmatpush1.msra.mxu0 0.0
        %4778 = vmatprep.subr.mxu0 0.0
        %4779 = vmatpush1.msra.mxu0 0.0
        %4780 = vmatprep.mubr.f32.mxu0 0.0
        %4781 = vmatmul.mubr.f32.gmra.mrb[0].mxu0 %v4548
        %v4782 = vpop.f32.mrb[0].mxu0
        %v4783 = vadd.f32 0.0, %v4782
        %v4784 = vpop.f32.mrb[0].mxu0
        %v4785 = vadd.f32 0.0, %v4784
        %4786 = vdwg.mxu0
        %4787 = vmatprep.subr.mxu0 %v4572
        %4788 = vmatpush1.msra.mxu0 %v4569
        %4789 = vmatprep.subr.mxu0 0.0
        %4790 = vmatpush1.msra.mxu0 0.0
        %4791 = vmatprep.subr.mxu0 0.0
        %4792 = vmatpush1.msra.mxu0 0.0
        %4793 = vmatprep.subr.mxu0 0.0
        %4794 = vmatpush1.msra.mxu0 0.0
        %4795 = vmatprep.subr.mxu0 0.0
        %4796 = vmatpush1.msra.mxu0 0.0
        %4797 = vmatprep.subr.mxu0 0.0
        %4798 = vmatpush1.msra.mxu0 0.0
        %4799 = vmatprep.subr.mxu0 0.0
        %4800 = vmatpush1.msra.mxu0 0.0
        %4801 = vmatprep.subr.mxu0 0.0
        %4802 = vmatpush1.msra.mxu0 0.0
        %4803 = vmatprep.subr.mxu0 0.0
        %4804 = vmatpush1.msra.mxu0 0.0
        %4805 = vmatprep.subr.mxu0 0.0
        %4806 = vmatpush1.msra.mxu0 0.0
        %4807 = vmatprep.subr.mxu0 0.0
        %4808 = vmatpush1.msra.mxu0 0.0
        %4809 = vmatprep.subr.mxu0 0.0
        %4810 = vmatpush1.msra.mxu0 0.0
        %4811 = vmatprep.subr.mxu0 0.0
        %4812 = vmatpush1.msra.mxu0 0.0
        %4813 = vmatprep.subr.mxu0 0.0
        %4814 = vmatpush1.msra.mxu0 0.0
        %4815 = vmatprep.subr.mxu0 0.0
        %4816 = vmatpush1.msra.mxu0 0.0
        %4817 = vmatprep.subr.mxu0 0.0
        %4818 = vmatpush1.msra.mxu0 0.0
        %4819 = vmatprep.subr.mxu0 0.0
        %4820 = vmatpush1.msra.mxu0 0.0
        %4821 = vmatprep.subr.mxu0 0.0
        %4822 = vmatpush1.msra.mxu0 0.0
        %4823 = vmatprep.subr.mxu0 0.0
        %4824 = vmatpush1.msra.mxu0 0.0
        %4825 = vmatprep.subr.mxu0 0.0
        %4826 = vmatpush1.msra.mxu0 0.0
        %4827 = vmatprep.subr.mxu0 0.0
        %4828 = vmatpush1.msra.mxu0 0.0
        %4829 = vmatprep.subr.mxu0 0.0
        %4830 = vmatpush1.msra.mxu0 0.0
        %4831 = vmatprep.subr.mxu0 0.0
        %4832 = vmatpush1.msra.mxu0 0.0
        %4833 = vmatprep.subr.mxu0 0.0
        %4834 = vmatpush1.msra.mxu0 0.0
        %4835 = vmatprep.subr.mxu0 0.0
        %4836 = vmatpush1.msra.mxu0 0.0
        %4837 = vmatprep.subr.mxu0 0.0
        %4838 = vmatpush1.msra.mxu0 0.0
        %4839 = vmatprep.subr.mxu0 0.0
        %4840 = vmatpush1.msra.mxu0 0.0
        %4841 = vmatprep.subr.mxu0 0.0
        %4842 = vmatpush1.msra.mxu0 0.0
        %4843 = vmatprep.subr.mxu0 0.0
        %4844 = vmatpush1.msra.mxu0 0.0
        %4845 = vmatprep.subr.mxu0 0.0
        %4846 = vmatpush1.msra.mxu0 0.0
        %4847 = vmatprep.subr.mxu0 0.0
        %4848 = vmatpush1.msra.mxu0 0.0
        %4849 = vmatprep.subr.mxu0 0.0
        %4850 = vmatpush1.msra.mxu0 0.0
        %4851 = vmatprep.mubr.f32.mxu0 0.0
        %4852 = vmatmul.mubr.f32.gmra.mrb[0].mxu0 %v4548
        %v4853 = vpop.f32.mrb[0].mxu0
        %v4854 = vadd.f32 0.0, %v4853
        %v4855 = vpop.f32.mrb[0].mxu0
        %v4856 = vadd.f32 0.0, %v4855
        %4857 = vdwg.mxu0
        %v4858 = vrcp.pop %v4497
        %v4859 = vrcp.pop %v4504
        %v4860 = vrcp.pop %v4511
        %v4861 = vrcp.pop %v4518
        %v4862 = vrcp.pop %v4525
        %v4863 = vrcp.pop %v4532
        %v4864 = vrcp.pop %v4539
        %v4865 = vrcp.pop %v4546
        %v4866 = vmul.f32 %v4641, %v4858
        %v4867 = vmul.f32 %v4643, %v4859
        %v4868 = vmul.f32 %v4712, %v4860
        %v4869 = vmul.f32 %v4714, %v4861
        %v4870 = vmul.f32 %v4783, %v4862
        %v4871 = vmul.f32 %v4785, %v4863
        %v4872 = vmul.f32 %v4854, %v4864
        %v4873 = vmul.f32 %v4856, %v4865
        %v4874 = vld [vmem:[%s9] sm:$0xf]
        %v4875 = vld [vmem:[%s10] sm:$0xf]
        %4877 = vset.pattern.permute.xlu0 0
        %4878 = vperm.xlu0 %4877, %v4875
        %v4879 = vpop.permute.xlu0 %4878
        %v4882 = vsel %vm3585, %v4874, 0
        %v4885 = vsel %vm3589, %v4866, 0
        %v4888 = vsel %vm3589, %v4867, 0
        %v4891 = vsel %vm3589, %v4868, 0
        %v4894 = vsel %vm3589, %v4869, 0
        %v4897 = vsel %vm3589, %v4870, 0
        %v4900 = vsel %vm3589, %v4871, 0
        %v4903 = vsel %vm3589, %v4872, 0
        %v4906 = vsel %vm3589, %v4873, 0
        %4908 = vmatprep.subr.mxu0 %v4888
        %4909 = vmatpush1.msra.mxu0 %v4885
        %4910 = vmatprep.subr.mxu0 0.0
        %4911 = vmatpush1.msra.mxu0 0.0
        %4912 = vmatprep.subr.mxu0 0.0
        %4913 = vmatpush1.msra.mxu0 0.0
        %4914 = vmatprep.subr.mxu0 0.0
        %4915 = vmatpush1.msra.mxu0 0.0
        %4916 = vmatprep.subr.mxu0 0.0
        %4917 = vmatpush1.msra.mxu0 0.0
        %4918 = vmatprep.subr.mxu0 0.0
        %4919 = vmatpush1.msra.mxu0 0.0
        %4920 = vmatprep.subr.mxu0 0.0
        %4921 = vmatpush1.msra.mxu0 0.0
        %4922 = vmatprep.subr.mxu0 0.0
        %4923 = vmatpush1.msra.mxu0 0.0
        %4924 = vmatprep.subr.mxu0 0.0
        %4925 = vmatpush1.msra.mxu0 0.0
        %4926 = vmatprep.subr.mxu0 0.0
        %4927 = vmatpush1.msra.mxu0 0.0
        %4928 = vmatprep.subr.mxu0 0.0
        %4929 = vmatpush1.msra.mxu0 0.0
        %4930 = vmatprep.subr.mxu0 0.0
        %4931 = vmatpush1.msra.mxu0 0.0
        %4932 = vmatprep.subr.mxu0 0.0
        %4933 = vmatpush1.msra.mxu0 0.0
        %4934 = vmatprep.subr.mxu0 0.0
        %4935 = vmatpush1.msra.mxu0 0.0
        %4936 = vmatprep.subr.mxu0 0.0
        %4937 = vmatpush1.msra.mxu0 0.0
        %4938 = vmatprep.subr.mxu0 0.0
        %4939 = vmatpush1.msra.mxu0 0.0
        %4940 = vmatprep.subr.mxu0 0.0
        %4941 = vmatpush1.msra.mxu0 0.0
        %4942 = vmatprep.subr.mxu0 0.0
        %4943 = vmatpush1.msra.mxu0 0.0
        %4944 = vmatprep.subr.mxu0 0.0
        %4945 = vmatpush1.msra.mxu0 0.0
        %4946 = vmatprep.subr.mxu0 0.0
        %4947 = vmatpush1.msra.mxu0 0.0
        %4948 = vmatprep.subr.mxu0 0.0
        %4949 = vmatpush1.msra.mxu0 0.0
        %4950 = vmatprep.subr.mxu0 0.0
        %4951 = vmatpush1.msra.mxu0 0.0
        %4952 = vmatprep.subr.mxu0 0.0
        %4953 = vmatpush1.msra.mxu0 0.0
        %4954 = vmatprep.subr.mxu0 0.0
        %4955 = vmatpush1.msra.mxu0 0.0
        %4956 = vmatprep.subr.mxu0 0.0
        %4957 = vmatpush1.msra.mxu0 0.0
        %4958 = vmatprep.subr.mxu0 0.0
        %4959 = vmatpush1.msra.mxu0 0.0
        %4960 = vmatprep.subr.mxu0 0.0
        %4961 = vmatpush1.msra.mxu0 0.0
        %4962 = vmatprep.subr.mxu0 0.0
        %4963 = vmatpush1.msra.mxu0 0.0
        %4964 = vmatprep.subr.mxu0 0.0
        %4965 = vmatpush1.msra.mxu0 0.0
        %4966 = vmatprep.subr.mxu0 0.0
        %4967 = vmatpush1.msra.mxu0 0.0
        %4968 = vmatprep.subr.mxu0 0.0
        %4969 = vmatpush1.msra.mxu0 0.0
        %4970 = vmatprep.subr.mxu0 0.0
        %4971 = vmatpush1.msra.mxu0 0.0
        %4972 = vmatprep.mubr.f32.mxu0 0.0
        %4973 = vmatmul.mubr.f32.gmra.mrb[0].mxu0 %v4882
        %v4974 = vpop.f32.mrb[0].mxu0
        %v4975 = vadd.f32 %v4879, %v4974
        %v4976 = vpop.f32.mrb[0].mxu0
        %v4977 = vadd.f32 %v4879, %v4976
        %4978 = vdwg.mxu0
        %4979 = vmatprep.subr.mxu0 %v4894
        %4980 = vmatpush1.msra.mxu0 %v4891
        %4981 = vmatprep.subr.mxu0 0.0
        %4982 = vmatpush1.msra.mxu0 0.0
        %4983 = vmatprep.subr.mxu0 0.0
        %4984 = vmatpush1.msra.mxu0 0.0
        %4985 = vmatprep.subr.mxu0 0.0
        %4986 = vmatpush1.msra.mxu0 0.0
        %4987 = vmatprep.subr.mxu0 0.0
        %4988 = vmatpush1.msra.mxu0 0.0
        %4989 = vmatprep.subr.mxu0 0.0
        %4990 = vmatpush1.msra.mxu0 0.0
        %4991 = vmatprep.subr.mxu0 0.0
        %4992 = vmatpush1.msra.mxu0 0.0
        %4993 = vmatprep.subr.mxu0 0.0
        %4994 = vmatpush1.msra.mxu0 0.0
        %4995 = vmatprep.subr.mxu0 0.0
        %4996 = vmatpush1.msra.mxu0 0.0
        %4997 = vmatprep.subr.mxu0 0.0
        %4998 = vmatpush1.msra.mxu0 0.0
        %4999 = vmatprep.subr.mxu0 0.0
        %5000 = vmatpush1.msra.mxu0 0.0
        %5001 = vmatprep.subr.mxu0 0.0
        %5002 = vmatpush1.msra.mxu0 0.0
        %5003 = vmatprep.subr.mxu0 0.0
        %5004 = vmatpush1.msra.mxu0 0.0
        %5005 = vmatprep.subr.mxu0 0.0
        %5006 = vmatpush1.msra.mxu0 0.0
        %5007 = vmatprep.subr.mxu0 0.0
        %5008 = vmatpush1.msra.mxu0 0.0
        %5009 = vmatprep.subr.mxu0 0.0
        %5010 = vmatpush1.msra.mxu0 0.0
        %5011 = vmatprep.subr.mxu0 0.0
        %5012 = vmatpush1.msra.mxu0 0.0
        %5013 = vmatprep.subr.mxu0 0.0
        %5014 = vmatpush1.msra.mxu0 0.0
        %5015 = vmatprep.subr.mxu0 0.0
        %5016 = vmatpush1.msra.mxu0 0.0
        %5017 = vmatprep.subr.mxu0 0.0
        %5018 = vmatpush1.msra.mxu0 0.0
        %5019 = vmatprep.subr.mxu0 0.0
        %5020 = vmatpush1.msra.mxu0 0.0
        %5021 = vmatprep.subr.mxu0 0.0
        %5022 = vmatpush1.msra.mxu0 0.0
        %5023 = vmatprep.subr.mxu0 0.0
        %5024 = vmatpush1.msra.mxu0 0.0
        %5025 = vmatprep.subr.mxu0 0.0
        %5026 = vmatpush1.msra.mxu0 0.0
        %5027 = vmatprep.subr.mxu0 0.0
        %5028 = vmatpush1.msra.mxu0 0.0
        %5029 = vmatprep.subr.mxu0 0.0
        %5030 = vmatpush1.msra.mxu0 0.0
        %5031 = vmatprep.subr.mxu0 0.0
        %5032 = vmatpush1.msra.mxu0 0.0
        %5033 = vmatprep.subr.mxu0 0.0
        %5034 = vmatpush1.msra.mxu0 0.0
        %5035 = vmatprep.subr.mxu0 0.0
        %5036 = vmatpush1.msra.mxu0 0.0
        %5037 = vmatprep.subr.mxu0 0.0
        %5038 = vmatpush1.msra.mxu0 0.0
        %5039 = vmatprep.subr.mxu0 0.0
        %5040 = vmatpush1.msra.mxu0 0.0
        %5041 = vmatprep.subr.mxu0 0.0
        %5042 = vmatpush1.msra.mxu0 0.0
        %5043 = vmatprep.mubr.f32.mxu0 0.0
        %5044 = vmatmul.mubr.f32.gmra.mrb[0].mxu0 %v4882
        %v5045 = vpop.f32.mrb[0].mxu0
        %v5046 = vadd.f32 %v4879, %v5045
        %v5047 = vpop.f32.mrb[0].mxu0
        %v5048 = vadd.f32 %v4879, %v5047
        %5049 = vdwg.mxu0
        %5050 = vmatprep.subr.mxu0 %v4900
        %5051 = vmatpush1.msra.mxu0 %v4897
        %5052 = vmatprep.subr.mxu0 0.0
        %5053 = vmatpush1.msra.mxu0 0.0
        %5054 = vmatprep.subr.mxu0 0.0
        %5055 = vmatpush1.msra.mxu0 0.0
        %5056 = vmatprep.subr.mxu0 0.0
        %5057 = vmatpush1.msra.mxu0 0.0
        %5058 = vmatprep.subr.mxu0 0.0
        %5059 = vmatpush1.msra.mxu0 0.0
        %5060 = vmatprep.subr.mxu0 0.0
        %5061 = vmatpush1.msra.mxu0 0.0
        %5062 = vmatprep.subr.mxu0 0.0
        %5063 = vmatpush1.msra.mxu0 0.0
        %5064 = vmatprep.subr.mxu0 0.0
        %5065 = vmatpush1.msra.mxu0 0.0
        %5066 = vmatprep.subr.mxu0 0.0
        %5067 = vmatpush1.msra.mxu0 0.0
        %5068 = vmatprep.subr.mxu0 0.0
        %5069 = vmatpush1.msra.mxu0 0.0
        %5070 = vmatprep.subr.mxu0 0.0
        %5071 = vmatpush1.msra.mxu0 0.0
        %5072 = vmatprep.subr.mxu0 0.0
        %5073 = vmatpush1.msra.mxu0 0.0
        %5074 = vmatprep.subr.mxu0 0.0
        %5075 = vmatpush1.msra.mxu0 0.0
        %5076 = vmatprep.subr.mxu0 0.0
        %5077 = vmatpush1.msra.mxu0 0.0
        %5078 = vmatprep.subr.mxu0 0.0
        %5079 = vmatpush1.msra.mxu0 0.0
        %5080 = vmatprep.subr.mxu0 0.0
        %5081 = vmatpush1.msra.mxu0 0.0
        %5082 = vmatprep.subr.mxu0 0.0
        %5083 = vmatpush1.msra.mxu0 0.0
        %5084 = vmatprep.subr.mxu0 0.0
        %5085 = vmatpush1.msra.mxu0 0.0
        %5086 = vmatprep.subr.mxu0 0.0
        %5087 = vmatpush1.msra.mxu0 0.0
        %5088 = vmatprep.subr.mxu0 0.0
        %5089 = vmatpush1.msra.mxu0 0.0
        %5090 = vmatprep.subr.mxu0 0.0
        %5091 = vmatpush1.msra.mxu0 0.0
        %5092 = vmatprep.subr.mxu0 0.0
        %5093 = vmatpush1.msra.mxu0 0.0
        %5094 = vmatprep.subr.mxu0 0.0
        %5095 = vmatpush1.msra.mxu0 0.0
        %5096 = vmatprep.subr.mxu0 0.0
        %5097 = vmatpush1.msra.mxu0 0.0
        %5098 = vmatprep.subr.mxu0 0.0
        %5099 = vmatpush1.msra.mxu0 0.0
        %5100 = vmatprep.subr.mxu0 0.0
        %5101 = vmatpush1.msra.mxu0 0.0
        %5102 = vmatprep.subr.mxu0 0.0
        %5103 = vmatpush1.msra.mxu0 0.0
        %5104 = vmatprep.subr.mxu0 0.0
        %5105 = vmatpush1.msra.mxu0 0.0
        %5106 = vmatprep.subr.mxu0 0.0
        %5107 = vmatpush1.msra.mxu0 0.0
        %5108 = vmatprep.subr.mxu0 0.0
        %5109 = vmatpush1.msra.mxu0 0.0
        %5110 = vmatprep.subr.mxu0 0.0
        %5111 = vmatpush1.msra.mxu0 0.0
        %5112 = vmatprep.subr.mxu0 0.0
        %5113 = vmatpush1.msra.mxu0 0.0
        %5114 = vmatprep.mubr.f32.mxu0 0.0
        %5115 = vmatmul.mubr.f32.gmra.mrb[0].mxu0 %v4882
        %v5116 = vpop.f32.mrb[0].mxu0
        %v5117 = vadd.f32 %v4879, %v5116
        %v5118 = vpop.f32.mrb[0].mxu0
        %v5119 = vadd.f32 %v4879, %v5118
        %5120 = vdwg.mxu0
        %5121 = vmatprep.subr.mxu0 %v4906
        %5122 = vmatpush1.msra.mxu0 %v4903
        %5123 = vmatprep.subr.mxu0 0.0
        %5124 = vmatpush1.msra.mxu0 0.0
        %5125 = vmatprep.subr.mxu0 0.0
        %5126 = vmatpush1.msra.mxu0 0.0
        %5127 = vmatprep.subr.mxu0 0.0
        %5128 = vmatpush1.msra.mxu0 0.0
        %5129 = vmatprep.subr.mxu0 0.0
        %5130 = vmatpush1.msra.mxu0 0.0
        %5131 = vmatprep.subr.mxu0 0.0
        %5132 = vmatpush1.msra.mxu0 0.0
        %5133 = vmatprep.subr.mxu0 0.0
        %5134 = vmatpush1.msra.mxu0 0.0
        %5135 = vmatprep.subr.mxu0 0.0
        %5136 = vmatpush1.msra.mxu0 0.0
        %5137 = vmatprep.subr.mxu0 0.0
        %5138 = vmatpush1.msra.mxu0 0.0
        %5139 = vmatprep.subr.mxu0 0.0
        %5140 = vmatpush1.msra.mxu0 0.0
        %5141 = vmatprep.subr.mxu0 0.0
        %5142 = vmatpush1.msra.mxu0 0.0
        %5143 = vmatprep.subr.mxu0 0.0
        %5144 = vmatpush1.msra.mxu0 0.0
        %5145 = vmatprep.subr.mxu0 0.0
        %5146 = vmatpush1.msra.mxu0 0.0
        %5147 = vmatprep.subr.mxu0 0.0
        %5148 = vmatpush1.msra.mxu0 0.0
        %5149 = vmatprep.subr.mxu0 0.0
        %5150 = vmatpush1.msra.mxu0 0.0
        %5151 = vmatprep.subr.mxu0 0.0
        %5152 = vmatpush1.msra.mxu0 0.0
        %5153 = vmatprep.subr.mxu0 0.0
        %5154 = vmatpush1.msra.mxu0 0.0
        %5155 = vmatprep.subr.mxu0 0.0
        %5156 = vmatpush1.msra.mxu0 0.0
        %5157 = vmatprep.subr.mxu0 0.0
        %5158 = vmatpush1.msra.mxu0 0.0
        %5159 = vmatprep.subr.mxu0 0.0
        %5160 = vmatpush1.msra.mxu0 0.0
        %5161 = vmatprep.subr.mxu0 0.0
        %5162 = vmatpush1.msra.mxu0 0.0
        %5163 = vmatprep.subr.mxu0 0.0
        %5164 = vmatpush1.msra.mxu0 0.0
        %5165 = vmatprep.subr.mxu0 0.0
        %5166 = vmatpush1.msra.mxu0 0.0
        %5167 = vmatprep.subr.mxu0 0.0
        %5168 = vmatpush1.msra.mxu0 0.0
        %5169 = vmatprep.subr.mxu0 0.0
        %5170 = vmatpush1.msra.mxu0 0.0
        %5171 = vmatprep.subr.mxu0 0.0
        %5172 = vmatpush1.msra.mxu0 0.0
        %5173 = vmatprep.subr.mxu0 0.0
        %5174 = vmatpush1.msra.mxu0 0.0
        %5175 = vmatprep.subr.mxu0 0.0
        %5176 = vmatpush1.msra.mxu0 0.0
        %5177 = vmatprep.subr.mxu0 0.0
        %5178 = vmatpush1.msra.mxu0 0.0
        %5179 = vmatprep.subr.mxu0 0.0
        %5180 = vmatpush1.msra.mxu0 0.0
        %5181 = vmatprep.subr.mxu0 0.0
        %5182 = vmatpush1.msra.mxu0 0.0
        %5183 = vmatprep.subr.mxu0 0.0
        %5184 = vmatpush1.msra.mxu0 0.0
        %5185 = vmatprep.mubr.f32.mxu0 0.0
        %5186 = vmatmul.mubr.f32.gmra.mrb[0].mxu0 %v4882
        %v5187 = vpop.f32.mrb[0].mxu0
        %v5188 = vadd.f32 %v4879, %v5187
        %v5189 = vpop.f32.mrb[0].mxu0
        %v5190 = vadd.f32 %v4879, %v5189
        %5191 = vdwg.mxu0
        %v5200 = vcombine.low %v4975, %v4977
        %v5201 = vcombine.low %v5046, %v5048
        %v5202 = vcombine.low %v5117, %v5119
        %v5203 = vcombine.low %v5188, %v5190
        %5208 = vst [vmem:[%s409] sm:$0xff] %v5200
        %5209 = vst [vmem:[%s409 + $0x8] sm:$0xff] %v5201
        %5210 = vst [vmem:[%s409 + $0x10] sm:$0xff] %v5202
        %5211 = vst [vmem:[%s409 + $0x18] sm:$0xff] %v5203
        %s5212 = sand.u32 %s275, 1
        %s5213 = scalar_lea.sflag [#allocation4], %s5212
        %s5214 = sand.u32 %s275, 1
        %s5215 = smul.addr %s5214, 32
        %s5216 = scalar_lea.vmem [#allocation5], %s5215
        // Predicated region
        $region69: #{tpu_custom_call.1} parent=63 // pred_check
          %p5217 = pneg %p285
        $region70: #{tpu_custom_call.1} parent=63 // pred_check_branch
          %5219 = sbr.rel (%p5217) target = $region72
        $region71: #{tpu_custom_call.1} parent=63 // pred_region
          %s5221 = ssub.s32 512, 512
          %5222 = vsyncadd %s5213, %s5221
          %s5223 = smul.addr %s26, 8
          %s5224 = smul.addr %s5223, 64
          %s5225 = scalar_lea.hbm %s11, %s5224
          %s5227 = sshll.u32 %s5216, 4
          %s5228 = int_to_ptr.vmem [resolvable:$true] %s5227
          %5230 = dma.vmem_to_hbm [thread:$0]  %s5228, 512, %s5225, %s5213
        $region72: #{tpu_custom_call.1} parent=63 // pred_fallthru
          _
      $region64: #{tpu_custom_call.1} parent=5 // pred_fallthru
        _
      %p5231 = scmp.le.s32.totalorder 2, %s21
      // Predicated region
      $region73: #{tpu_custom_call.1} parent=5 // pred_check
        %p5232 = pneg %p5231
      $region74: #{tpu_custom_call.1} parent=5 // pred_check_branch
        %5234 = sbr.rel (%p5232) target = $region76
      $region75: #{tpu_custom_call.1} parent=5 // pred_region
        %s5235 = ssub.s32 %s21, 2
        // Predicated region
        $region77: #{tpu_custom_call.1} parent=75 // pred_check
          %p5236 = pneg %p291
        $region78: #{tpu_custom_call.1} parent=75 // pred_check_branch
          %5238 = sbr.rel (%p5236) target = $region80
        $region79: #{tpu_custom_call.1} parent=75 // pred_region
          %s5239 = sand.u32 %s276, 1
          %s5240 = scalar_lea.sflag [#allocation4], %s5239
          %s5241 = sand.u32 %s276, 1
          %s5242 = smul.addr %s5241, 32
          %s5243 = scalar_lea.vmem [#allocation5], %s5242
          %5244 = dma.done %s5240, 512
        $region80: #{tpu_custom_call.1} parent=75 // pred_fallthru
          _
      $region76: #{tpu_custom_call.1} parent=5 // pred_fallthru
        _
    $region6: #{tpu_custom_call.1} parent=1 // loop_footer
      %s25 = sadd.s32 1, %s21
    $region7: #{tpu_custom_call.1} parent=1 // loop_footer_branch
      %20 = sbr.rel target = $region3
    $region8: #{tpu_custom_call.1} parent=1 // loop_exit
      _
    %5245 = vsyncpa [#allocation3], 1
    %s5246 = scalar_lea.sflag [#allocation3], 1
    %5247 = vsyncpa %s5246, 1
    %5248 = vsyncpa [#allocation4], 1
    %s5249 = scalar_lea.sflag [#allocation4], 1
    %5250 = vsyncpa %s5249, 1

</llo_original>
